<compile_context>
chip_gen: v7x
topology: tpu7x:2x2x1
jax: 0.10.0
libtpu: 0.0.40
codegen_flags: <defaults>
</compile_context>

<pallas_src>
import numpy as np
import jax
import jax.numpy as jnp
from jax.experimental import pallas as pl
from jax.experimental.pallas import tpu as pltpu

_VMEM = pl.BlockSpec(memory_space=pltpu.MemorySpace.VMEM)


# ------------------------------ fused kernel ------------------------------- #

def _cnn_fused_kernel(xs_ref, f32w_ref, bf16w_ref, out_ref, p2s_ref):
    """Entire CnnNet forward in one invocation; everything stays in VMEM.

    Row frame: activations are flat rows m = 64*b + 8*row + col (an 8x8
    spatial frame per image), so a spatial shift (dr, dc) is a uniform row
    shift of 8*dr + dc and every conv "im2col" LHS is just row slices + one
    lane concat.  Rows outside the valid spatial range are junk but finite
    and are never read downstream.

    xs_ref   : (64*B+40, 16) f32  stride-4 parity planes of the input,
                                  row 64b+8u+v, lane 4t+t' = x[b, 4u+t, 4v+t']
    f32w_ref : (68, 320)  f32     rows 0:64 conv1 weight (K=64 -> N=320);
                                  row 64: b1 tiled x4 (80 lanes), row 65: b2,
                                  row 66: fb1, row 67: fb2
    bf16w_ref: (1620, 200) bf16   rows 0:720 conv2 weight (K=720 -> N=200);
                                  rows 720:1520 fc1 (800,100);
                                  rows 1520:1620 fc2 (100,10)
    out_ref  : (B, 10) f32        log-softmax output
    p2s_ref  : (B, 64, 50) f32    pooled-conv2 staging for the sublane->lane
                                  relayout feeding fc1
    """
    f32, bf16 = jnp.float32, jnp.bfloat16
    B = out_ref.shape[0]
    M1 = 64 * B + 24          # conv1 / pool1 row frame (needs +18 rows for conv2 shifts)
    M2 = 64 * B               # conv2 / pool2 row frame

    # ---- conv1: one MXU matmul, K = 4 shifts x 16 parity channels = 64 ------
    xsv = xs_ref[...]                                            # (64B+40, 16)
    L1 = jnp.concatenate(
        [xsv[off:off + M1, :] for off in (0, 1, 8, 9)], axis=-1)  # (M1, 64)
    W1 = f32w_ref[0:64, :]                                        # (64, 320)
    Y1 = jnp.dot(L1, W1, preferred_element_type=f32)              # (M1, 320)

    # pool1(2x2) fused: max over the 4 lane groups of 80, then bias + relu.
    b1t = f32w_ref[64:65, 0:80]                                   # b1 tiled x4
    R = jnp.maximum(jnp.maximum(Y1[:, 0:80], Y1[:, 80:160]),
                    jnp.maximum(Y1[:, 160:240], Y1[:, 240:320]))
    R = jnp.maximum(R + b1t, 0.0)                                 # (M1, 80) f32
    # R row 64b+8U+V, lane 20*(2rp+cp)+c  ==  pooled conv1[b, 2U+rp, 2V+cp, c]

    # ---- conv2: one MXU matmul, K = 9 shifts x 80 channels = 720 ------------
    L2 = jnp.concatenate(
        [R[8 * ro + co: 8 * ro + co + M2, :]
         for ro in range(3) for co in range(3)], axis=-1)          # (M2, 720)
    W2 = bf16w_ref[0:720, :]                                       # (720, 200)
    Y2 = jnp.dot(L2.astype(bf16), W2, preferred_element_type=f32)  # (M2, 200)

    # pool2(2x2) fused: max over the 4 lane groups of 50, then bias + relu.
    b2 = f32w_ref[65:66, 0:50]
    P2 = jnp.maximum(jnp.maximum(Y2[:, 0:50], Y2[:, 50:100]),
                     jnp.maximum(Y2[:, 100:150], Y2[:, 150:200]))
    P2 = jnp.maximum(P2 + b2, 0.0)                                 # (M2, 50) f32
    # P2 row 64b+8r+c (valid for r,c < 4) == pooled conv2[b, r, c, :]

    # ---- fc1: gather the 16 valid positions into a lane-dense (B, 800) ------
    p2s_ref[...] = P2.reshape(B, 64, 50)      # tile-aligned sublane split only
    v = jnp.concatenate(
        [p2s_ref[:, 8 * r + c, :] for r in range(4) for c in range(4)],
        axis=-1)                                                   # (B, 800)
    FW1 = bf16w_ref[720:1520, 0:100]                               # (800, 100)
    fb1 = f32w_ref[66:67, 0:100]
    h = jnp.maximum(jnp.dot(v.astype(bf16), FW1,
                            preferred_element_type=f32) + fb1, 0.0)  # (B, 100)

    # ---- fc2 + log_softmax --------------------------------------------------
    FW2 = bf16w_ref[1520:1620, 0:10]                               # (100, 10)
    fb2 = f32w_ref[67:68, 0:10]
    z = jnp.dot(h.astype(bf16), FW2, preferred_element_type=f32) + fb2
    zs = z - jnp.max(z, axis=1, keepdims=True)
    out_ref[...] = zs - jnp.log(jnp.sum(jnp.exp(zs), axis=1, keepdims=True))


# -------------------------------- weight prep ------------------------------ #

def prepare_params(params):
    """One-time weight prep (host side, outside jit): fold all tap-shift /
    pooling-sub-lattice / NCHW-flatten bookkeeping into the weight layouts and
    pack everything into one f32 slab and one bf16 slab."""
    w1 = np.asarray(params["w1"], np.float32).reshape(20, 5, 5)   # [o1,i1,j1]
    w2 = np.asarray(params["w2"], np.float32)                     # [o2,o1,i2,j2]
    fw1 = np.asarray(params["fw1"], np.float32)                   # (100, 800)
    fw2 = np.asarray(params["fw2"], np.float32)                   # (10, 100)
    b1 = np.asarray(params["b1"], np.float32)
    b2 = np.asarray(params["b2"], np.float32)
    fb1 = np.asarray(params["fb1"], np.float32)
    fb2 = np.asarray(params["fb2"], np.float32)

    # conv1 -> (64, 320): K index = 16*(2a+a') + 4t+t'  (input shift / parity),
    # N index = 80*(2dp+dq) + 20*(2rp+cp) + o1 (pool member / pooled parity / ch)
    w1big = np.zeros((64, 320), np.float32)
    for a in range(2):
        for a2 in range(2):
            for t in range(4):
                for t2 in range(4):
                    k1 = 16 * (2 * a + a2) + 4 * t + t2
                    for dp in range(2):
                        for dq in range(2):
                            for rp in range(2):
                                for cp in range(2):
                                    i1 = 4 * a + t - 2 * rp - dp
                                    j1 = 4 * a2 + t2 - 2 * cp - dq
                                    if 0 <= i1 < 5 and 0 <= j1 < 5:
                                        nb = 80 * (2 * dp + dq) + 20 * (2 * rp + cp)
                                        w1big[k1, nb:nb + 20] = w1[:, i1, j1]

    # conv2 -> (720, 200): K index = 80*(3ro+co) + 20*(2rp+cp) + o1,
    # N index = 50*(2e+f) + o2.  Invalid taps are zero (structural padding).
    w2big = np.zeros((720, 200), np.float32)
    for ro in range(3):
        for co in range(3):
            for rp in range(2):
                for cp in range(2):
                    kb = 80 * (3 * ro + co) + 20 * (2 * rp + cp)
                    for e in range(2):
                        for f in range(2):
                            i2 = 2 * ro + rp - e
                            j2 = 2 * co + cp - f
                            if 0 <= i2 < 5 and 0 <= j2 < 5:
                                nb = 50 * (2 * e + f)
                                w2big[kb:kb + 20, nb:nb + 50] = w2[:, :, i2, j2].T

    # fc1 -> (800, 100): row p*50 + o2 corresponds to torch input o2*16 + p.
    fw1r = fw1.reshape(100, 50, 16).transpose(2, 1, 0).reshape(800, 100)

    # f32 slab: conv1 weight + all biases.
    f32slab = np.zeros((68, 320), np.float32)
    f32slab[0:64] = w1big
    f32slab[64, 0:80] = np.tile(b1, 4)
    f32slab[65, 0:50] = b2
    f32slab[66, 0:100] = fb1
    f32slab[67, 0:10] = fb2

    # bf16 slab: conv2 + fc1 + fc2 weights.
    bslab = np.zeros((1620, 200), np.float32)
    bslab[0:720] = w2big
    bslab[720:1520, 0:100] = fw1r
    bslab[1520:1620, 0:10] = fw2.T

    return {"f32w": jnp.asarray(f32slab),
            "bf16w": jnp.asarray(bslab).astype(jnp.bfloat16)}


# ------------------------------- wrappers ----------------------------------- #

def _prep_input(x_nchw):
    """(B,1,28,28) -> (64B+40, 16) stride-4 parity planes in the flat 8x8 frame."""
    B = x_nchw.shape[0]
    x = x_nchw.reshape(B, 28, 28)
    xs = x.reshape(B, 7, 4, 7, 4).transpose(0, 1, 3, 2, 4).reshape(B, 7, 7, 16)
    xs = jnp.pad(xs, ((0, 0), (0, 1), (0, 1), (0, 0)))        # (B, 8, 8, 16)
    flat = xs.reshape(B * 64, 16)
    return jnp.pad(flat, ((0, 40), (0, 0)))                   # (64B+40, 16)


def cnn_net_forward(x_nchw, prepped):
    B = x_nchw.shape[0]
    xs_flat = _prep_input(x_nchw)   # tiny one-fusion XLA rearrangement of x
    return pl.pallas_call(
        _cnn_fused_kernel,
        out_shape=jax.ShapeDtypeStruct((B, 10), jnp.float32),
        in_specs=[_VMEM, _VMEM, _VMEM],
        out_specs=_VMEM,
        scratch_shapes=[pltpu.VMEM((B, 64, 50), jnp.float32)],
    )(xs_flat, prepped["f32w"], prepped["bf16w"])


# ------------------------- init / pure-XLA reference ------------------------ #

def init_params(key):
    """Deterministic torch-default-style uniform(-1/sqrt(fan_in), 1/sqrt(fan_in))."""
    ks = jax.random.split(key, 8)

    def u(k, shape, fan_in):
        bound = 1.0 / float(fan_in) ** 0.5
        return jax.random.uniform(k, shape, jnp.float32, -bound, bound)

    return {
        "w1": u(ks[0], (20, 1, 5, 5), 1 * 5 * 5),
        "b1": u(ks[1], (20,), 1 * 5 * 5),
        "w2": u(ks[2], (50, 20, 5, 5), 20 * 5 * 5),
        "b2": u(ks[3], (50,), 20 * 5 * 5),
        "fw1": u(ks[4], (100, 800), 800),
        "fb1": u(ks[5], (100,), 800),
        "fw2": u(ks[6], (10, 100), 100),
        "fb2": u(ks[7], (10,), 100),
    }


def _reference_forward(x_nchw, params):
    """Pure-JAX (XLA) reference matching the PyTorch module."""
    x = jnp.transpose(x_nchw, (0, 2, 3, 1))

    def conv_relu(x, w, b):
        y = jax.lax.conv_general_dilated(
            x, jnp.transpose(w, (2, 3, 1, 0)), window_strides=(1, 1),
            padding="VALID", dimension_numbers=("NHWC", "HWIO", "NHWC"))
        return jax.nn.relu(y + b)

    def pool(x):
        return jax.lax.reduce_window(x, -jnp.inf, jax.lax.max,
                                     (1, 2, 2, 1), (1, 2, 2, 1), "VALID")

    x = pool(conv_relu(x, params["w1"], params["b1"]))
    x = pool(conv_relu(x, params["w2"], params["b2"]))
    B = x.shape[0]
    x = jnp.transpose(x, (0, 3, 1, 2)).reshape(B, 800)
    x = jax.nn.relu(x @ params["fw1"].T + params["fb1"])
    x = x @ params["fw2"].T + params["fb2"]
    return jax.nn.log_softmax(x, axis=1)


if __name__ == "__main__":
    key = jax.random.PRNGKey(0)
    pkey, xkey = jax.random.split(key)
    params = init_params(pkey)
    prepped = prepare_params(params)          # one-time host-side weight prep
    # MNIST-shaped input: 28x28 is required by the hard-coded view(-1, 800).
    x = jax.random.normal(xkey, (2, 1, 28, 28), jnp.float32)

    out = jax.block_until_ready(jax.jit(cnn_net_forward)(x, prepped))

    assert out.shape == (2, 10) and out.dtype == jnp.float32, out.shape
    # log_softmax rows must exponentiate-sum to ~1.
    assert jnp.allclose(jnp.sum(jnp.exp(out), axis=1), 1.0, atol=1e-3)
    # Cross-check vs. a pure-XLA reference (bf16 MXU operands => loose tol).
    ref = _reference_forward(x, params)
    max_err = float(jnp.max(jnp.abs(out - ref)))
    assert max_err < 5e-2, f"mismatch vs reference: {max_err}"
    print("KERNEL_OK")
</pallas_src>

<mosaic_0001>
module attributes {stable_mosaic.version = 11 : i64} {
  func.func @_cnn_fused_kernel(%arg0: memref<168x16xf32, #tpu.memory_space<vmem>>, %arg1: memref<68x320xf32, #tpu.memory_space<vmem>>, %arg2: memref<1620x200xbf16, #tpu.memory_space<vmem>>, %arg3: memref<2x10xf32, #tpu.memory_space<vmem>>, %arg4: memref<2x64x50xf32, #tpu.memory_space<vmem>>) attributes {dimension_semantics = [], scalar_prefetch = 0 : i64, scratch_operands = 1 : i64, tpu.core_type = #tpu.core_type<tc>} {
    %c0 = arith.constant 0 : index
    %c0_0 = arith.constant 0 : index
    %0 = vector.load %arg0[%c0, %c0_0] : memref<168x16xf32, #tpu.memory_space<vmem>>, vector<168x16xf32>
    %1 = vector.extract_strided_slice %0 {offsets = [0, 0], sizes = [152, 16], strides = [1, 1]} : vector<168x16xf32> to vector<152x16xf32>
    %2 = vector.extract_strided_slice %0 {offsets = [1, 0], sizes = [152, 16], strides = [1, 1]} : vector<168x16xf32> to vector<152x16xf32>
    %3 = vector.extract_strided_slice %0 {offsets = [8, 0], sizes = [152, 16], strides = [1, 1]} : vector<168x16xf32> to vector<152x16xf32>
    %4 = vector.extract_strided_slice %0 {offsets = [9, 0], sizes = [152, 16], strides = [1, 1]} : vector<168x16xf32> to vector<152x16xf32>
    %5 = tpu.concatenate %1, %2, %3, %4 in 1 : vector<152x16xf32>, vector<152x16xf32>, vector<152x16xf32>, vector<152x16xf32> -> vector<152x64xf32>
    %c0_1 = arith.constant 0 : index
    %c0_2 = arith.constant 0 : index
    %6 = vector.load %arg1[%c0_1, %c0_2] : memref<68x320xf32, #tpu.memory_space<vmem>>, vector<64x320xf32>
    %cst = arith.constant dense<0.000000e+00> : vector<152x320xf32>
    %7 = tpu.matmul %5, %6, %cst {dimension_numbers = #tpu.dot_dimension_numbers<[1], [0], [0], [1], [0, 0, 1, 1], [], []>} : vector<152x64xf32>, vector<64x320xf32>, vector<152x320xf32> -> vector<152x320xf32>
    %c64 = arith.constant 64 : index
    %c0_3 = arith.constant 0 : index
    %8 = vector.load %arg1[%c64, %c0_3] : memref<68x320xf32, #tpu.memory_space<vmem>>, vector<1x80xf32>
    %9 = vector.extract_strided_slice %7 {offsets = [0, 0], sizes = [152, 80], strides = [1, 1]} : vector<152x320xf32> to vector<152x80xf32>
    %10 = vector.extract_strided_slice %7 {offsets = [0, 80], sizes = [152, 80], strides = [1, 1]} : vector<152x320xf32> to vector<152x80xf32>
    %11 = arith.maximumf %9, %10 : vector<152x80xf32>
    %12 = vector.extract_strided_slice %7 {offsets = [0, 160], sizes = [152, 80], strides = [1, 1]} : vector<152x320xf32> to vector<152x80xf32>
    %13 = vector.extract_strided_slice %7 {offsets = [0, 240], sizes = [152, 80], strides = [1, 1]} : vector<152x320xf32> to vector<152x80xf32>
    %14 = arith.maximumf %12, %13 : vector<152x80xf32>
    %15 = arith.maximumf %11, %14 : vector<152x80xf32>
    %16 = vector.broadcast %8 : vector<1x80xf32> to vector<152x80xf32>
    %17 = arith.addf %15, %16 : vector<152x80xf32>
    %cst_4 = arith.constant 0.000000e+00 : f32
    %18 = vector.broadcast %cst_4 : f32 to vector<152x80xf32>
    %19 = arith.maximumf %17, %18 : vector<152x80xf32>
    %20 = vector.extract_strided_slice %19 {offsets = [0, 0], sizes = [128, 80], strides = [1, 1]} : vector<152x80xf32> to vector<128x80xf32>
    %21 = vector.extract_strided_slice %19 {offsets = [1, 0], sizes = [128, 80], strides = [1, 1]} : vector<152x80xf32> to vector<128x80xf32>
    %22 = vector.extract_strided_slice %19 {offsets = [2, 0], sizes = [128, 80], strides = [1, 1]} : vector<152x80xf32> to vector<128x80xf32>
    %23 = vector.extract_strided_slice %19 {offsets = [8, 0], sizes = [128, 80], strides = [1, 1]} : vector<152x80xf32> to vector<128x80xf32>
    %24 = vector.extract_strided_slice %19 {offsets = [9, 0], sizes = [128, 80], strides = [1, 1]} : vector<152x80xf32> to vector<128x80xf32>
    %25 = vector.extract_strided_slice %19 {offsets = [10, 0], sizes = [128, 80], strides = [1, 1]} : vector<152x80xf32> to vector<128x80xf32>
    %26 = vector.extract_strided_slice %19 {offsets = [16, 0], sizes = [128, 80], strides = [1, 1]} : vector<152x80xf32> to vector<128x80xf32>
    %27 = vector.extract_strided_slice %19 {offsets = [17, 0], sizes = [128, 80], strides = [1, 1]} : vector<152x80xf32> to vector<128x80xf32>
    %28 = vector.extract_strided_slice %19 {offsets = [18, 0], sizes = [128, 80], strides = [1, 1]} : vector<152x80xf32> to vector<128x80xf32>
    %29 = tpu.concatenate %20, %21, %22, %23, %24, %25, %26, %27, %28 in 1 : vector<128x80xf32>, vector<128x80xf32>, vector<128x80xf32>, vector<128x80xf32>, vector<128x80xf32>, vector<128x80xf32>, vector<128x80xf32>, vector<128x80xf32>, vector<128x80xf32> -> vector<128x720xf32>
    %c0_5 = arith.constant 0 : index
    %c0_6 = arith.constant 0 : index
    %30 = vector.load %arg2[%c0_5, %c0_6] : memref<1620x200xbf16, #tpu.memory_space<vmem>>, vector<720x200xbf16>
    %31 = arith.truncf %29 : vector<128x720xf32> to vector<128x720xbf16>
    %cst_7 = arith.constant dense<0.000000e+00> : vector<128x200xf32>
    %32 = tpu.matmul %31, %30, %cst_7 {dimension_numbers = #tpu.dot_dimension_numbers<[1], [0], [0], [1], [0, 0, 1, 1], [], []>} : vector<128x720xbf16>, vector<720x200xbf16>, vector<128x200xf32> -> vector<128x200xf32>
    %c65 = arith.constant 65 : index
    %c0_8 = arith.constant 0 : index
    %33 = vector.load %arg1[%c65, %c0_8] : memref<68x320xf32, #tpu.memory_space<vmem>>, vector<1x50xf32>
    %34 = vector.extract_strided_slice %32 {offsets = [0, 0], sizes = [128, 50], strides = [1, 1]} : vector<128x200xf32> to vector<128x50xf32>
    %35 = vector.extract_strided_slice %32 {offsets = [0, 50], sizes = [128, 50], strides = [1, 1]} : vector<128x200xf32> to vector<128x50xf32>
    %36 = arith.maximumf %34, %35 : vector<128x50xf32>
    %37 = vector.extract_strided_slice %32 {offsets = [0, 100], sizes = [128, 50], strides = [1, 1]} : vector<128x200xf32> to vector<128x50xf32>
    %38 = vector.extract_strided_slice %32 {offsets = [0, 150], sizes = [128, 50], strides = [1, 1]} : vector<128x200xf32> to vector<128x50xf32>
    %39 = arith.maximumf %37, %38 : vector<128x50xf32>
    %40 = arith.maximumf %36, %39 : vector<128x50xf32>
    %41 = vector.broadcast %33 : vector<1x50xf32> to vector<128x50xf32>
    %42 = arith.addf %40, %41 : vector<128x50xf32>
    %cst_9 = arith.constant 0.000000e+00 : f32
    %43 = vector.broadcast %cst_9 : f32 to vector<128x50xf32>
    %44 = arith.maximumf %42, %43 : vector<128x50xf32>
    %45 = vector.shape_cast %44 : vector<128x50xf32> to vector<2x64x50xf32>
    %c0_10 = arith.constant 0 : index
    %c0_11 = arith.constant 0 : index
    %c0_12 = arith.constant 0 : index
    %46 = vector.load %arg4[%c0_10, %c0_11, %c0_12] : memref<2x64x50xf32, #tpu.memory_space<vmem>>, vector<2x64x50xf32>
    tpu.vector_store %arg4[%c0_10, %c0_11, %c0_12], %45 {strides = array<i32>} : memref<2x64x50xf32, #tpu.memory_space<vmem>>, vector<2x64x50xf32>,
    %c0_13 = arith.constant 0 : index
    %c0_14 = arith.constant 0 : index
    %c0_15 = arith.constant 0 : index
    %47 = vector.load %arg4[%c0_13, %c0_14, %c0_15] : memref<2x64x50xf32, #tpu.memory_space<vmem>>, vector<2x1x50xf32>
    %48 = vector.shape_cast %47 : vector<2x1x50xf32> to vector<2x50xf32>
    %c0_16 = arith.constant 0 : index
    %c1 = arith.constant 1 : index
    %c0_17 = arith.constant 0 : index
    %49 = vector.load %arg4[%c0_16, %c1, %c0_17] : memref<2x64x50xf32, #tpu.memory_space<vmem>>, vector<2x1x50xf32>
    %50 = vector.shape_cast %49 : vector<2x1x50xf32> to vector<2x50xf32>
    %c0_18 = arith.constant 0 : index
    %c2 = arith.constant 2 : index
    %c0_19 = arith.constant 0 : index
    %51 = vector.load %arg4[%c0_18, %c2, %c0_19] : memref<2x64x50xf32, #tpu.memory_space<vmem>>, vector<2x1x50xf32>
    %52 = vector.shape_cast %51 : vector<2x1x50xf32> to vector<2x50xf32>
    %c0_20 = arith.constant 0 : index
    %c3 = arith.constant 3 : index
    %c0_21 = arith.constant 0 : index
    %53 = vector.load %arg4[%c0_20, %c3, %c0_21] : memref<2x64x50xf32, #tpu.memory_space<vmem>>, vector<2x1x50xf32>
    %54 = vector.shape_cast %53 : vector<2x1x50xf32> to vector<2x50xf32>
    %c0_22 = arith.constant 0 : index
    %c8 = arith.constant 8 : index
    %c0_23 = arith.constant 0 : index
    %55 = vector.load %arg4[%c0_22, %c8, %c0_23] : memref<2x64x50xf32, #tpu.memory_space<vmem>>, vector<2x1x50xf32>
    %56 = vector.shape_cast %55 : vector<2x1x50xf32> to vector<2x50xf32>
    %c0_24 = arith.constant 0 : index
    %c9 = arith.constant 9 : index
    %c0_25 = arith.constant 0 : index
    %57 = vector.load %arg4[%c0_24, %c9, %c0_25] : memref<2x64x50xf32, #tpu.memory_space<vmem>>, vector<2x1x50xf32>
    %58 = vector.shape_cast %57 : vector<2x1x50xf32> to vector<2x50xf32>
    %c0_26 = arith.constant 0 : index
    %c10 = arith.constant 10 : index
    %c0_27 = arith.constant 0 : index
    %59 = vector.load %arg4[%c0_26, %c10, %c0_27] : memref<2x64x50xf32, #tpu.memory_space<vmem>>, vector<2x1x50xf32>
    %60 = vector.shape_cast %59 : vector<2x1x50xf32> to vector<2x50xf32>
    %c0_28 = arith.constant 0 : index
    %c11 = arith.constant 11 : index
    %c0_29 = arith.constant 0 : index
    %61 = vector.load %arg4[%c0_28, %c11, %c0_29] : memref<2x64x50xf32, #tpu.memory_space<vmem>>, vector<2x1x50xf32>
    %62 = vector.shape_cast %61 : vector<2x1x50xf32> to vector<2x50xf32>
    %c0_30 = arith.constant 0 : index
    %c16 = arith.constant 16 : index
    %c0_31 = arith.constant 0 : index
    %63 = vector.load %arg4[%c0_30, %c16, %c0_31] : memref<2x64x50xf32, #tpu.memory_space<vmem>>, vector<2x1x50xf32>
    %64 = vector.shape_cast %63 : vector<2x1x50xf32> to vector<2x50xf32>
    %c0_32 = arith.constant 0 : index
    %c17 = arith.constant 17 : index
    %c0_33 = arith.constant 0 : index
    %65 = vector.load %arg4[%c0_32, %c17, %c0_33] : memref<2x64x50xf32, #tpu.memory_space<vmem>>, vector<2x1x50xf32>
    %66 = vector.shape_cast %65 : vector<2x1x50xf32> to vector<2x50xf32>
    %c0_34 = arith.constant 0 : index
    %c18 = arith.constant 18 : index
    %c0_35 = arith.constant 0 : index
    %67 = vector.load %arg4[%c0_34, %c18, %c0_35] : memref<2x64x50xf32, #tpu.memory_space<vmem>>, vector<2x1x50xf32>
    %68 = vector.shape_cast %67 : vector<2x1x50xf32> to vector<2x50xf32>
    %c0_36 = arith.constant 0 : index
    %c19 = arith.constant 19 : index
    %c0_37 = arith.constant 0 : index
    %69 = vector.load %arg4[%c0_36, %c19, %c0_37] : memref<2x64x50xf32, #tpu.memory_space<vmem>>, vector<2x1x50xf32>
    %70 = vector.shape_cast %69 : vector<2x1x50xf32> to vector<2x50xf32>
    %c0_38 = arith.constant 0 : index
    %c24 = arith.constant 24 : index
    %c0_39 = arith.constant 0 : index
    %71 = vector.load %arg4[%c0_38, %c24, %c0_39] : memref<2x64x50xf32, #tpu.memory_space<vmem>>, vector<2x1x50xf32>
    %72 = vector.shape_cast %71 : vector<2x1x50xf32> to vector<2x50xf32>
    %c0_40 = arith.constant 0 : index
    %c25 = arith.constant 25 : index
    %c0_41 = arith.constant 0 : index
    %73 = vector.load %arg4[%c0_40, %c25, %c0_41] : memref<2x64x50xf32, #tpu.memory_space<vmem>>, vector<2x1x50xf32>
    %74 = vector.shape_cast %73 : vector<2x1x50xf32> to vector<2x50xf32>
    %c0_42 = arith.constant 0 : index
    %c26 = arith.constant 26 : index
    %c0_43 = arith.constant 0 : index
    %75 = vector.load %arg4[%c0_42, %c26, %c0_43] : memref<2x64x50xf32, #tpu.memory_space<vmem>>, vector<2x1x50xf32>
    %76 = vector.shape_cast %75 : vector<2x1x50xf32> to vector<2x50xf32>
    %c0_44 = arith.constant 0 : index
    %c27 = arith.constant 27 : index
    %c0_45 = arith.constant 0 : index
    %77 = vector.load %arg4[%c0_44, %c27, %c0_45] : memref<2x64x50xf32, #tpu.memory_space<vmem>>, vector<2x1x50xf32>
    %78 = vector.shape_cast %77 : vector<2x1x50xf32> to vector<2x50xf32>
    %79 = tpu.concatenate %48, %50, %52, %54, %56, %58, %60, %62, %64, %66, %68, %70, %72, %74, %76, %78 in 1 : vector<2x50xf32>, vector<2x50xf32>, vector<2x50xf32>, vector<2x50xf32>, vector<2x50xf32>, vector<2x50xf32>, vector<2x50xf32>, vector<2x50xf32>, vector<2x50xf32>, vector<2x50xf32>, vector<2x50xf32>, vector<2x50xf32>, vector<2x50xf32>, vector<2x50xf32>, vector<2x50xf32>, vector<2x50xf32> -> vector<2x800xf32>
    %c720 = arith.constant 720 : index
    %c0_46 = arith.constant 0 : index
    %80 = vector.load %arg2[%c720, %c0_46] : memref<1620x200xbf16, #tpu.memory_space<vmem>>, vector<800x100xbf16>
    %c66 = arith.constant 66 : index
    %c0_47 = arith.constant 0 : index
    %81 = vector.load %arg1[%c66, %c0_47] : memref<68x320xf32, #tpu.memory_space<vmem>>, vector<1x100xf32>
    %82 = arith.truncf %79 : vector<2x800xf32> to vector<2x800xbf16>
    %cst_48 = arith.constant dense<0.000000e+00> : vector<2x100xf32>
    %83 = tpu.matmul %82, %80, %cst_48 {dimension_numbers = #tpu.dot_dimension_numbers<[1], [0], [0], [1], [0, 0, 1, 1], [], []>} : vector<2x800xbf16>, vector<800x100xbf16>, vector<2x100xf32> -> vector<2x100xf32>
    %84 = vector.broadcast %81 : vector<1x100xf32> to vector<2x100xf32>
    %85 = arith.addf %83, %84 : vector<2x100xf32>
    %cst_49 = arith.constant 0.000000e+00 : f32
    %86 = vector.broadcast %cst_49 : f32 to vector<2x100xf32>
    %87 = arith.maximumf %85, %86 : vector<2x100xf32>
    %c1520 = arith.constant 1520 : index
    %c0_50 = arith.constant 0 : index
    %88 = vector.load %arg2[%c1520, %c0_50] : memref<1620x200xbf16, #tpu.memory_space<vmem>>, vector<100x10xbf16>
    %c67 = arith.constant 67 : index
    %c0_51 = arith.constant 0 : index
    %89 = vector.load %arg1[%c67, %c0_51] : memref<68x320xf32, #tpu.memory_space<vmem>>, vector<1x10xf32>
    %90 = arith.truncf %87 : vector<2x100xf32> to vector<2x100xbf16>
    %cst_52 = arith.constant dense<0.000000e+00> : vector<2x10xf32>
    %91 = tpu.matmul %90, %88, %cst_52 {dimension_numbers = #tpu.dot_dimension_numbers<[1], [0], [0], [1], [0, 0, 1, 1], [], []>} : vector<2x100xbf16>, vector<100x10xbf16>, vector<2x10xf32> -> vector<2x10xf32>
    %92 = vector.broadcast %89 : vector<1x10xf32> to vector<2x10xf32>
    %93 = arith.addf %91, %92 : vector<2x10xf32>
    %cst_53 = arith.constant dense<0xFF800000> : vector<2xf32>
    %94 = vector.multi_reduction <maximumf>, %93, %cst_53 [1] : vector<2x10xf32> to vector<2xf32>
    %95 = vector.shape_cast %94 : vector<2xf32> to vector<2x1xf32>
    %96 = vector.broadcast %95 : vector<2x1xf32> to vector<2x10xf32>
    %97 = arith.subf %93, %96 : vector<2x10xf32>
    %98 = math.exp %97 : vector<2x10xf32>
    %cst_54 = arith.constant dense<0.000000e+00> : vector<2xf32>
    %99 = vector.multi_reduction <add>, %98, %cst_54 [1] : vector<2x10xf32> to vector<2xf32>
    %100 = vector.shape_cast %99 : vector<2xf32> to vector<2x1xf32>
    %101 = math.log %100 : vector<2x1xf32>
    %102 = vector.broadcast %101 : vector<2x1xf32> to vector<2x10xf32>
    %103 = arith.subf %97, %102 : vector<2x10xf32>
    %c0_55 = arith.constant 0 : index
    %c0_56 = arith.constant 0 : index
    %104 = vector.load %arg3[%c0_55, %c0_56] : memref<2x10xf32, #tpu.memory_space<vmem>>, vector<2x10xf32>
    tpu.vector_store %arg3[%c0_55, %c0_56], %103 {strides = array<i32>} : memref<2x10xf32, #tpu.memory_space<vmem>>, vector<2x10xf32>,
    return
  }
}

</mosaic_0001>

<llo_original>
// kernel: cnn_net_forward.1
$region0: #{cnn_net_forward.1}
  #allocation0 [shape = 'u32[]', space=smem, size = 0x4, offset = 0x4, fixed_abs, tag = 'smem constant byte address 0x4 - core index']
  #allocation1 [shape = 'u32[144,128]{1,0:T(1,128)}', space=vmem, size = 0x12000, scoped, tag = 'internal scratch']
  #allocation2 [shape = 'f32[2,64,50]{2,1,0:T(8,128)}', space=vmem, size = 0x10000, scoped, tag = 'scratch operand']
  %s0 = inlined_call_operand.vmem [shape: f32[168,16], index: 0, kind: input, shape index: {}]
  %s1 = inlined_call_operand.vmem [shape: f32[68,320], index: 1, kind: input, shape index: {}]
  %s2 = inlined_call_operand.vmem [shape: bf16[1620,200], index: 2, kind: input, shape index: {}]
  %s3 = inlined_call_operand.hbm [shape: f32[2,10], index: 3, kind: output, shape index: {}]
  %s4 = sld [smem:[#allocation0]]
  $region22: #{cnn_net_forward.1} parent=0
    _
  %s6 = ssub.s32 1, %s4
  %s7 = scalar_select 0, %s6, %s4
  $region1: #{cnn_net_forward.1} parent=0
    #allocation3 [shape = 'u8[1024]{0}', space=vmem, size = 0x400, scoped, tag = 'output window, operand 0, single buffered']
    #allocation4 [shape = 's32[1]{0}', space=sflag, size = 0x4, scoped, tag = 'scoped memory for cnn_net_forward.1']
    %8 = vsyncpa [#allocation4], 0
    // Predicated region
    $region2: #{cnn_net_forward.1} parent=1 // pred_check
      _
    $region3: #{cnn_net_forward.1} parent=1 // pred_check_branch
      %10 = sbr.rel (0) target = $region5
    $region4: #{cnn_net_forward.1} parent=1 // pred_region
      _
    $region5: #{cnn_net_forward.1} parent=1 // pred_fallthru
      _
    // Predicated region
    $region6: #{cnn_net_forward.1} parent=1 // pred_check
      _
    $region7: #{cnn_net_forward.1} parent=1 // pred_check_branch
      %12 = sbr.rel (0) target = $region9
    $region8: #{cnn_net_forward.1} parent=1 // pred_region
      _
    $region9: #{cnn_net_forward.1} parent=1 // pred_fallthru
      _
    // Predicated region
    $region10: #{cnn_net_forward.1} parent=1 // pred_check
      _
    $region11: #{cnn_net_forward.1} parent=1 // pred_check_branch
      %14 = sbr.rel (0) target = $region13
    $region12: #{cnn_net_forward.1} parent=1 // pred_region
      _
    $region13: #{cnn_net_forward.1} parent=1 // pred_fallthru
      _
    %v16 = vld [vmem:[%s0] sm:$0xff]
    %v17 = vld [vmem:[%s0 + $0x8] sm:$0xff]
    %v18 = vld [vmem:[%s0 + $0x10] sm:$0xff]
    %v19 = vld [vmem:[%s0 + $0x18] sm:$0xff]
    %v20 = vld [vmem:[%s0 + $0x20] sm:$0xff]
    %v21 = vld [vmem:[%s0 + $0x28] sm:$0xff]
    %v22 = vld [vmem:[%s0 + $0x30] sm:$0xff]
    %v23 = vld [vmem:[%s0 + $0x38] sm:$0xff]
    %v24 = vld [vmem:[%s0 + $0x40] sm:$0xff]
    %v25 = vld [vmem:[%s0 + $0x48] sm:$0xff]
    %v26 = vld [vmem:[%s0 + $0x50] sm:$0xff]
    %v27 = vld [vmem:[%s0 + $0x58] sm:$0xff]
    %v28 = vld [vmem:[%s0 + $0x60] sm:$0xff]
    %v29 = vld [vmem:[%s0 + $0x68] sm:$0xff]
    %v30 = vld [vmem:[%s0 + $0x70] sm:$0xff]
    %v31 = vld [vmem:[%s0 + $0x78] sm:$0xff]
    %v32 = vld [vmem:[%s0 + $0x80] sm:$0xff]
    %v33 = vld [vmem:[%s0 + $0x88] sm:$0xff]
    %v34 = vld [vmem:[%s0 + $0x90] sm:$0xff]
    %v35 = vld [vmem:[%s0 + $0x98] sm:$0xff]
    %v36 = vld [vmem:[%s0 + $0xa0] sm:$0xff]
    %vm57 = vcmask 1046528
    %v58 = vrot.slane %v16, 1
    %v59 = vrot.slane %v17, 1
    %v60 = vsel %vm57, %v58, %v59
    %v61 = vrot.slane %v18, 1
    %v62 = vsel %vm57, %v59, %v61
    %v63 = vrot.slane %v19, 1
    %v64 = vsel %vm57, %v61, %v63
    %v65 = vrot.slane %v20, 1
    %v66 = vsel %vm57, %v63, %v65
    %v67 = vrot.slane %v21, 1
    %v68 = vsel %vm57, %v65, %v67
    %v69 = vrot.slane %v22, 1
    %v70 = vsel %vm57, %v67, %v69
    %v71 = vrot.slane %v23, 1
    %v72 = vsel %vm57, %v69, %v71
    %v73 = vrot.slane %v24, 1
    %v74 = vsel %vm57, %v71, %v73
    %v75 = vrot.slane %v25, 1
    %v76 = vsel %vm57, %v73, %v75
    %v77 = vrot.slane %v26, 1
    %v78 = vsel %vm57, %v75, %v77
    %v79 = vrot.slane %v27, 1
    %v80 = vsel %vm57, %v77, %v79
    %v81 = vrot.slane %v28, 1
    %v82 = vsel %vm57, %v79, %v81
    %v83 = vrot.slane %v29, 1
    %v84 = vsel %vm57, %v81, %v83
    %v85 = vrot.slane %v30, 1
    %v86 = vsel %vm57, %v83, %v85
    %v87 = vrot.slane %v31, 1
    %v88 = vsel %vm57, %v85, %v87
    %v89 = vrot.slane %v32, 1
    %v90 = vsel %vm57, %v87, %v89
    %v91 = vrot.slane %v33, 1
    %v92 = vsel %vm57, %v89, %v91
    %v93 = vrot.slane %v34, 1
    %v94 = vsel %vm57, %v91, %v93
    %v95 = vrot.slane %v35, 1
    %v96 = vsel %vm57, %v93, %v95
    %97 = vrot.lane.b32.xlu0 %v60, 16
    %v98 = vpop.permute.xlu0 %97
    %99 = vrot.lane.b32.xlu0 %v62, 16
    %v100 = vpop.permute.xlu0 %99
    %101 = vrot.lane.b32.xlu0 %v64, 16
    %v102 = vpop.permute.xlu0 %101
    %103 = vrot.lane.b32.xlu0 %v66, 16
    %v104 = vpop.permute.xlu0 %103
    %105 = vrot.lane.b32.xlu0 %v68, 16
    %v106 = vpop.permute.xlu0 %105
    %107 = vrot.lane.b32.xlu0 %v70, 16
    %v108 = vpop.permute.xlu0 %107
    %109 = vrot.lane.b32.xlu0 %v72, 16
    %v110 = vpop.permute.xlu0 %109
    %111 = vrot.lane.b32.xlu0 %v74, 16
    %v112 = vpop.permute.xlu0 %111
    %113 = vrot.lane.b32.xlu0 %v76, 16
    %v114 = vpop.permute.xlu0 %113
    %115 = vrot.lane.b32.xlu0 %v78, 16
    %v116 = vpop.permute.xlu0 %115
    %117 = vrot.lane.b32.xlu0 %v80, 16
    %v118 = vpop.permute.xlu0 %117
    %119 = vrot.lane.b32.xlu0 %v82, 16
    %v120 = vpop.permute.xlu0 %119
    %121 = vrot.lane.b32.xlu0 %v84, 16
    %v122 = vpop.permute.xlu0 %121
    %123 = vrot.lane.b32.xlu0 %v86, 16
    %v124 = vpop.permute.xlu0 %123
    %125 = vrot.lane.b32.xlu0 %v88, 16
    %v126 = vpop.permute.xlu0 %125
    %127 = vrot.lane.b32.xlu0 %v90, 16
    %v128 = vpop.permute.xlu0 %127
    %129 = vrot.lane.b32.xlu0 %v92, 16
    %v130 = vpop.permute.xlu0 %129
    %131 = vrot.lane.b32.xlu0 %v94, 16
    %v132 = vpop.permute.xlu0 %131
    %133 = vrot.lane.b32.xlu0 %v96, 16
    %v134 = vpop.permute.xlu0 %133
    %154 = vrot.lane.b32.xlu0 %v17, 32
    %v155 = vpop.permute.xlu0 %154
    %156 = vrot.lane.b32.xlu0 %v18, 32
    %v157 = vpop.permute.xlu0 %156
    %158 = vrot.lane.b32.xlu0 %v19, 32
    %v159 = vpop.permute.xlu0 %158
    %160 = vrot.lane.b32.xlu0 %v20, 32
    %v161 = vpop.permute.xlu0 %160
    %162 = vrot.lane.b32.xlu0 %v21, 32
    %v163 = vpop.permute.xlu0 %162
    %164 = vrot.lane.b32.xlu0 %v22, 32
    %v165 = vpop.permute.xlu0 %164
    %166 = vrot.lane.b32.xlu0 %v23, 32
    %v167 = vpop.permute.xlu0 %166
    %168 = vrot.lane.b32.xlu0 %v24, 32
    %v169 = vpop.permute.xlu0 %168
    %170 = vrot.lane.b32.xlu0 %v25, 32
    %v171 = vpop.permute.xlu0 %170
    %172 = vrot.lane.b32.xlu0 %v26, 32
    %v173 = vpop.permute.xlu0 %172
    %174 = vrot.lane.b32.xlu0 %v27, 32
    %v175 = vpop.permute.xlu0 %174
    %176 = vrot.lane.b32.xlu0 %v28, 32
    %v177 = vpop.permute.xlu0 %176
    %178 = vrot.lane.b32.xlu0 %v29, 32
    %v179 = vpop.permute.xlu0 %178
    %180 = vrot.lane.b32.xlu0 %v30, 32
    %v181 = vpop.permute.xlu0 %180
    %182 = vrot.lane.b32.xlu0 %v31, 32
    %v183 = vpop.permute.xlu0 %182
    %184 = vrot.lane.b32.xlu0 %v32, 32
    %v185 = vpop.permute.xlu0 %184
    %186 = vrot.lane.b32.xlu0 %v33, 32
    %v187 = vpop.permute.xlu0 %186
    %188 = vrot.lane.b32.xlu0 %v34, 32
    %v189 = vpop.permute.xlu0 %188
    %190 = vrot.lane.b32.xlu0 %v35, 32
    %v191 = vpop.permute.xlu0 %190
    %v212 = vrot.slane %v36, 1
    %v213 = vsel %vm57, %v95, %v212
    %214 = vrot.lane.b32.xlu0 %v62, 48
    %v215 = vpop.permute.xlu0 %214
    %216 = vrot.lane.b32.xlu0 %v64, 48
    %v217 = vpop.permute.xlu0 %216
    %218 = vrot.lane.b32.xlu0 %v66, 48
    %v219 = vpop.permute.xlu0 %218
    %220 = vrot.lane.b32.xlu0 %v68, 48
    %v221 = vpop.permute.xlu0 %220
    %222 = vrot.lane.b32.xlu0 %v70, 48
    %v223 = vpop.permute.xlu0 %222
    %224 = vrot.lane.b32.xlu0 %v72, 48
    %v225 = vpop.permute.xlu0 %224
    %226 = vrot.lane.b32.xlu0 %v74, 48
    %v227 = vpop.permute.xlu0 %226
    %228 = vrot.lane.b32.xlu0 %v76, 48
    %v229 = vpop.permute.xlu0 %228
    %230 = vrot.lane.b32.xlu0 %v78, 48
    %v231 = vpop.permute.xlu0 %230
    %232 = vrot.lane.b32.xlu0 %v80, 48
    %v233 = vpop.permute.xlu0 %232
    %234 = vrot.lane.b32.xlu0 %v82, 48
    %v235 = vpop.permute.xlu0 %234
    %236 = vrot.lane.b32.xlu0 %v84, 48
    %v237 = vpop.permute.xlu0 %236
    %238 = vrot.lane.b32.xlu0 %v86, 48
    %v239 = vpop.permute.xlu0 %238
    %240 = vrot.lane.b32.xlu0 %v88, 48
    %v241 = vpop.permute.xlu0 %240
    %242 = vrot.lane.b32.xlu0 %v90, 48
    %v243 = vpop.permute.xlu0 %242
    %244 = vrot.lane.b32.xlu0 %v92, 48
    %v245 = vpop.permute.xlu0 %244
    %246 = vrot.lane.b32.xlu0 %v94, 48
    %v247 = vpop.permute.xlu0 %246
    %248 = vrot.lane.b32.xlu0 %v96, 48
    %v249 = vpop.permute.xlu0 %248
    %250 = vrot.lane.b32.xlu0 %v213, 48
    %v251 = vpop.permute.xlu0 %250
    %vm271 = vcmask 130048
    %v272 = vsel %vm271, %v16, %v98
    %v273 = vsel %vm271, %v17, %v100
    %v274 = vsel %vm271, %v18, %v102
    %v275 = vsel %vm271, %v19, %v104
    %v276 = vsel %vm271, %v20, %v106
    %v277 = vsel %vm271, %v21, %v108
    %v278 = vsel %vm271, %v22, %v110
    %v279 = vsel %vm271, %v23, %v112
    %v280 = vsel %vm271, %v24, %v114
    %v281 = vsel %vm271, %v25, %v116
    %v282 = vsel %vm271, %v26, %v118
    %v283 = vsel %vm271, %v27, %v120
    %v284 = vsel %vm271, %v28, %v122
    %v285 = vsel %vm271, %v29, %v124
    %v286 = vsel %vm271, %v30, %v126
    %v287 = vsel %vm271, %v31, %v128
    %v288 = vsel %vm271, %v32, %v130
    %v289 = vsel %vm271, %v33, %v132
    %v290 = vsel %vm271, %v34, %v134
    %vm291 = vcmask 261120
    %v292 = vsel %vm291, %v272, %v155
    %v293 = vsel %vm291, %v273, %v157
    %v294 = vsel %vm291, %v274, %v159
    %v295 = vsel %vm291, %v275, %v161
    %v296 = vsel %vm291, %v276, %v163
    %v297 = vsel %vm291, %v277, %v165
    %v298 = vsel %vm291, %v278, %v167
    %v299 = vsel %vm291, %v279, %v169
    %v300 = vsel %vm291, %v280, %v171
    %v301 = vsel %vm291, %v281, %v173
    %v302 = vsel %vm291, %v282, %v175
    %v303 = vsel %vm291, %v283, %v177
    %v304 = vsel %vm291, %v284, %v179
    %v305 = vsel %vm291, %v285, %v181
    %v306 = vsel %vm291, %v286, %v183
    %v307 = vsel %vm291, %v287, %v185
    %v308 = vsel %vm291, %v288, %v187
    %v309 = vsel %vm291, %v289, %v189
    %v310 = vsel %vm291, %v290, %v191
    %vm311 = vcmask 392192
    %v312 = vsel %vm311, %v292, %v215
    %v313 = vsel %vm311, %v293, %v217
    %v314 = vsel %vm311, %v294, %v219
    %v315 = vsel %vm311, %v295, %v221
    %v316 = vsel %vm311, %v296, %v223
    %v317 = vsel %vm311, %v297, %v225
    %v318 = vsel %vm311, %v298, %v227
    %v319 = vsel %vm311, %v299, %v229
    %v320 = vsel %vm311, %v300, %v231
    %v321 = vsel %vm311, %v301, %v233
    %v322 = vsel %vm311, %v302, %v235
    %v323 = vsel %vm311, %v303, %v237
    %v324 = vsel %vm311, %v304, %v239
    %v325 = vsel %vm311, %v305, %v241
    %v326 = vsel %vm311, %v306, %v243
    %v327 = vsel %vm311, %v307, %v245
    %v328 = vsel %vm311, %v308, %v247
    %v329 = vsel %vm311, %v309, %v249
    %v330 = vsel %vm311, %v310, %v251
    %v331 = vld [vmem:[%s1] sm:$0xff]
    %v332 = vld [vmem:[%s1 + $0x8] sm:$0xff]
    %v333 = vld [vmem:[%s1 + $0x10] sm:$0xff]
    %v334 = vld [vmem:[%s1 + $0x18] sm:$0xff]
    %v335 = vld [vmem:[%s1 + $0x20] sm:$0xff]
    %v336 = vld [vmem:[%s1 + $0x28] sm:$0xff]
    %v337 = vld [vmem:[%s1 + $0x30] sm:$0xff]
    %v338 = vld [vmem:[%s1 + $0x38] sm:$0xff]
    %v339 = vld [vmem:[%s1 + $0x40] sm:$0xff]
    %v340 = vld [vmem:[%s1 + $0x48] sm:$0xff]
    %v341 = vld [vmem:[%s1 + $0x50] sm:$0xff]
    %v342 = vld [vmem:[%s1 + $0x58] sm:$0xff]
    %v343 = vld [vmem:[%s1 + $0x60] sm:$0xff]
    %v344 = vld [vmem:[%s1 + $0x68] sm:$0xff]
    %v345 = vld [vmem:[%s1 + $0x70] sm:$0xff]
    %v346 = vld [vmem:[%s1 + $0x78] sm:$0xff]
    %v347 = vld [vmem:[%s1 + $0x80] sm:$0xff]
    %v348 = vld [vmem:[%s1 + $0x88] sm:$0xff]
    %v349 = vld [vmem:[%s1 + $0x90] sm:$0xff]
    %v350 = vld [vmem:[%s1 + $0x98] sm:$0xff]
    %v351 = vld [vmem:[%s1 + $0xa0] sm:$0xff]
    %v352 = vld [vmem:[%s1 + $0xa8] sm:$0xff]
    %v353 = vld [vmem:[%s1 + $0xb0] sm:$0xff]
    %v354 = vld [vmem:[%s1 + $0xb8] sm:$0xff]
    %vm355 = vcmask 523264
    %v357 = vsel %vm355, %v312, 0
    %v360 = vsel %vm355, %v313, 0
    %v363 = vsel %vm355, %v314, 0
    %v366 = vsel %vm355, %v315, 0
    %v369 = vsel %vm355, %v316, 0
    %v372 = vsel %vm355, %v317, 0
    %v375 = vsel %vm355, %v318, 0
    %v378 = vsel %vm355, %v319, 0
    %v381 = vsel %vm355, %v320, 0
    %v384 = vsel %vm355, %v321, 0
    %v387 = vsel %vm355, %v322, 0
    %v390 = vsel %vm355, %v323, 0
    %v393 = vsel %vm355, %v324, 0
    %v396 = vsel %vm355, %v325, 0
    %v399 = vsel %vm355, %v326, 0
    %v402 = vsel %vm355, %v327, 0
    %v405 = vsel %vm355, %v328, 0
    %v408 = vsel %vm355, %v329, 0
    %v411 = vsel %vm355, %v330, 0
    %413 = vmatprep.subr.mxu0 %v332
    %414 = vmatpush1.msra.mxu0 %v331
    %415 = vmatprep.subr.mxu0 %v335
    %416 = vmatpush1.msra.mxu0 %v334
    %417 = vmatprep.subr.mxu0 %v338
    %418 = vmatpush1.msra.mxu0 %v337
    %419 = vmatprep.subr.mxu0 %v341
    %420 = vmatpush1.msra.mxu0 %v340
    %421 = vmatprep.subr.mxu0 %v344
    %422 = vmatpush1.msra.mxu0 %v343
    %423 = vmatprep.subr.mxu0 %v347
    %424 = vmatpush1.msra.mxu0 %v346
    %425 = vmatprep.subr.mxu0 %v350
    %426 = vmatpush1.msra.mxu0 %v349
    %427 = vmatprep.subr.mxu0 %v353
    %428 = vmatpush1.msra.mxu0 %v352
    %429 = vmatprep.subr.mxu0 0.0
    %430 = vmatpush1.msra.mxu0 0.0
    %431 = vmatprep.subr.mxu0 0.0
    %432 = vmatpush1.msra.mxu0 0.0
    %433 = vmatprep.subr.mxu0 0.0
    %434 = vmatpush1.msra.mxu0 0.0
    %435 = vmatprep.subr.mxu0 0.0
    %436 = vmatpush1.msra.mxu0 0.0
    %437 = vmatprep.subr.mxu0 0.0
    %438 = vmatpush1.msra.mxu0 0.0
    %439 = vmatprep.subr.mxu0 0.0
    %440 = vmatpush1.msra.mxu0 0.0
    %441 = vmatprep.subr.mxu0 0.0
    %442 = vmatpush1.msra.mxu0 0.0
    %443 = vmatprep.subr.mxu0 0.0
    %444 = vmatpush1.msra.mxu0 0.0
    %445 = vmatprep.subr.mxu0 0.0
    %446 = vmatpush1.msra.mxu0 0.0
    %447 = vmatprep.subr.mxu0 0.0
    %448 = vmatpush1.msra.mxu0 0.0
    %449 = vmatprep.subr.mxu0 0.0
    %450 = vmatpush1.msra.mxu0 0.0
    %451 = vmatprep.subr.mxu0 0.0
    %452 = vmatpush1.msra.mxu0 0.0
    %453 = vmatprep.subr.mxu0 0.0
    %454 = vmatpush1.msra.mxu0 0.0
    %455 = vmatprep.subr.mxu0 0.0
    %456 = vmatpush1.msra.mxu0 0.0
    %457 = vmatprep.subr.mxu0 0.0
    %458 = vmatpush1.msra.mxu0 0.0
    %459 = vmatprep.subr.mxu0 0.0
    %460 = vmatpush1.msra.mxu0 0.0
    %461 = vmatprep.subr.mxu0 0.0
    %462 = vmatpush1.msra.mxu0 0.0
    %463 = vmatprep.subr.mxu0 0.0
    %464 = vmatpush1.msra.mxu0 0.0
    %465 = vmatprep.subr.mxu0 0.0
    %466 = vmatpush1.msra.mxu0 0.0
    %467 = vmatprep.subr.mxu0 0.0
    %468 = vmatpush1.msra.mxu0 0.0
    %469 = vmatprep.subr.mxu0 0.0
    %470 = vmatpush1.msra.mxu0 0.0
    %471 = vmatprep.subr.mxu0 0.0
    %472 = vmatpush1.msra.mxu0 0.0
    %473 = vmatprep.subr.mxu0 0.0
    %474 = vmatpush1.msra.mxu0 0.0
    %475 = vmatprep.subr.mxu0 0.0
    %476 = vmatpush1.msra.mxu0 0.0
    %477 = vmatprep.mubr.f32.mxu0 0.0
    %478 = vmatmul.mubr.f32.gmra.mrb[0].mxu0 %v357
    %v479 = vpop.f32.mrb[0].mxu0
    %v480 = vadd.f32 0.0, %v479
    %v481 = vpop.f32.mrb[0].mxu0
    %v482 = vadd.f32 0.0, %v481
    %483 = vmatprep.mubr.f32.mxu0 0.0
    %484 = vmatmul.mubr.f32.gmra.mrb[0].mxu0 %v360
    %v485 = vpop.f32.mrb[0].mxu0
    %v486 = vadd.f32 0.0, %v485
    %v487 = vpop.f32.mrb[0].mxu0
    %v488 = vadd.f32 0.0, %v487
    %489 = vmatprep.mubr.f32.mxu0 0.0
    %490 = vmatmul.mubr.f32.gmra.mrb[0].mxu0 %v363
    %v491 = vpop.f32.mrb[0].mxu0
    %v492 = vadd.f32 0.0, %v491
    %v493 = vpop.f32.mrb[0].mxu0
    %v494 = vadd.f32 0.0, %v493
    %495 = vmatprep.mubr.f32.mxu0 0.0
    %496 = vmatmul.mubr.f32.gmra.mrb[0].mxu0 %v366
    %v497 = vpop.f32.mrb[0].mxu0
    %v498 = vadd.f32 0.0, %v497
    %v499 = vpop.f32.mrb[0].mxu0
    %v500 = vadd.f32 0.0, %v499
    %501 = vmatprep.mubr.f32.mxu0 0.0
    %502 = vmatmul.mubr.f32.gmra.mrb[0].mxu0 %v369
    %v503 = vpop.f32.mrb[0].mxu0
    %v504 = vadd.f32 0.0, %v503
    %v505 = vpop.f32.mrb[0].mxu0
    %v506 = vadd.f32 0.0, %v505
    %507 = vmatprep.mubr.f32.mxu0 0.0
    %508 = vmatmul.mubr.f32.gmra.mrb[0].mxu0 %v372
    %v509 = vpop.f32.mrb[0].mxu0
    %v510 = vadd.f32 0.0, %v509
    %v511 = vpop.f32.mrb[0].mxu0
    %v512 = vadd.f32 0.0, %v511
    %513 = vmatprep.mubr.f32.mxu0 0.0
    %514 = vmatmul.mubr.f32.gmra.mrb[0].mxu0 %v375
    %v515 = vpop.f32.mrb[0].mxu0
    %v516 = vadd.f32 0.0, %v515
    %v517 = vpop.f32.mrb[0].mxu0
    %v518 = vadd.f32 0.0, %v517
    %519 = vmatprep.mubr.f32.mxu0 0.0
    %520 = vmatmul.mubr.f32.gmra.mrb[0].mxu0 %v378
    %v521 = vpop.f32.mrb[0].mxu0
    %v522 = vadd.f32 0.0, %v521
    %v523 = vpop.f32.mrb[0].mxu0
    %v524 = vadd.f32 0.0, %v523
    %525 = vmatprep.mubr.f32.mxu0 0.0
    %526 = vmatmul.mubr.f32.gmra.mrb[0].mxu0 %v381
    %v527 = vpop.f32.mrb[0].mxu0
    %v528 = vadd.f32 0.0, %v527
    %v529 = vpop.f32.mrb[0].mxu0
    %v530 = vadd.f32 0.0, %v529
    %531 = vmatprep.mubr.f32.mxu0 0.0
    %532 = vmatmul.mubr.f32.gmra.mrb[0].mxu0 %v384
    %v533 = vpop.f32.mrb[0].mxu0
    %v534 = vadd.f32 0.0, %v533
    %v535 = vpop.f32.mrb[0].mxu0
    %v536 = vadd.f32 0.0, %v535
    %537 = vmatprep.mubr.f32.mxu0 0.0
    %538 = vmatmul.mubr.f32.gmra.mrb[0].mxu0 %v387
    %v539 = vpop.f32.mrb[0].mxu0
    %v540 = vadd.f32 0.0, %v539
    %v541 = vpop.f32.mrb[0].mxu0
    %v542 = vadd.f32 0.0, %v541
    %543 = vmatprep.mubr.f32.mxu0 0.0
    %544 = vmatmul.mubr.f32.gmra.mrb[0].mxu0 %v390
    %v545 = vpop.f32.mrb[0].mxu0
    %v546 = vadd.f32 0.0, %v545
    %v547 = vpop.f32.mrb[0].mxu0
    %v548 = vadd.f32 0.0, %v547
    %549 = vmatprep.mubr.f32.mxu0 0.0
    %550 = vmatmul.mubr.f32.gmra.mrb[0].mxu0 %v393
    %v551 = vpop.f32.mrb[0].mxu0
    %v552 = vadd.f32 0.0, %v551
    %v553 = vpop.f32.mrb[0].mxu0
    %v554 = vadd.f32 0.0, %v553
    %555 = vmatprep.mubr.f32.mxu0 0.0
    %556 = vmatmul.mubr.f32.gmra.mrb[0].mxu0 %v396
    %v557 = vpop.f32.mrb[0].mxu0
    %v558 = vadd.f32 0.0, %v557
    %v559 = vpop.f32.mrb[0].mxu0
    %v560 = vadd.f32 0.0, %v559
    %561 = vmatprep.mubr.f32.mxu0 0.0
    %562 = vmatmul.mubr.f32.gmra.mrb[0].mxu0 %v399
    %v563 = vpop.f32.mrb[0].mxu0
    %v564 = vadd.f32 0.0, %v563
    %v565 = vpop.f32.mrb[0].mxu0
    %v566 = vadd.f32 0.0, %v565
    %567 = vmatprep.mubr.f32.mxu0 0.0
    %568 = vmatmul.mubr.f32.gmra.mrb[0].mxu0 %v402
    %v569 = vpop.f32.mrb[0].mxu0
    %v570 = vadd.f32 0.0, %v569
    %v571 = vpop.f32.mrb[0].mxu0
    %v572 = vadd.f32 0.0, %v571
    %573 = vmatprep.mubr.f32.mxu0 0.0
    %574 = vmatmul.mubr.f32.gmra.mrb[0].mxu0 %v405
    %v575 = vpop.f32.mrb[0].mxu0
    %v576 = vadd.f32 0.0, %v575
    %v577 = vpop.f32.mrb[0].mxu0
    %v578 = vadd.f32 0.0, %v577
    %579 = vmatprep.mubr.f32.mxu0 0.0
    %580 = vmatmul.mubr.f32.gmra.mrb[0].mxu0 %v408
    %v581 = vpop.f32.mrb[0].mxu0
    %v582 = vadd.f32 0.0, %v581
    %v583 = vpop.f32.mrb[0].mxu0
    %v584 = vadd.f32 0.0, %v583
    %585 = vmatprep.mubr.f32.mxu0 0.0
    %586 = vmatmul.mubr.f32.gmra.mrb[0].mxu0 %v411
    %v587 = vpop.f32.mrb[0].mxu0
    %v588 = vadd.f32 0.0, %v587
    %v589 = vpop.f32.mrb[0].mxu0
    %v590 = vadd.f32 0.0, %v589
    %591 = vdwg.mxu0
    %592 = vmatprep.subr.mxu0 0.0
    %593 = vmatpush1.msra.mxu0 %v333
    %594 = vmatprep.subr.mxu0 0.0
    %595 = vmatpush1.msra.mxu0 %v336
    %596 = vmatprep.subr.mxu0 0.0
    %597 = vmatpush1.msra.mxu0 %v339
    %598 = vmatprep.subr.mxu0 0.0
    %599 = vmatpush1.msra.mxu0 %v342
    %600 = vmatprep.subr.mxu0 0.0
    %601 = vmatpush1.msra.mxu0 %v345
    %602 = vmatprep.subr.mxu0 0.0
    %603 = vmatpush1.msra.mxu0 %v348
    %604 = vmatprep.subr.mxu0 0.0
    %605 = vmatpush1.msra.mxu0 %v351
    %606 = vmatprep.subr.mxu0 0.0
    %607 = vmatpush1.msra.mxu0 %v354
    %608 = vmatprep.subr.mxu0 0.0
    %609 = vmatpush1.msra.mxu0 0.0
    %610 = vmatprep.subr.mxu0 0.0
    %611 = vmatpush1.msra.mxu0 0.0
    %612 = vmatprep.subr.mxu0 0.0
    %613 = vmatpush1.msra.mxu0 0.0
    %614 = vmatprep.subr.mxu0 0.0
    %615 = vmatpush1.msra.mxu0 0.0
    %616 = vmatprep.subr.mxu0 0.0
    %617 = vmatpush1.msra.mxu0 0.0
    %618 = vmatprep.subr.mxu0 0.0
    %619 = vmatpush1.msra.mxu0 0.0
    %620 = vmatprep.subr.mxu0 0.0
    %621 = vmatpush1.msra.mxu0 0.0
    %622 = vmatprep.subr.mxu0 0.0
    %623 = vmatpush1.msra.mxu0 0.0
    %624 = vmatprep.subr.mxu0 0.0
    %625 = vmatpush1.msra.mxu0 0.0
    %626 = vmatprep.subr.mxu0 0.0
    %627 = vmatpush1.msra.mxu0 0.0
    %628 = vmatprep.subr.mxu0 0.0
    %629 = vmatpush1.msra.mxu0 0.0
    %630 = vmatprep.subr.mxu0 0.0
    %631 = vmatpush1.msra.mxu0 0.0
    %632 = vmatprep.subr.mxu0 0.0
    %633 = vmatpush1.msra.mxu0 0.0
    %634 = vmatprep.subr.mxu0 0.0
    %635 = vmatpush1.msra.mxu0 0.0
    %636 = vmatprep.subr.mxu0 0.0
    %637 = vmatpush1.msra.mxu0 0.0
    %638 = vmatprep.subr.mxu0 0.0
    %639 = vmatpush1.msra.mxu0 0.0
    %640 = vmatprep.subr.mxu0 0.0
    %641 = vmatpush1.msra.mxu0 0.0
    %642 = vmatprep.subr.mxu0 0.0
    %643 = vmatpush1.msra.mxu0 0.0
    %644 = vmatprep.subr.mxu0 0.0
    %645 = vmatpush1.msra.mxu0 0.0
    %646 = vmatprep.subr.mxu0 0.0
    %647 = vmatpush1.msra.mxu0 0.0
    %648 = vmatprep.subr.mxu0 0.0
    %649 = vmatpush1.msra.mxu0 0.0
    %650 = vmatprep.subr.mxu0 0.0
    %651 = vmatpush1.msra.mxu0 0.0
    %652 = vmatprep.subr.mxu0 0.0
    %653 = vmatpush1.msra.mxu0 0.0
    %654 = vmatprep.subr.mxu0 0.0
    %655 = vmatpush1.msra.mxu0 0.0
    %656 = vmatprep.mubr.f32.mxu0 0.0
    %657 = vmatmul.mubr.f32.gmra.mrb[0].mxu0 %v357
    %v658 = vpop.f32.mrb[0].mxu0
    %v659 = vadd.f32 0.0, %v658
    %v660 = vpop.f32.mrb[0].mxu0
    %661 = vmatprep.mubr.f32.mxu0 0.0
    %662 = vmatmul.mubr.f32.gmra.mrb[0].mxu0 %v360
    %v663 = vpop.f32.mrb[0].mxu0
    %v664 = vadd.f32 0.0, %v663
    %v665 = vpop.f32.mrb[0].mxu0
    %666 = vmatprep.mubr.f32.mxu0 0.0
    %667 = vmatmul.mubr.f32.gmra.mrb[0].mxu0 %v363
    %v668 = vpop.f32.mrb[0].mxu0
    %v669 = vadd.f32 0.0, %v668
    %v670 = vpop.f32.mrb[0].mxu0
    %671 = vmatprep.mubr.f32.mxu0 0.0
    %672 = vmatmul.mubr.f32.gmra.mrb[0].mxu0 %v366
    %v673 = vpop.f32.mrb[0].mxu0
    %v674 = vadd.f32 0.0, %v673
    %v675 = vpop.f32.mrb[0].mxu0
    %676 = vmatprep.mubr.f32.mxu0 0.0
    %677 = vmatmul.mubr.f32.gmra.mrb[0].mxu0 %v369
    %v678 = vpop.f32.mrb[0].mxu0
    %v679 = vadd.f32 0.0, %v678
    %v680 = vpop.f32.mrb[0].mxu0
    %681 = vmatprep.mubr.f32.mxu0 0.0
    %682 = vmatmul.mubr.f32.gmra.mrb[0].mxu0 %v372
    %v683 = vpop.f32.mrb[0].mxu0
    %v684 = vadd.f32 0.0, %v683
    %v685 = vpop.f32.mrb[0].mxu0
    %686 = vmatprep.mubr.f32.mxu0 0.0
    %687 = vmatmul.mubr.f32.gmra.mrb[0].mxu0 %v375
    %v688 = vpop.f32.mrb[0].mxu0
    %v689 = vadd.f32 0.0, %v688
    %v690 = vpop.f32.mrb[0].mxu0
    %691 = vmatprep.mubr.f32.mxu0 0.0
    %692 = vmatmul.mubr.f32.gmra.mrb[0].mxu0 %v378
    %v693 = vpop.f32.mrb[0].mxu0
    %v694 = vadd.f32 0.0, %v693
    %v695 = vpop.f32.mrb[0].mxu0
    %696 = vmatprep.mubr.f32.mxu0 0.0
    %697 = vmatmul.mubr.f32.gmra.mrb[0].mxu0 %v381
    %v698 = vpop.f32.mrb[0].mxu0
    %v699 = vadd.f32 0.0, %v698
    %v700 = vpop.f32.mrb[0].mxu0
    %701 = vmatprep.mubr.f32.mxu0 0.0
    %702 = vmatmul.mubr.f32.gmra.mrb[0].mxu0 %v384
    %v703 = vpop.f32.mrb[0].mxu0
    %v704 = vadd.f32 0.0, %v703
    %v705 = vpop.f32.mrb[0].mxu0
    %706 = vmatprep.mubr.f32.mxu0 0.0
    %707 = vmatmul.mubr.f32.gmra.mrb[0].mxu0 %v387
    %v708 = vpop.f32.mrb[0].mxu0
    %v709 = vadd.f32 0.0, %v708
    %v710 = vpop.f32.mrb[0].mxu0
    %711 = vmatprep.mubr.f32.mxu0 0.0
    %712 = vmatmul.mubr.f32.gmra.mrb[0].mxu0 %v390
    %v713 = vpop.f32.mrb[0].mxu0
    %v714 = vadd.f32 0.0, %v713
    %v715 = vpop.f32.mrb[0].mxu0
    %716 = vmatprep.mubr.f32.mxu0 0.0
    %717 = vmatmul.mubr.f32.gmra.mrb[0].mxu0 %v393
    %v718 = vpop.f32.mrb[0].mxu0
    %v719 = vadd.f32 0.0, %v718
    %v720 = vpop.f32.mrb[0].mxu0
    %721 = vmatprep.mubr.f32.mxu0 0.0
    %722 = vmatmul.mubr.f32.gmra.mrb[0].mxu0 %v396
    %v723 = vpop.f32.mrb[0].mxu0
    %v724 = vadd.f32 0.0, %v723
    %v725 = vpop.f32.mrb[0].mxu0
    %726 = vmatprep.mubr.f32.mxu0 0.0
    %727 = vmatmul.mubr.f32.gmra.mrb[0].mxu0 %v399
    %v728 = vpop.f32.mrb[0].mxu0
    %v729 = vadd.f32 0.0, %v728
    %v730 = vpop.f32.mrb[0].mxu0
    %731 = vmatprep.mubr.f32.mxu0 0.0
    %732 = vmatmul.mubr.f32.gmra.mrb[0].mxu0 %v402
    %v733 = vpop.f32.mrb[0].mxu0
    %v734 = vadd.f32 0.0, %v733
    %v735 = vpop.f32.mrb[0].mxu0
    %736 = vmatprep.mubr.f32.mxu0 0.0
    %737 = vmatmul.mubr.f32.gmra.mrb[0].mxu0 %v405
    %v738 = vpop.f32.mrb[0].mxu0
    %v739 = vadd.f32 0.0, %v738
    %v740 = vpop.f32.mrb[0].mxu0
    %741 = vmatprep.mubr.f32.mxu0 0.0
    %742 = vmatmul.mubr.f32.gmra.mrb[0].mxu0 %v408
    %v743 = vpop.f32.mrb[0].mxu0
    %v744 = vadd.f32 0.0, %v743
    %v745 = vpop.f32.mrb[0].mxu0
    %746 = vmatprep.mubr.f32.mxu0 0.0
    %747 = vmatmul.mubr.f32.gmra.mrb[0].mxu0 %v411
    %v748 = vpop.f32.mrb[0].mxu0
    %v749 = vadd.f32 0.0, %v748
    %v750 = vpop.f32.mrb[0].mxu0
    %751 = vdwg.mxu0
    %v752 = vld [vmem:[%s1 + $0xc0] ss:$0 sm:$0xff]
    %791 = vrot.lane.b32.xlu0 %v480, 48
    %v792 = vpop.permute.xlu0 %791
    %793 = vrot.lane.b32.xlu0 %v482, 48
    %v794 = vpop.permute.xlu0 %793
    %795 = vrot.lane.b32.xlu0 %v486, 48
    %v796 = vpop.permute.xlu0 %795
    %797 = vrot.lane.b32.xlu0 %v488, 48
    %v798 = vpop.permute.xlu0 %797
    %799 = vrot.lane.b32.xlu0 %v492, 48
    %v800 = vpop.permute.xlu0 %799
    %801 = vrot.lane.b32.xlu0 %v494, 48
    %v802 = vpop.permute.xlu0 %801
    %803 = vrot.lane.b32.xlu0 %v498, 48
    %v804 = vpop.permute.xlu0 %803
    %805 = vrot.lane.b32.xlu0 %v500, 48
    %v806 = vpop.permute.xlu0 %805
    %807 = vrot.lane.b32.xlu0 %v504, 48
    %v808 = vpop.permute.xlu0 %807
    %809 = vrot.lane.b32.xlu0 %v506, 48
    %v810 = vpop.permute.xlu0 %809
    %811 = vrot.lane.b32.xlu0 %v510, 48
    %v812 = vpop.permute.xlu0 %811
    %813 = vrot.lane.b32.xlu0 %v512, 48
    %v814 = vpop.permute.xlu0 %813
    %815 = vrot.lane.b32.xlu0 %v516, 48
    %v816 = vpop.permute.xlu0 %815
    %817 = vrot.lane.b32.xlu0 %v518, 48
    %v818 = vpop.permute.xlu0 %817
    %819 = vrot.lane.b32.xlu0 %v522, 48
    %v820 = vpop.permute.xlu0 %819
    %821 = vrot.lane.b32.xlu0 %v524, 48
    %v822 = vpop.permute.xlu0 %821
    %823 = vrot.lane.b32.xlu0 %v528, 48
    %v824 = vpop.permute.xlu0 %823
    %825 = vrot.lane.b32.xlu0 %v530, 48
    %v826 = vpop.permute.xlu0 %825
    %827 = vrot.lane.b32.xlu0 %v534, 48
    %v828 = vpop.permute.xlu0 %827
    %829 = vrot.lane.b32.xlu0 %v536, 48
    %v830 = vpop.permute.xlu0 %829
    %831 = vrot.lane.b32.xlu0 %v540, 48
    %v832 = vpop.permute.xlu0 %831
    %833 = vrot.lane.b32.xlu0 %v542, 48
    %v834 = vpop.permute.xlu0 %833
    %835 = vrot.lane.b32.xlu0 %v546, 48
    %v836 = vpop.permute.xlu0 %835
    %837 = vrot.lane.b32.xlu0 %v548, 48
    %v838 = vpop.permute.xlu0 %837
    %839 = vrot.lane.b32.xlu0 %v552, 48
    %v840 = vpop.permute.xlu0 %839
    %841 = vrot.lane.b32.xlu0 %v554, 48
    %v842 = vpop.permute.xlu0 %841
    %843 = vrot.lane.b32.xlu0 %v558, 48
    %v844 = vpop.permute.xlu0 %843
    %845 = vrot.lane.b32.xlu0 %v560, 48
    %v846 = vpop.permute.xlu0 %845
    %847 = vrot.lane.b32.xlu0 %v564, 48
    %v848 = vpop.permute.xlu0 %847
    %849 = vrot.lane.b32.xlu0 %v566, 48
    %v850 = vpop.permute.xlu0 %849
    %851 = vrot.lane.b32.xlu0 %v570, 48
    %v852 = vpop.permute.xlu0 %851
    %853 = vrot.lane.b32.xlu0 %v572, 48
    %v854 = vpop.permute.xlu0 %853
    %855 = vrot.lane.b32.xlu0 %v576, 48
    %v856 = vpop.permute.xlu0 %855
    %857 = vrot.lane.b32.xlu0 %v578, 48
    %v858 = vpop.permute.xlu0 %857
    %859 = vrot.lane.b32.xlu0 %v582, 48
    %v860 = vpop.permute.xlu0 %859
    %861 = vrot.lane.b32.xlu0 %v584, 48
    %v862 = vpop.permute.xlu0 %861
    %863 = vrot.lane.b32.xlu0 %v588, 48
    %v864 = vpop.permute.xlu0 %863
    %865 = vrot.lane.b32.xlu0 %v590, 48
    %v866 = vpop.permute.xlu0 %865
    %v867 = vsel %vm311, %v792, %v794
    %v868 = vsel %vm311, %v796, %v798
    %v869 = vsel %vm311, %v800, %v802
    %v870 = vsel %vm311, %v804, %v806
    %v871 = vsel %vm311, %v808, %v810
    %v872 = vsel %vm311, %v812, %v814
    %v873 = vsel %vm311, %v816, %v818
    %v874 = vsel %vm311, %v820, %v822
    %v875 = vsel %vm311, %v824, %v826
    %v876 = vsel %vm311, %v828, %v830
    %v877 = vsel %vm311, %v832, %v834
    %v878 = vsel %vm311, %v836, %v838
    %v879 = vsel %vm311, %v840, %v842
    %v880 = vsel %vm311, %v844, %v846
    %v881 = vsel %vm311, %v848, %v850
    %v882 = vsel %vm311, %v852, %v854
    %v883 = vsel %vm311, %v856, %v858
    %v884 = vsel %vm311, %v860, %v862
    %v885 = vsel %vm311, %v864, %v866
    %v905 = vmax.f32 %v480, %v867
    %v906 = vmax.f32 %v486, %v868
    %v907 = vmax.f32 %v492, %v869
    %v908 = vmax.f32 %v498, %v870
    %v909 = vmax.f32 %v504, %v871
    %v910 = vmax.f32 %v510, %v872
    %v911 = vmax.f32 %v516, %v873
    %v912 = vmax.f32 %v522, %v874
    %v913 = vmax.f32 %v528, %v875
    %v914 = vmax.f32 %v534, %v876
    %v915 = vmax.f32 %v540, %v877
    %v916 = vmax.f32 %v546, %v878
    %v917 = vmax.f32 %v552, %v879
    %v918 = vmax.f32 %v558, %v880
    %v919 = vmax.f32 %v564, %v881
    %v920 = vmax.f32 %v570, %v882
    %v921 = vmax.f32 %v576, %v883
    %v922 = vmax.f32 %v582, %v884
    %v923 = vmax.f32 %v588, %v885
    %943 = vrot.lane.b32.xlu0 %v659, 48
    %v944 = vpop.permute.xlu0 %943
    %945 = vrot.lane.b32.xlu0 %v664, 48
    %v946 = vpop.permute.xlu0 %945
    %947 = vrot.lane.b32.xlu0 %v669, 48
    %v948 = vpop.permute.xlu0 %947
    %949 = vrot.lane.b32.xlu0 %v674, 48
    %v950 = vpop.permute.xlu0 %949
    %951 = vrot.lane.b32.xlu0 %v679, 48
    %v952 = vpop.permute.xlu0 %951
    %953 = vrot.lane.b32.xlu0 %v684, 48
    %v954 = vpop.permute.xlu0 %953
    %955 = vrot.lane.b32.xlu0 %v689, 48
    %v956 = vpop.permute.xlu0 %955
    %957 = vrot.lane.b32.xlu0 %v694, 48
    %v958 = vpop.permute.xlu0 %957
    %959 = vrot.lane.b32.xlu0 %v699, 48
    %v960 = vpop.permute.xlu0 %959
    %961 = vrot.lane.b32.xlu0 %v704, 48
    %v962 = vpop.permute.xlu0 %961
    %963 = vrot.lane.b32.xlu0 %v709, 48
    %v964 = vpop.permute.xlu0 %963
    %965 = vrot.lane.b32.xlu0 %v714, 48
    %v966 = vpop.permute.xlu0 %965
    %967 = vrot.lane.b32.xlu0 %v719, 48
    %v968 = vpop.permute.xlu0 %967
    %969 = vrot.lane.b32.xlu0 %v724, 48
    %v970 = vpop.permute.xlu0 %969
    %971 = vrot.lane.b32.xlu0 %v729, 48
    %v972 = vpop.permute.xlu0 %971
    %973 = vrot.lane.b32.xlu0 %v734, 48
    %v974 = vpop.permute.xlu0 %973
    %975 = vrot.lane.b32.xlu0 %v739, 48
    %v976 = vpop.permute.xlu0 %975
    %977 = vrot.lane.b32.xlu0 %v744, 48
    %v978 = vpop.permute.xlu0 %977
    %979 = vrot.lane.b32.xlu0 %v749, 48
    %v980 = vpop.permute.xlu0 %979
    %v981 = vsel %vm311, %v794, %v944
    %v982 = vsel %vm311, %v798, %v946
    %v983 = vsel %vm311, %v802, %v948
    %v984 = vsel %vm311, %v806, %v950
    %v985 = vsel %vm311, %v810, %v952
    %v986 = vsel %vm311, %v814, %v954
    %v987 = vsel %vm311, %v818, %v956
    %v988 = vsel %vm311, %v822, %v958
    %v989 = vsel %vm311, %v826, %v960
    %v990 = vsel %vm311, %v830, %v962
    %v991 = vsel %vm311, %v834, %v964
    %v992 = vsel %vm311, %v838, %v966
    %v993 = vsel %vm311, %v842, %v968
    %v994 = vsel %vm311, %v846, %v970
    %v995 = vsel %vm311, %v850, %v972
    %v996 = vsel %vm311, %v854, %v974
    %v997 = vsel %vm311, %v858, %v976
    %v998 = vsel %vm311, %v862, %v978
    %v999 = vsel %vm311, %v866, %v980
    %v1019 = vmax.f32 %v482, %v981
    %v1020 = vmax.f32 %v488, %v982
    %v1021 = vmax.f32 %v494, %v983
    %v1022 = vmax.f32 %v500, %v984
    %v1023 = vmax.f32 %v506, %v985
    %v1024 = vmax.f32 %v512, %v986
    %v1025 = vmax.f32 %v518, %v987
    %v1026 = vmax.f32 %v524, %v988
    %v1027 = vmax.f32 %v530, %v989
    %v1028 = vmax.f32 %v536, %v990
    %v1029 = vmax.f32 %v542, %v991
    %v1030 = vmax.f32 %v548, %v992
    %v1031 = vmax.f32 %v554, %v993
    %v1032 = vmax.f32 %v560, %v994
    %v1033 = vmax.f32 %v566, %v995
    %v1034 = vmax.f32 %v572, %v996
    %v1035 = vmax.f32 %v578, %v997
    %v1036 = vmax.f32 %v584, %v998
    %v1037 = vmax.f32 %v590, %v999
    %1057 = vrot.lane.b32.xlu0 %v1019, 96
    %v1058 = vpop.permute.xlu0 %1057
    %1059 = vrot.lane.b32.xlu0 %v1020, 96
    %v1060 = vpop.permute.xlu0 %1059
    %1061 = vrot.lane.b32.xlu0 %v1021, 96
    %v1062 = vpop.permute.xlu0 %1061
    %1063 = vrot.lane.b32.xlu0 %v1022, 96
    %v1064 = vpop.permute.xlu0 %1063
    %1065 = vrot.lane.b32.xlu0 %v1023, 96
    %v1066 = vpop.permute.xlu0 %1065
    %1067 = vrot.lane.b32.xlu0 %v1024, 96
    %v1068 = vpop.permute.xlu0 %1067
    %1069 = vrot.lane.b32.xlu0 %v1025, 96
    %v1070 = vpop.permute.xlu0 %1069
    %1071 = vrot.lane.b32.xlu0 %v1026, 96
    %v1072 = vpop.permute.xlu0 %1071
    %1073 = vrot.lane.b32.xlu0 %v1027, 96
    %v1074 = vpop.permute.xlu0 %1073
    %1075 = vrot.lane.b32.xlu0 %v1028, 96
    %v1076 = vpop.permute.xlu0 %1075
    %1077 = vrot.lane.b32.xlu0 %v1029, 96
    %v1078 = vpop.permute.xlu0 %1077
    %1079 = vrot.lane.b32.xlu0 %v1030, 96
    %v1080 = vpop.permute.xlu0 %1079
    %1081 = vrot.lane.b32.xlu0 %v1031, 96
    %v1082 = vpop.permute.xlu0 %1081
    %1083 = vrot.lane.b32.xlu0 %v1032, 96
    %v1084 = vpop.permute.xlu0 %1083
    %1085 = vrot.lane.b32.xlu0 %v1033, 96
    %v1086 = vpop.permute.xlu0 %1085
    %1087 = vrot.lane.b32.xlu0 %v1034, 96
    %v1088 = vpop.permute.xlu0 %1087
    %1089 = vrot.lane.b32.xlu0 %v1035, 96
    %v1090 = vpop.permute.xlu0 %1089
    %1091 = vrot.lane.b32.xlu0 %v1036, 96
    %v1092 = vpop.permute.xlu0 %1091
    %1093 = vrot.lane.b32.xlu0 %v1037, 96
    %v1094 = vpop.permute.xlu0 %1093
    %v1114 = vmax.f32 %v905, %v1058
    %v1115 = vmax.f32 %v906, %v1060
    %v1116 = vmax.f32 %v907, %v1062
    %v1117 = vmax.f32 %v908, %v1064
    %v1118 = vmax.f32 %v909, %v1066
    %v1119 = vmax.f32 %v910, %v1068
    %v1120 = vmax.f32 %v911, %v1070
    %v1121 = vmax.f32 %v912, %v1072
    %v1122 = vmax.f32 %v913, %v1074
    %v1123 = vmax.f32 %v914, %v1076
    %v1124 = vmax.f32 %v915, %v1078
    %v1125 = vmax.f32 %v916, %v1080
    %v1126 = vmax.f32 %v917, %v1082
    %v1127 = vmax.f32 %v918, %v1084
    %v1128 = vmax.f32 %v919, %v1086
    %v1129 = vmax.f32 %v920, %v1088
    %v1130 = vmax.f32 %v921, %v1090
    %v1131 = vmax.f32 %v922, %v1092
    %v1132 = vmax.f32 %v923, %v1094
    %v1133 = vadd.f32 %v1114, %v752
    %v1134 = vadd.f32 %v1115, %v752
    %v1135 = vadd.f32 %v1116, %v752
    %v1136 = vadd.f32 %v1117, %v752
    %v1137 = vadd.f32 %v1118, %v752
    %v1138 = vadd.f32 %v1119, %v752
    %v1139 = vadd.f32 %v1120, %v752
    %v1140 = vadd.f32 %v1121, %v752
    %v1141 = vadd.f32 %v1122, %v752
    %v1142 = vadd.f32 %v1123, %v752
    %v1143 = vadd.f32 %v1124, %v752
    %v1144 = vadd.f32 %v1125, %v752
    %v1145 = vadd.f32 %v1126, %v752
    %v1146 = vadd.f32 %v1127, %v752
    %v1147 = vadd.f32 %v1128, %v752
    %v1148 = vadd.f32 %v1129, %v752
    %v1149 = vadd.f32 %v1130, %v752
    %v1150 = vadd.f32 %v1131, %v752
    %v1151 = vadd.f32 %v1132, %v752
    %v1152 = vmax.f32 %v1133, 0.0
    %v1153 = vmax.f32 %v1134, 0.0
    %v1154 = vmax.f32 %v1135, 0.0
    %v1155 = vmax.f32 %v1136, 0.0
    %v1156 = vmax.f32 %v1137, 0.0
    %v1157 = vmax.f32 %v1138, 0.0
    %v1158 = vmax.f32 %v1139, 0.0
    %v1159 = vmax.f32 %v1140, 0.0
    %v1160 = vmax.f32 %v1141, 0.0
    %v1161 = vmax.f32 %v1142, 0.0
    %v1162 = vmax.f32 %v1143, 0.0
    %v1163 = vmax.f32 %v1144, 0.0
    %v1164 = vmax.f32 %v1145, 0.0
    %v1165 = vmax.f32 %v1146, 0.0
    %v1166 = vmax.f32 %v1147, 0.0
    %v1167 = vmax.f32 %v1148, 0.0
    %v1168 = vmax.f32 %v1149, 0.0
    %v1169 = vmax.f32 %v1150, 0.0
    %v1170 = vmax.f32 %v1151, 0.0
    %v1188 = vrot.slane %v1152, 1
    %v1189 = vrot.slane %v1153, 1
    %v1190 = vsel %vm57, %v1188, %v1189
    %v1191 = vrot.slane %v1154, 1
    %v1192 = vsel %vm57, %v1189, %v1191
    %v1193 = vrot.slane %v1155, 1
    %v1194 = vsel %vm57, %v1191, %v1193
    %v1195 = vrot.slane %v1156, 1
    %v1196 = vsel %vm57, %v1193, %v1195
    %v1197 = vrot.slane %v1157, 1
    %v1198 = vsel %vm57, %v1195, %v1197
    %v1199 = vrot.slane %v1158, 1
    %v1200 = vsel %vm57, %v1197, %v1199
    %v1201 = vrot.slane %v1159, 1
    %v1202 = vsel %vm57, %v1199, %v1201
    %v1203 = vrot.slane %v1160, 1
    %v1204 = vsel %vm57, %v1201, %v1203
    %v1205 = vrot.slane %v1161, 1
    %v1206 = vsel %vm57, %v1203, %v1205
    %v1207 = vrot.slane %v1162, 1
    %v1208 = vsel %vm57, %v1205, %v1207
    %v1209 = vrot.slane %v1163, 1
    %v1210 = vsel %vm57, %v1207, %v1209
    %v1211 = vrot.slane %v1164, 1
    %v1212 = vsel %vm57, %v1209, %v1211
    %v1213 = vrot.slane %v1165, 1
    %v1214 = vsel %vm57, %v1211, %v1213
    %v1215 = vrot.slane %v1166, 1
    %v1216 = vsel %vm57, %v1213, %v1215
    %v1217 = vrot.slane %v1167, 1
    %v1218 = vsel %vm57, %v1215, %v1217
    %v1219 = vrot.slane %v1168, 1
    %v1220 = vsel %vm57, %v1217, %v1219
    %1221 = vrot.lane.b32.xlu0 %v1190, 80
    %v1222 = vpop.permute.xlu0 %1221
    %1223 = vrot.lane.b32.xlu0 %v1192, 80
    %v1224 = vpop.permute.xlu0 %1223
    %1225 = vrot.lane.b32.xlu0 %v1194, 80
    %v1226 = vpop.permute.xlu0 %1225
    %1227 = vrot.lane.b32.xlu0 %v1196, 80
    %v1228 = vpop.permute.xlu0 %1227
    %1229 = vrot.lane.b32.xlu0 %v1198, 80
    %v1230 = vpop.permute.xlu0 %1229
    %1231 = vrot.lane.b32.xlu0 %v1200, 80
    %v1232 = vpop.permute.xlu0 %1231
    %1233 = vrot.lane.b32.xlu0 %v1202, 80
    %v1234 = vpop.permute.xlu0 %1233
    %1235 = vrot.lane.b32.xlu0 %v1204, 80
    %v1236 = vpop.permute.xlu0 %1235
    %1237 = vrot.lane.b32.xlu0 %v1206, 80
    %v1238 = vpop.permute.xlu0 %1237
    %1239 = vrot.lane.b32.xlu0 %v1208, 80
    %v1240 = vpop.permute.xlu0 %1239
    %1241 = vrot.lane.b32.xlu0 %v1210, 80
    %v1242 = vpop.permute.xlu0 %1241
    %1243 = vrot.lane.b32.xlu0 %v1212, 80
    %v1244 = vpop.permute.xlu0 %1243
    %1245 = vrot.lane.b32.xlu0 %v1214, 80
    %v1246 = vpop.permute.xlu0 %1245
    %1247 = vrot.lane.b32.xlu0 %v1216, 80
    %v1248 = vpop.permute.xlu0 %1247
    %1249 = vrot.lane.b32.xlu0 %v1218, 80
    %v1250 = vpop.permute.xlu0 %1249
    %1251 = vrot.lane.b32.xlu0 %v1220, 80
    %v1252 = vpop.permute.xlu0 %1251
    %vm1269 = vcmask 1045504
    %v1270 = vrot.slane %v1152, 2
    %v1271 = vrot.slane %v1153, 2
    %v1272 = vsel %vm1269, %v1270, %v1271
    %v1273 = vrot.slane %v1154, 2
    %v1274 = vsel %vm1269, %v1271, %v1273
    %v1275 = vrot.slane %v1155, 2
    %v1276 = vsel %vm1269, %v1273, %v1275
    %v1277 = vrot.slane %v1156, 2
    %v1278 = vsel %vm1269, %v1275, %v1277
    %v1279 = vrot.slane %v1157, 2
    %v1280 = vsel %vm1269, %v1277, %v1279
    %v1281 = vrot.slane %v1158, 2
    %v1282 = vsel %vm1269, %v1279, %v1281
    %v1283 = vrot.slane %v1159, 2
    %v1284 = vsel %vm1269, %v1281, %v1283
    %v1285 = vrot.slane %v1160, 2
    %v1286 = vsel %vm1269, %v1283, %v1285
    %v1287 = vrot.slane %v1161, 2
    %v1288 = vsel %vm1269, %v1285, %v1287
    %v1289 = vrot.slane %v1162, 2
    %v1290 = vsel %vm1269, %v1287, %v1289
    %v1291 = vrot.slane %v1163, 2
    %v1292 = vsel %vm1269, %v1289, %v1291
    %v1293 = vrot.slane %v1164, 2
    %v1294 = vsel %vm1269, %v1291, %v1293
    %v1295 = vrot.slane %v1165, 2
    %v1296 = vsel %vm1269, %v1293, %v1295
    %v1297 = vrot.slane %v1166, 2
    %v1298 = vsel %vm1269, %v1295, %v1297
    %v1299 = vrot.slane %v1167, 2
    %v1300 = vsel %vm1269, %v1297, %v1299
    %v1301 = vrot.slane %v1168, 2
    %v1302 = vsel %vm1269, %v1299, %v1301
    %1303 = vrot.lane.b32.xlu0 %v1272, 32
    %v1304 = vpop.permute.xlu0 %1303
    %1305 = vrot.lane.b32.xlu0 %v1274, 32
    %v1306 = vpop.permute.xlu0 %1305
    %1307 = vrot.lane.b32.xlu0 %v1276, 32
    %v1308 = vpop.permute.xlu0 %1307
    %1309 = vrot.lane.b32.xlu0 %v1278, 32
    %v1310 = vpop.permute.xlu0 %1309
    %1311 = vrot.lane.b32.xlu0 %v1280, 32
    %v1312 = vpop.permute.xlu0 %1311
    %1313 = vrot.lane.b32.xlu0 %v1282, 32
    %v1314 = vpop.permute.xlu0 %1313
    %1315 = vrot.lane.b32.xlu0 %v1284, 32
    %v1316 = vpop.permute.xlu0 %1315
    %1317 = vrot.lane.b32.xlu0 %v1286, 32
    %v1318 = vpop.permute.xlu0 %1317
    %1319 = vrot.lane.b32.xlu0 %v1288, 32
    %v1320 = vpop.permute.xlu0 %1319
    %1321 = vrot.lane.b32.xlu0 %v1290, 32
    %v1322 = vpop.permute.xlu0 %1321
    %1323 = vrot.lane.b32.xlu0 %v1292, 32
    %v1324 = vpop.permute.xlu0 %1323
    %1325 = vrot.lane.b32.xlu0 %v1294, 32
    %v1326 = vpop.permute.xlu0 %1325
    %1327 = vrot.lane.b32.xlu0 %v1296, 32
    %v1328 = vpop.permute.xlu0 %1327
    %1329 = vrot.lane.b32.xlu0 %v1298, 32
    %v1330 = vpop.permute.xlu0 %1329
    %1331 = vrot.lane.b32.xlu0 %v1300, 32
    %v1332 = vpop.permute.xlu0 %1331
    %1333 = vrot.lane.b32.xlu0 %v1302, 32
    %v1334 = vpop.permute.xlu0 %1333
    %1351 = vrot.lane.b32.xlu0 %v1153, 112
    %v1352 = vpop.permute.xlu0 %1351
    %1353 = vrot.lane.b32.xlu0 %v1154, 112
    %v1354 = vpop.permute.xlu0 %1353
    %1355 = vrot.lane.b32.xlu0 %v1155, 112
    %v1356 = vpop.permute.xlu0 %1355
    %1357 = vrot.lane.b32.xlu0 %v1156, 112
    %v1358 = vpop.permute.xlu0 %1357
    %1359 = vrot.lane.b32.xlu0 %v1157, 112
    %v1360 = vpop.permute.xlu0 %1359
    %1361 = vrot.lane.b32.xlu0 %v1158, 112
    %v1362 = vpop.permute.xlu0 %1361
    %1363 = vrot.lane.b32.xlu0 %v1159, 112
    %v1364 = vpop.permute.xlu0 %1363
    %1365 = vrot.lane.b32.xlu0 %v1160, 112
    %v1366 = vpop.permute.xlu0 %1365
    %1367 = vrot.lane.b32.xlu0 %v1161, 112
    %v1368 = vpop.permute.xlu0 %1367
    %1369 = vrot.lane.b32.xlu0 %v1162, 112
    %v1370 = vpop.permute.xlu0 %1369
    %1371 = vrot.lane.b32.xlu0 %v1163, 112
    %v1372 = vpop.permute.xlu0 %1371
    %1373 = vrot.lane.b32.xlu0 %v1164, 112
    %v1374 = vpop.permute.xlu0 %1373
    %1375 = vrot.lane.b32.xlu0 %v1165, 112
    %v1376 = vpop.permute.xlu0 %1375
    %1377 = vrot.lane.b32.xlu0 %v1166, 112
    %v1378 = vpop.permute.xlu0 %1377
    %1379 = vrot.lane.b32.xlu0 %v1167, 112
    %v1380 = vpop.permute.xlu0 %1379
    %1381 = vrot.lane.b32.xlu0 %v1168, 112
    %v1382 = vpop.permute.xlu0 %1381
    %v1400 = vrot.slane %v1169, 1
    %v1401 = vsel %vm57, %v1219, %v1400
    %1402 = vrot.lane.b32.xlu0 %v1192, 64
    %v1403 = vpop.permute.xlu0 %1402
    %1404 = vrot.lane.b32.xlu0 %v1194, 64
    %v1405 = vpop.permute.xlu0 %1404
    %1406 = vrot.lane.b32.xlu0 %v1196, 64
    %v1407 = vpop.permute.xlu0 %1406
    %1408 = vrot.lane.b32.xlu0 %v1198, 64
    %v1409 = vpop.permute.xlu0 %1408
    %1410 = vrot.lane.b32.xlu0 %v1200, 64
    %v1411 = vpop.permute.xlu0 %1410
    %1412 = vrot.lane.b32.xlu0 %v1202, 64
    %v1413 = vpop.permute.xlu0 %1412
    %1414 = vrot.lane.b32.xlu0 %v1204, 64
    %v1415 = vpop.permute.xlu0 %1414
    %1416 = vrot.lane.b32.xlu0 %v1206, 64
    %v1417 = vpop.permute.xlu0 %1416
    %1418 = vrot.lane.b32.xlu0 %v1208, 64
    %v1419 = vpop.permute.xlu0 %1418
    %1420 = vrot.lane.b32.xlu0 %v1210, 64
    %v1421 = vpop.permute.xlu0 %1420
    %1422 = vrot.lane.b32.xlu0 %v1212, 64
    %v1423 = vpop.permute.xlu0 %1422
    %1424 = vrot.lane.b32.xlu0 %v1214, 64
    %v1425 = vpop.permute.xlu0 %1424
    %1426 = vrot.lane.b32.xlu0 %v1216, 64
    %v1427 = vpop.permute.xlu0 %1426
    %1428 = vrot.lane.b32.xlu0 %v1218, 64
    %v1429 = vpop.permute.xlu0 %1428
    %1430 = vrot.lane.b32.xlu0 %v1220, 64
    %v1431 = vpop.permute.xlu0 %1430
    %1432 = vrot.lane.b32.xlu0 %v1401, 64
    %v1433 = vpop.permute.xlu0 %1432
    %v1450 = vrot.slane %v1169, 2
    %v1451 = vsel %vm1269, %v1301, %v1450
    %1452 = vrot.lane.b32.xlu0 %v1274, 16
    %v1453 = vpop.permute.xlu0 %1452
    %1454 = vrot.lane.b32.xlu0 %v1276, 16
    %v1455 = vpop.permute.xlu0 %1454
    %1456 = vrot.lane.b32.xlu0 %v1278, 16
    %v1457 = vpop.permute.xlu0 %1456
    %1458 = vrot.lane.b32.xlu0 %v1280, 16
    %v1459 = vpop.permute.xlu0 %1458
    %1460 = vrot.lane.b32.xlu0 %v1282, 16
    %v1461 = vpop.permute.xlu0 %1460
    %1462 = vrot.lane.b32.xlu0 %v1284, 16
    %v1463 = vpop.permute.xlu0 %1462
    %1464 = vrot.lane.b32.xlu0 %v1286, 16
    %v1465 = vpop.permute.xlu0 %1464
    %1466 = vrot.lane.b32.xlu0 %v1288, 16
    %v1467 = vpop.permute.xlu0 %1466
    %1468 = vrot.lane.b32.xlu0 %v1290, 16
    %v1469 = vpop.permute.xlu0 %1468
    %1470 = vrot.lane.b32.xlu0 %v1292, 16
    %v1471 = vpop.permute.xlu0 %1470
    %1472 = vrot.lane.b32.xlu0 %v1294, 16
    %v1473 = vpop.permute.xlu0 %1472
    %1474 = vrot.lane.b32.xlu0 %v1296, 16
    %v1475 = vpop.permute.xlu0 %1474
    %1476 = vrot.lane.b32.xlu0 %v1298, 16
    %v1477 = vpop.permute.xlu0 %1476
    %1478 = vrot.lane.b32.xlu0 %v1300, 16
    %v1479 = vpop.permute.xlu0 %1478
    %1480 = vrot.lane.b32.xlu0 %v1302, 16
    %v1481 = vpop.permute.xlu0 %1480
    %1482 = vrot.lane.b32.xlu0 %v1451, 16
    %v1483 = vpop.permute.xlu0 %1482
    %1500 = vrot.lane.b32.xlu0 %v1154, 96
    %v1501 = vpop.permute.xlu0 %1500
    %1502 = vrot.lane.b32.xlu0 %v1155, 96
    %v1503 = vpop.permute.xlu0 %1502
    %1504 = vrot.lane.b32.xlu0 %v1156, 96
    %v1505 = vpop.permute.xlu0 %1504
    %1506 = vrot.lane.b32.xlu0 %v1157, 96
    %v1507 = vpop.permute.xlu0 %1506
    %1508 = vrot.lane.b32.xlu0 %v1158, 96
    %v1509 = vpop.permute.xlu0 %1508
    %1510 = vrot.lane.b32.xlu0 %v1159, 96
    %v1511 = vpop.permute.xlu0 %1510
    %1512 = vrot.lane.b32.xlu0 %v1160, 96
    %v1513 = vpop.permute.xlu0 %1512
    %1514 = vrot.lane.b32.xlu0 %v1161, 96
    %v1515 = vpop.permute.xlu0 %1514
    %1516 = vrot.lane.b32.xlu0 %v1162, 96
    %v1517 = vpop.permute.xlu0 %1516
    %1518 = vrot.lane.b32.xlu0 %v1163, 96
    %v1519 = vpop.permute.xlu0 %1518
    %1520 = vrot.lane.b32.xlu0 %v1164, 96
    %v1521 = vpop.permute.xlu0 %1520
    %1522 = vrot.lane.b32.xlu0 %v1165, 96
    %v1523 = vpop.permute.xlu0 %1522
    %1524 = vrot.lane.b32.xlu0 %v1166, 96
    %v1525 = vpop.permute.xlu0 %1524
    %1526 = vrot.lane.b32.xlu0 %v1167, 96
    %v1527 = vpop.permute.xlu0 %1526
    %1528 = vrot.lane.b32.xlu0 %v1168, 96
    %v1529 = vpop.permute.xlu0 %1528
    %1530 = vrot.lane.b32.xlu0 %v1169, 96
    %v1531 = vpop.permute.xlu0 %1530
    %v1549 = vrot.slane %v1170, 1
    %v1550 = vsel %vm57, %v1400, %v1549
    %1551 = vrot.lane.b32.xlu0 %v1194, 48
    %v1552 = vpop.permute.xlu0 %1551
    %1553 = vrot.lane.b32.xlu0 %v1196, 48
    %v1554 = vpop.permute.xlu0 %1553
    %1555 = vrot.lane.b32.xlu0 %v1198, 48
    %v1556 = vpop.permute.xlu0 %1555
    %1557 = vrot.lane.b32.xlu0 %v1200, 48
    %v1558 = vpop.permute.xlu0 %1557
    %1559 = vrot.lane.b32.xlu0 %v1202, 48
    %v1560 = vpop.permute.xlu0 %1559
    %1561 = vrot.lane.b32.xlu0 %v1204, 48
    %v1562 = vpop.permute.xlu0 %1561
    %1563 = vrot.lane.b32.xlu0 %v1206, 48
    %v1564 = vpop.permute.xlu0 %1563
    %1565 = vrot.lane.b32.xlu0 %v1208, 48
    %v1566 = vpop.permute.xlu0 %1565
    %1567 = vrot.lane.b32.xlu0 %v1210, 48
    %v1568 = vpop.permute.xlu0 %1567
    %1569 = vrot.lane.b32.xlu0 %v1212, 48
    %v1570 = vpop.permute.xlu0 %1569
    %1571 = vrot.lane.b32.xlu0 %v1214, 48
    %v1572 = vpop.permute.xlu0 %1571
    %1573 = vrot.lane.b32.xlu0 %v1216, 48
    %v1574 = vpop.permute.xlu0 %1573
    %1575 = vrot.lane.b32.xlu0 %v1218, 48
    %v1576 = vpop.permute.xlu0 %1575
    %1577 = vrot.lane.b32.xlu0 %v1220, 48
    %v1578 = vpop.permute.xlu0 %1577
    %1579 = vrot.lane.b32.xlu0 %v1401, 48
    %v1580 = vpop.permute.xlu0 %1579
    %1581 = vrot.lane.b32.xlu0 %v1550, 48
    %v1582 = vpop.permute.xlu0 %1581
    %v1599 = vrot.slane %v1170, 2
    %v1600 = vsel %vm1269, %v1450, %v1599
    %vm1617 = vcmask 654336
    %v1618 = vsel %vm1617, %v1152, %v1222
    %v1619 = vsel %vm1617, %v1153, %v1224
    %v1620 = vsel %vm1617, %v1154, %v1226
    %v1621 = vsel %vm1617, %v1155, %v1228
    %v1622 = vsel %vm1617, %v1156, %v1230
    %v1623 = vsel %vm1617, %v1157, %v1232
    %v1624 = vsel %vm1617, %v1158, %v1234
    %v1625 = vsel %vm1617, %v1159, %v1236
    %v1626 = vsel %vm1617, %v1160, %v1238
    %v1627 = vsel %vm1617, %v1161, %v1240
    %v1628 = vsel %vm1617, %v1162, %v1242
    %v1629 = vsel %vm1617, %v1163, %v1244
    %v1630 = vsel %vm1617, %v1164, %v1246
    %v1631 = vsel %vm1617, %v1165, %v1248
    %v1632 = vsel %vm1617, %v1166, %v1250
    %v1633 = vsel %vm1617, %v1167, %v1252
    %v1634 = vsel %vm291, %v1222, %v1304
    %v1635 = vsel %vm291, %v1224, %v1306
    %v1636 = vsel %vm291, %v1226, %v1308
    %v1637 = vsel %vm291, %v1228, %v1310
    %v1638 = vsel %vm291, %v1230, %v1312
    %v1639 = vsel %vm291, %v1232, %v1314
    %v1640 = vsel %vm291, %v1234, %v1316
    %v1641 = vsel %vm291, %v1236, %v1318
    %v1642 = vsel %vm291, %v1238, %v1320
    %v1643 = vsel %vm291, %v1240, %v1322
    %v1644 = vsel %vm291, %v1242, %v1324
    %v1645 = vsel %vm291, %v1244, %v1326
    %v1646 = vsel %vm291, %v1246, %v1328
    %v1647 = vsel %vm291, %v1248, %v1330
    %v1648 = vsel %vm291, %v1250, %v1332
    %v1649 = vsel %vm291, %v1252, %v1334
    %vm1650 = vcmask 916480
    %v1651 = vsel %vm1650, %v1634, %v1352
    %v1652 = vsel %vm1650, %v1635, %v1354
    %v1653 = vsel %vm1650, %v1636, %v1356
    %v1654 = vsel %vm1650, %v1637, %v1358
    %v1655 = vsel %vm1650, %v1638, %v1360
    %v1656 = vsel %vm1650, %v1639, %v1362
    %v1657 = vsel %vm1650, %v1640, %v1364
    %v1658 = vsel %vm1650, %v1641, %v1366
    %v1659 = vsel %vm1650, %v1642, %v1368
    %v1660 = vsel %vm1650, %v1643, %v1370
    %v1661 = vsel %vm1650, %v1644, %v1372
    %v1662 = vsel %vm1650, %v1645, %v1374
    %v1663 = vsel %vm1650, %v1646, %v1376
    %v1664 = vsel %vm1650, %v1647, %v1378
    %v1665 = vsel %vm1650, %v1648, %v1380
    %v1666 = vsel %vm1650, %v1649, %v1382
    %v1667 = vsel %vm355, %v1352, %v1403
    %v1668 = vsel %vm355, %v1354, %v1405
    %v1669 = vsel %vm355, %v1356, %v1407
    %v1670 = vsel %vm355, %v1358, %v1409
    %v1671 = vsel %vm355, %v1360, %v1411
    %v1672 = vsel %vm355, %v1362, %v1413
    %v1673 = vsel %vm355, %v1364, %v1415
    %v1674 = vsel %vm355, %v1366, %v1417
    %v1675 = vsel %vm355, %v1368, %v1419
    %v1676 = vsel %vm355, %v1370, %v1421
    %v1677 = vsel %vm355, %v1372, %v1423
    %v1678 = vsel %vm355, %v1374, %v1425
    %v1679 = vsel %vm355, %v1376, %v1427
    %v1680 = vsel %vm355, %v1378, %v1429
    %v1681 = vsel %vm355, %v1380, %v1431
    %v1682 = vsel %vm355, %v1382, %v1433
    %v1683 = vsel %vm271, %v1403, %v1453
    %v1684 = vsel %vm271, %v1405, %v1455
    %v1685 = vsel %vm271, %v1407, %v1457
    %v1686 = vsel %vm271, %v1409, %v1459
    %v1687 = vsel %vm271, %v1411, %v1461
    %v1688 = vsel %vm271, %v1413, %v1463
    %v1689 = vsel %vm271, %v1415, %v1465
    %v1690 = vsel %vm271, %v1417, %v1467
    %v1691 = vsel %vm271, %v1419, %v1469
    %v1692 = vsel %vm271, %v1421, %v1471
    %v1693 = vsel %vm271, %v1423, %v1473
    %v1694 = vsel %vm271, %v1425, %v1475
    %v1695 = vsel %vm271, %v1427, %v1477
    %v1696 = vsel %vm271, %v1429, %v1479
    %v1697 = vsel %vm271, %v1431, %v1481
    %v1698 = vsel %vm271, %v1433, %v1483
    %vm1699 = vcmask 785408
    %v1700 = vsel %vm1699, %v1683, %v1501
    %v1701 = vsel %vm1699, %v1684, %v1503
    %v1702 = vsel %vm1699, %v1685, %v1505
    %v1703 = vsel %vm1699, %v1686, %v1507
    %v1704 = vsel %vm1699, %v1687, %v1509
    %v1705 = vsel %vm1699, %v1688, %v1511
    %v1706 = vsel %vm1699, %v1689, %v1513
    %v1707 = vsel %vm1699, %v1690, %v1515
    %v1708 = vsel %vm1699, %v1691, %v1517
    %v1709 = vsel %vm1699, %v1692, %v1519
    %v1710 = vsel %vm1699, %v1693, %v1521
    %v1711 = vsel %vm1699, %v1694, %v1523
    %v1712 = vsel %vm1699, %v1695, %v1525
    %v1713 = vsel %vm1699, %v1696, %v1527
    %v1714 = vsel %vm1699, %v1697, %v1529
    %v1715 = vsel %vm1699, %v1698, %v1531
    %v1716 = vsel %vm311, %v1501, %v1552
    %v1717 = vsel %vm311, %v1503, %v1554
    %v1718 = vsel %vm311, %v1505, %v1556
    %v1719 = vsel %vm311, %v1507, %v1558
    %v1720 = vsel %vm311, %v1509, %v1560
    %v1721 = vsel %vm311, %v1511, %v1562
    %v1722 = vsel %vm311, %v1513, %v1564
    %v1723 = vsel %vm311, %v1515, %v1566
    %v1724 = vsel %vm311, %v1517, %v1568
    %v1725 = vsel %vm311, %v1519, %v1570
    %v1726 = vsel %vm311, %v1521, %v1572
    %v1727 = vsel %vm311, %v1523, %v1574
    %v1728 = vsel %vm311, %v1525, %v1576
    %v1729 = vsel %vm311, %v1527, %v1578
    %v1730 = vsel %vm311, %v1529, %v1580
    %v1731 = vsel %vm311, %v1531, %v1582
    %v1732 = vld [vmem:[%s2] sm:$0xff]
    %v1733 = vld [vmem:[%s2 + $0x8] sm:$0xff]
    %v1734 = vld [vmem:[%s2 + $0x10] sm:$0xff]
    %v1735 = vld [vmem:[%s2 + $0x18] sm:$0xff]
    %v1736 = vld [vmem:[%s2 + $0x20] sm:$0xff]
    %v1737 = vld [vmem:[%s2 + $0x28] sm:$0xff]
    %v1738 = vld [vmem:[%s2 + $0x30] sm:$0xff]
    %v1739 = vld [vmem:[%s2 + $0x38] sm:$0xff]
    %v1740 = vld [vmem:[%s2 + $0x40] sm:$0xff]
    %v1741 = vld [vmem:[%s2 + $0x48] sm:$0xff]
    %v1742 = vld [vmem:[%s2 + $0x50] sm:$0xff]
    %v1743 = vld [vmem:[%s2 + $0x58] sm:$0xff]
    %v1744 = vld [vmem:[%s2 + $0x60] sm:$0xff]
    %v1745 = vld [vmem:[%s2 + $0x68] sm:$0xff]
    %v1746 = vld [vmem:[%s2 + $0x70] sm:$0xff]
    %v1747 = vld [vmem:[%s2 + $0x78] sm:$0xff]
    %v1748 = vld [vmem:[%s2 + $0x80] sm:$0xff]
    %v1749 = vld [vmem:[%s2 + $0x88] sm:$0xff]
    %v1750 = vld [vmem:[%s2 + $0x90] sm:$0xff]
    %v1751 = vld [vmem:[%s2 + $0x98] sm:$0xff]
    %v1752 = vld [vmem:[%s2 + $0xa0] sm:$0xff]
    %v1753 = vld [vmem:[%s2 + $0xa8] sm:$0xff]
    %v1754 = vld [vmem:[%s2 + $0xb0] sm:$0xff]
    %v1755 = vld [vmem:[%s2 + $0xb8] sm:$0xff]
    %v1756 = vld [vmem:[%s2 + $0xc0] sm:$0xff]
    %v1757 = vld [vmem:[%s2 + $0xc8] sm:$0xff]
    %v1758 = vld [vmem:[%s2 + $0xd0] sm:$0xff]
    %v1759 = vld [vmem:[%s2 + $0xd8] sm:$0xff]
    %v1760 = vld [vmem:[%s2 + $0xe0] sm:$0xff]
    %v1761 = vld [vmem:[%s2 + $0xe8] sm:$0xff]
    %v1762 = vld [vmem:[%s2 + $0xf0] sm:$0xff]
    %v1763 = vld [vmem:[%s2 + $0xf8] sm:$0xff]
    %v1764 = vld [vmem:[%s2 + $0x100] sm:$0xff]
    %v1765 = vld [vmem:[%s2 + $0x108] sm:$0xff]
    %v1766 = vld [vmem:[%s2 + $0x110] sm:$0xff]
    %v1767 = vld [vmem:[%s2 + $0x118] sm:$0xff]
    %v1768 = vld [vmem:[%s2 + $0x120] sm:$0xff]
    %v1769 = vld [vmem:[%s2 + $0x128] sm:$0xff]
    %v1770 = vld [vmem:[%s2 + $0x130] sm:$0xff]
    %v1771 = vld [vmem:[%s2 + $0x138] sm:$0xff]
    %v1772 = vld [vmem:[%s2 + $0x140] sm:$0xff]
    %v1773 = vld [vmem:[%s2 + $0x148] sm:$0xff]
    %v1774 = vld [vmem:[%s2 + $0x150] sm:$0xff]
    %v1775 = vld [vmem:[%s2 + $0x158] sm:$0xff]
    %v1776 = vld [vmem:[%s2 + $0x160] sm:$0xff]
    %v1777 = vld [vmem:[%s2 + $0x168] sm:$0xff]
    %v1778 = vld [vmem:[%s2 + $0x170] sm:$0xff]
    %v1779 = vld [vmem:[%s2 + $0x178] sm:$0xff]
    %v1780 = vld [vmem:[%s2 + $0x180] sm:$0xff]
    %v1781 = vld [vmem:[%s2 + $0x188] sm:$0xff]
    %v1782 = vld [vmem:[%s2 + $0x190] sm:$0xff]
    %v1783 = vld [vmem:[%s2 + $0x198] sm:$0xff]
    %v1784 = vld [vmem:[%s2 + $0x1a0] sm:$0xff]
    %v1785 = vld [vmem:[%s2 + $0x1a8] sm:$0xff]
    %v1786 = vld [vmem:[%s2 + $0x1b0] sm:$0xff]
    %v1787 = vld [vmem:[%s2 + $0x1b8] sm:$0xff]
    %v1788 = vld [vmem:[%s2 + $0x1c0] sm:$0xff]
    %v1789 = vld [vmem:[%s2 + $0x1c8] sm:$0xff]
    %v1790 = vld [vmem:[%s2 + $0x1d0] sm:$0xff]
    %v1791 = vld [vmem:[%s2 + $0x1d8] sm:$0xff]
    %v1792 = vld [vmem:[%s2 + $0x1e0] sm:$0xff]
    %v1793 = vld [vmem:[%s2 + $0x1e8] sm:$0xff]
    %v1794 = vld [vmem:[%s2 + $0x1f0] sm:$0xff]
    %v1795 = vld [vmem:[%s2 + $0x1f8] sm:$0xff]
    %v1796 = vld [vmem:[%s2 + $0x200] sm:$0xff]
    %v1797 = vld [vmem:[%s2 + $0x208] sm:$0xff]
    %v1798 = vld [vmem:[%s2 + $0x210] sm:$0xff]
    %v1799 = vld [vmem:[%s2 + $0x218] sm:$0xff]
    %v1800 = vld [vmem:[%s2 + $0x220] sm:$0xff]
    %v1801 = vld [vmem:[%s2 + $0x228] sm:$0xff]
    %v1802 = vld [vmem:[%s2 + $0x230] sm:$0xff]
    %v1803 = vld [vmem:[%s2 + $0x238] sm:$0xff]
    %v1804 = vld [vmem:[%s2 + $0x240] sm:$0xff]
    %v1805 = vld [vmem:[%s2 + $0x248] sm:$0xff]
    %v1806 = vld [vmem:[%s2 + $0x250] sm:$0xff]
    %v1807 = vld [vmem:[%s2 + $0x258] sm:$0xff]
    %v1808 = vld [vmem:[%s2 + $0x260] sm:$0xff]
    %v1809 = vld [vmem:[%s2 + $0x268] sm:$0xff]
    %v1810 = vld [vmem:[%s2 + $0x270] sm:$0xff]
    %v1811 = vld [vmem:[%s2 + $0x278] sm:$0xff]
    %v1812 = vld [vmem:[%s2 + $0x280] sm:$0xff]
    %v1813 = vld [vmem:[%s2 + $0x288] sm:$0xff]
    %v1814 = vld [vmem:[%s2 + $0x290] sm:$0xff]
    %v1815 = vld [vmem:[%s2 + $0x298] sm:$0xff]
    %v1816 = vld [vmem:[%s2 + $0x2a0] sm:$0xff]
    %v1817 = vld [vmem:[%s2 + $0x2a8] sm:$0xff]
    %v1818 = vld [vmem:[%s2 + $0x2b0] sm:$0xff]
    %v1819 = vld [vmem:[%s2 + $0x2b8] sm:$0xff]
    %v1820 = vld [vmem:[%s2 + $0x2c0] sm:$0xff]
    %v1821 = vld [vmem:[%s2 + $0x2c8] sm:$0xff]
    %v1822 = vpack.c.bf16 %v1619, %v1618
    %v1823 = vpack.c.bf16 %v1652, %v1651
    %v1824 = vpack.c.bf16 %v1668, %v1667
    %v1825 = vpack.c.bf16 %v1701, %v1700
    %v1826 = vpack.c.bf16 %v1717, %v1716
    %v1827 = vpack.c.bf16 %v1278, %v1276
    %v1828 = vpack.c.bf16 %v1621, %v1620
    %v1829 = vpack.c.bf16 %v1654, %v1653
    %v1830 = vpack.c.bf16 %v1670, %v1669
    %v1831 = vpack.c.bf16 %v1703, %v1702
    %v1832 = vpack.c.bf16 %v1719, %v1718
    %v1833 = vpack.c.bf16 %v1282, %v1280
    %v1834 = vpack.c.bf16 %v1623, %v1622
    %v1835 = vpack.c.bf16 %v1656, %v1655
    %v1836 = vpack.c.bf16 %v1672, %v1671
    %v1837 = vpack.c.bf16 %v1705, %v1704
    %v1838 = vpack.c.bf16 %v1721, %v1720
    %v1839 = vpack.c.bf16 %v1286, %v1284
    %v1840 = vpack.c.bf16 %v1625, %v1624
    %v1841 = vpack.c.bf16 %v1658, %v1657
    %v1842 = vpack.c.bf16 %v1674, %v1673
    %v1843 = vpack.c.bf16 %v1707, %v1706
    %v1844 = vpack.c.bf16 %v1723, %v1722
    %v1845 = vpack.c.bf16 %v1290, %v1288
    %v1846 = vpack.c.bf16 %v1627, %v1626
    %v1847 = vpack.c.bf16 %v1660, %v1659
    %v1848 = vpack.c.bf16 %v1676, %v1675
    %v1849 = vpack.c.bf16 %v1709, %v1708
    %v1850 = vpack.c.bf16 %v1725, %v1724
    %v1851 = vpack.c.bf16 %v1294, %v1292
    %v1852 = vpack.c.bf16 %v1629, %v1628
    %v1853 = vpack.c.bf16 %v1662, %v1661
    %v1854 = vpack.c.bf16 %v1678, %v1677
    %v1855 = vpack.c.bf16 %v1711, %v1710
    %v1856 = vpack.c.bf16 %v1727, %v1726
    %v1857 = vpack.c.bf16 %v1298, %v1296
    %v1858 = vpack.c.bf16 %v1631, %v1630
    %v1859 = vpack.c.bf16 %v1664, %v1663
    %v1860 = vpack.c.bf16 %v1680, %v1679
    %v1861 = vpack.c.bf16 %v1713, %v1712
    %v1862 = vpack.c.bf16 %v1729, %v1728
    %v1863 = vpack.c.bf16 %v1302, %v1300
    %v1864 = vpack.c.bf16 %v1633, %v1632
    %v1865 = vpack.c.bf16 %v1666, %v1665
    %v1866 = vpack.c.bf16 %v1682, %v1681
    %v1867 = vpack.c.bf16 %v1715, %v1714
    %v1868 = vpack.c.bf16 %v1731, %v1730
    %v1869 = vpack.c.bf16 %v1600, %v1451
    %v1960 = vunpack.c.l.b16 %v1732
    %v1961 = vunpack.c.h.b16 %v1732
    %v1962 = vunpack.c.l.b16 %v1733
    %v1963 = vunpack.c.h.b16 %v1733
    %v1964 = vunpack.c.l.b16 %v1734
    %v1965 = vunpack.c.h.b16 %v1734
    %v1966 = vunpack.c.l.b16 %v1735
    %v1967 = vunpack.c.h.b16 %v1735
    %v1968 = vunpack.c.l.b16 %v1736
    %v1969 = vunpack.c.h.b16 %v1736
    %v1970 = vunpack.c.l.b16 %v1737
    %v1971 = vunpack.c.h.b16 %v1737
    %v1972 = vunpack.c.l.b16 %v1738
    %v1973 = vunpack.c.h.b16 %v1738
    %v1974 = vunpack.c.l.b16 %v1739
    %v1975 = vunpack.c.h.b16 %v1739
    %v1976 = vunpack.c.l.b16 %v1740
    %v1977 = vunpack.c.h.b16 %v1740
    %v1978 = vunpack.c.l.b16 %v1741
    %v1979 = vunpack.c.h.b16 %v1741
    %v1980 = vunpack.c.l.b16 %v1742
    %v1981 = vunpack.c.h.b16 %v1742
    %v1982 = vunpack.c.l.b16 %v1743
    %v1983 = vunpack.c.h.b16 %v1743
    %v1984 = vunpack.c.l.b16 %v1744
    %v1985 = vunpack.c.h.b16 %v1744
    %v1986 = vunpack.c.l.b16 %v1745
    %v1987 = vunpack.c.h.b16 %v1745
    %v1988 = vunpack.c.l.b16 %v1746
    %v1989 = vunpack.c.h.b16 %v1746
    %v1990 = vunpack.c.l.b16 %v1747
    %v1991 = vunpack.c.h.b16 %v1747
    %v1992 = vunpack.c.l.b16 %v1748
    %v1993 = vunpack.c.h.b16 %v1748
    %v1994 = vunpack.c.l.b16 %v1749
    %v1995 = vunpack.c.h.b16 %v1749
    %v1996 = vunpack.c.l.b16 %v1750
    %v1997 = vunpack.c.h.b16 %v1750
    %v1998 = vunpack.c.l.b16 %v1751
    %v1999 = vunpack.c.h.b16 %v1751
    %v2000 = vunpack.c.l.b16 %v1752
    %v2001 = vunpack.c.h.b16 %v1752
    %v2002 = vunpack.c.l.b16 %v1753
    %v2003 = vunpack.c.h.b16 %v1753
    %v2004 = vunpack.c.l.b16 %v1754
    %v2005 = vunpack.c.h.b16 %v1754
    %v2006 = vunpack.c.l.b16 %v1755
    %v2007 = vunpack.c.h.b16 %v1755
    %v2008 = vunpack.c.l.b16 %v1756
    %v2009 = vunpack.c.h.b16 %v1756
    %v2010 = vunpack.c.l.b16 %v1757
    %v2011 = vunpack.c.h.b16 %v1757
    %v2012 = vunpack.c.l.b16 %v1758
    %v2013 = vunpack.c.h.b16 %v1758
    %v2014 = vunpack.c.l.b16 %v1759
    %v2015 = vunpack.c.h.b16 %v1759
    %v2016 = vunpack.c.l.b16 %v1760
    %v2017 = vunpack.c.h.b16 %v1760
    %v2018 = vunpack.c.l.b16 %v1761
    %v2019 = vunpack.c.h.b16 %v1761
    %v2020 = vunpack.c.l.b16 %v1762
    %v2021 = vunpack.c.h.b16 %v1762
    %v2022 = vunpack.c.l.b16 %v1763
    %v2023 = vunpack.c.h.b16 %v1763
    %v2024 = vunpack.c.l.b16 %v1764
    %v2025 = vunpack.c.h.b16 %v1764
    %v2026 = vunpack.c.l.b16 %v1765
    %v2027 = vunpack.c.h.b16 %v1765
    %v2028 = vunpack.c.l.b16 %v1766
    %v2029 = vunpack.c.h.b16 %v1766
    %v2030 = vunpack.c.l.b16 %v1767
    %v2031 = vunpack.c.h.b16 %v1767
    %v2032 = vunpack.c.l.b16 %v1768
    %v2033 = vunpack.c.h.b16 %v1768
    %v2034 = vunpack.c.l.b16 %v1769
    %v2035 = vunpack.c.h.b16 %v1769
    %v2036 = vunpack.c.l.b16 %v1770
    %v2037 = vunpack.c.h.b16 %v1770
    %v2038 = vunpack.c.l.b16 %v1771
    %v2039 = vunpack.c.h.b16 %v1771
    %v2040 = vunpack.c.l.b16 %v1772
    %v2041 = vunpack.c.h.b16 %v1772
    %v2042 = vunpack.c.l.b16 %v1773
    %v2043 = vunpack.c.h.b16 %v1773
    %v2044 = vunpack.c.l.b16 %v1774
    %v2045 = vunpack.c.h.b16 %v1774
    %v2046 = vunpack.c.l.b16 %v1775
    %v2047 = vunpack.c.h.b16 %v1775
    %v2048 = vunpack.c.l.b16 %v1776
    %v2049 = vunpack.c.h.b16 %v1776
    %v2050 = vunpack.c.l.b16 %v1777
    %v2051 = vunpack.c.h.b16 %v1777
    %v2052 = vunpack.c.l.b16 %v1778
    %v2053 = vunpack.c.h.b16 %v1778
    %v2054 = vunpack.c.l.b16 %v1779
    %v2055 = vunpack.c.h.b16 %v1779
    %v2056 = vunpack.c.l.b16 %v1780
    %v2057 = vunpack.c.h.b16 %v1780
    %v2058 = vunpack.c.l.b16 %v1781
    %v2059 = vunpack.c.h.b16 %v1781
    %v2060 = vunpack.c.l.b16 %v1782
    %v2061 = vunpack.c.h.b16 %v1782
    %v2062 = vunpack.c.l.b16 %v1783
    %v2063 = vunpack.c.h.b16 %v1783
    %v2064 = vunpack.c.l.b16 %v1784
    %v2065 = vunpack.c.h.b16 %v1784
    %v2066 = vunpack.c.l.b16 %v1785
    %v2067 = vunpack.c.h.b16 %v1785
    %v2068 = vunpack.c.l.b16 %v1786
    %v2069 = vunpack.c.h.b16 %v1786
    %v2070 = vunpack.c.l.b16 %v1787
    %v2071 = vunpack.c.h.b16 %v1787
    %v2072 = vunpack.c.l.b16 %v1788
    %v2073 = vunpack.c.h.b16 %v1788
    %v2074 = vunpack.c.l.b16 %v1789
    %v2075 = vunpack.c.h.b16 %v1789
    %v2076 = vunpack.c.l.b16 %v1790
    %v2077 = vunpack.c.h.b16 %v1790
    %v2078 = vunpack.c.l.b16 %v1791
    %v2079 = vunpack.c.h.b16 %v1791
    %v2080 = vunpack.c.l.b16 %v1792
    %v2081 = vunpack.c.h.b16 %v1792
    %v2082 = vunpack.c.l.b16 %v1793
    %v2083 = vunpack.c.h.b16 %v1793
    %v2084 = vunpack.c.l.b16 %v1794
    %v2085 = vunpack.c.h.b16 %v1794
    %v2086 = vunpack.c.l.b16 %v1795
    %v2087 = vunpack.c.h.b16 %v1795
    %v2088 = vunpack.c.l.b16 %v1796
    %v2089 = vunpack.c.h.b16 %v1796
    %v2090 = vunpack.c.l.b16 %v1797
    %v2091 = vunpack.c.h.b16 %v1797
    %v2092 = vunpack.c.l.b16 %v1798
    %v2093 = vunpack.c.h.b16 %v1798
    %v2094 = vunpack.c.l.b16 %v1799
    %v2095 = vunpack.c.h.b16 %v1799
    %v2096 = vunpack.c.l.b16 %v1800
    %v2097 = vunpack.c.h.b16 %v1800
    %v2098 = vunpack.c.l.b16 %v1801
    %v2099 = vunpack.c.h.b16 %v1801
    %v2100 = vunpack.c.l.b16 %v1802
    %v2101 = vunpack.c.h.b16 %v1802
    %v2102 = vunpack.c.l.b16 %v1803
    %v2103 = vunpack.c.h.b16 %v1803
    %v2104 = vunpack.c.l.b16 %v1804
    %v2105 = vunpack.c.h.b16 %v1804
    %v2106 = vunpack.c.l.b16 %v1805
    %v2107 = vunpack.c.h.b16 %v1805
    %v2108 = vunpack.c.l.b16 %v1806
    %v2109 = vunpack.c.h.b16 %v1806
    %v2110 = vunpack.c.l.b16 %v1807
    %v2111 = vunpack.c.h.b16 %v1807
    %v2112 = vunpack.c.l.b16 %v1808
    %v2113 = vunpack.c.h.b16 %v1808
    %v2114 = vunpack.c.l.b16 %v1809
    %v2115 = vunpack.c.h.b16 %v1809
    %v2116 = vunpack.c.l.b16 %v1810
    %v2117 = vunpack.c.h.b16 %v1810
    %v2118 = vunpack.c.l.b16 %v1811
    %v2119 = vunpack.c.h.b16 %v1811
    %v2120 = vunpack.c.l.b16 %v1812
    %v2121 = vunpack.c.h.b16 %v1812
    %v2122 = vunpack.c.l.b16 %v1813
    %v2123 = vunpack.c.h.b16 %v1813
    %v2124 = vunpack.c.l.b16 %v1814
    %v2125 = vunpack.c.h.b16 %v1814
    %v2126 = vunpack.c.l.b16 %v1815
    %v2127 = vunpack.c.h.b16 %v1815
    %v2128 = vunpack.c.l.b16 %v1816
    %v2129 = vunpack.c.h.b16 %v1816
    %v2130 = vunpack.c.l.b16 %v1817
    %v2131 = vunpack.c.h.b16 %v1817
    %v2132 = vunpack.c.l.b16 %v1818
    %v2133 = vunpack.c.h.b16 %v1818
    %v2134 = vunpack.c.l.b16 %v1819
    %v2135 = vunpack.c.h.b16 %v1819
    %v2136 = vunpack.c.l.b16 %v1820
    %v2137 = vunpack.c.h.b16 %v1820
    %v2138 = vunpack.c.l.b16 %v1821
    %v2139 = vunpack.c.h.b16 %v1821
    %v2140 = vpack.c.b16 %v1962, %v1960
    %v2141 = vpack.c.b16 %v1963, %v1961
    %v2142 = vpack.c.b16 %v1966, %v1964
    %v2143 = vpack.c.b16 %v1967, %v1965
    %v2144 = vpack.c.b16 %v1970, %v1968
    %v2145 = vpack.c.b16 %v1971, %v1969
    %v2146 = vpack.c.b16 %v1974, %v1972
    %v2147 = vpack.c.b16 %v1975, %v1973
    %v2148 = vpack.c.b16 %v1978, %v1976
    %v2149 = vpack.c.b16 %v1979, %v1977
    %v2150 = vpack.c.b16 %v1982, %v1980
    %v2151 = vpack.c.b16 %v1983, %v1981
    %v2152 = vpack.c.b16 %v1986, %v1984
    %v2153 = vpack.c.b16 %v1987, %v1985
    %v2154 = vpack.c.b16 %v1990, %v1988
    %v2155 = vpack.c.b16 %v1991, %v1989
    %v2156 = vpack.c.b16 %v1994, %v1992
    %v2157 = vpack.c.b16 %v1995, %v1993
    %v2158 = vpack.c.b16 %v1998, %v1996
    %v2159 = vpack.c.b16 %v1999, %v1997
    %v2160 = vpack.c.b16 %v2002, %v2000
    %v2161 = vpack.c.b16 %v2003, %v2001
    %v2162 = vpack.c.b16 %v2006, %v2004
    %v2163 = vpack.c.b16 %v2007, %v2005
    %v2164 = vpack.c.b16 %v2010, %v2008
    %v2165 = vpack.c.b16 %v2011, %v2009
    %v2166 = vpack.c.b16 %v2014, %v2012
    %v2167 = vpack.c.b16 %v2015, %v2013
    %v2168 = vpack.c.b16 %v2018, %v2016
    %v2169 = vpack.c.b16 %v2019, %v2017
    %v2170 = vpack.c.b16 %v2022, %v2020
    %v2171 = vpack.c.b16 %v2023, %v2021
    %v2172 = vpack.c.b16 %v2026, %v2024
    %v2173 = vpack.c.b16 %v2027, %v2025
    %v2174 = vpack.c.b16 %v2030, %v2028
    %v2175 = vpack.c.b16 %v2031, %v2029
    %v2176 = vpack.c.b16 %v2034, %v2032
    %v2177 = vpack.c.b16 %v2035, %v2033
    %v2178 = vpack.c.b16 %v2038, %v2036
    %v2179 = vpack.c.b16 %v2039, %v2037
    %v2180 = vpack.c.b16 %v2042, %v2040
    %v2181 = vpack.c.b16 %v2043, %v2041
    %v2182 = vpack.c.b16 %v2046, %v2044
    %v2183 = vpack.c.b16 %v2047, %v2045
    %v2184 = vpack.c.b16 %v2050, %v2048
    %v2185 = vpack.c.b16 %v2051, %v2049
    %v2186 = vpack.c.b16 %v2054, %v2052
    %v2187 = vpack.c.b16 %v2055, %v2053
    %v2188 = vpack.c.b16 %v2058, %v2056
    %v2189 = vpack.c.b16 %v2059, %v2057
    %v2190 = vpack.c.b16 %v2062, %v2060
    %v2191 = vpack.c.b16 %v2063, %v2061
    %v2192 = vpack.c.b16 %v2066, %v2064
    %v2193 = vpack.c.b16 %v2067, %v2065
    %v2194 = vpack.c.b16 %v2070, %v2068
    %v2195 = vpack.c.b16 %v2071, %v2069
    %v2196 = vpack.c.b16 %v2074, %v2072
    %v2197 = vpack.c.b16 %v2075, %v2073
    %v2198 = vpack.c.b16 %v2078, %v2076
    %v2199 = vpack.c.b16 %v2079, %v2077
    %v2200 = vpack.c.b16 %v2082, %v2080
    %v2201 = vpack.c.b16 %v2083, %v2081
    %v2202 = vpack.c.b16 %v2086, %v2084
    %v2203 = vpack.c.b16 %v2087, %v2085
    %v2204 = vpack.c.b16 %v2090, %v2088
    %v2205 = vpack.c.b16 %v2091, %v2089
    %v2206 = vpack.c.b16 %v2094, %v2092
    %v2207 = vpack.c.b16 %v2095, %v2093
    %v2208 = vpack.c.b16 %v2098, %v2096
    %v2209 = vpack.c.b16 %v2099, %v2097
    %v2210 = vpack.c.b16 %v2102, %v2100
    %v2211 = vpack.c.b16 %v2103, %v2101
    %v2212 = vpack.c.b16 %v2106, %v2104
    %v2213 = vpack.c.b16 %v2107, %v2105
    %v2214 = vpack.c.b16 %v2110, %v2108
    %v2215 = vpack.c.b16 %v2111, %v2109
    %v2216 = vpack.c.b16 %v2114, %v2112
    %v2217 = vpack.c.b16 %v2115, %v2113
    %v2218 = vpack.c.b16 %v2118, %v2116
    %v2219 = vpack.c.b16 %v2119, %v2117
    %v2220 = vpack.c.b16 %v2122, %v2120
    %v2221 = vpack.c.b16 %v2123, %v2121
    %v2222 = vpack.c.b16 %v2126, %v2124
    %v2223 = vpack.c.b16 %v2127, %v2125
    %v2224 = vpack.c.b16 %v2130, %v2128
    %v2225 = vpack.c.b16 %v2131, %v2129
    %v2226 = vpack.c.b16 %v2134, %v2132
    %v2227 = vpack.c.b16 %v2135, %v2133
    %v2228 = vpack.c.b16 %v2138, %v2136
    %v2229 = vpack.c.b16 %v2139, %v2137
    %v2321 = vsel %vm1617, %v1827, 0
    %v2324 = vsel %vm1617, %v1833, 0
    %v2327 = vsel %vm1617, %v1839, 0
    %v2330 = vsel %vm1617, %v1845, 0
    %v2333 = vsel %vm1617, %v1851, 0
    %v2336 = vsel %vm1617, %v1857, 0
    %v2339 = vsel %vm1617, %v1863, 0
    %v2342 = vsel %vm1617, %v1869, 0
    %2344 = vmatprep.subr.bf16.mxu0 %v2141
    %2345 = vmatpush1.bf16.msra.mxu0 %v2140
    %2346 = vmatprep.subr.bf16.mxu0 %v2143
    %2347 = vmatpush1.bf16.msra.mxu0 %v2142
    %2348 = vmatprep.subr.bf16.mxu0 %v2145
    %2349 = vmatpush1.bf16.msra.mxu0 %v2144
    %2350 = vmatprep.subr.bf16.mxu0 %v2147
    %2351 = vmatpush1.bf16.msra.mxu0 %v2146
    %2352 = vmatprep.subr.bf16.mxu0 %v2149
    %2353 = vmatpush1.bf16.msra.mxu0 %v2148
    %2354 = vmatprep.subr.bf16.mxu0 %v2151
    %2355 = vmatpush1.bf16.msra.mxu0 %v2150
    %2356 = vmatprep.subr.bf16.mxu0 %v2153
    %2357 = vmatpush1.bf16.msra.mxu0 %v2152
    %2358 = vmatprep.subr.bf16.mxu0 %v2155
    %2359 = vmatpush1.bf16.msra.mxu0 %v2154
    %2360 = vmatprep.subr.bf16.mxu0 %v2157
    %2361 = vmatpush1.bf16.msra.mxu0 %v2156
    %2362 = vmatprep.subr.bf16.mxu0 %v2159
    %2363 = vmatpush1.bf16.msra.mxu0 %v2158
    %2364 = vmatprep.subr.bf16.mxu0 %v2161
    %2365 = vmatpush1.bf16.msra.mxu0 %v2160
    %2366 = vmatprep.subr.bf16.mxu0 %v2163
    %2367 = vmatpush1.bf16.msra.mxu0 %v2162
    %2368 = vmatprep.subr.bf16.mxu0 %v2165
    %2369 = vmatpush1.bf16.msra.mxu0 %v2164
    %2370 = vmatprep.subr.bf16.mxu0 %v2167
    %2371 = vmatpush1.bf16.msra.mxu0 %v2166
    %2372 = vmatprep.subr.bf16.mxu0 %v2169
    %2373 = vmatpush1.bf16.msra.mxu0 %v2168
    %2374 = vmatprep.subr.bf16.mxu0 %v2171
    %2375 = vmatpush1.bf16.msra.mxu0 %v2170
    %2376 = vmatprep.mubr.bf16.mxu0 %v1823
    %2377 = vmatmul.mubr.bf16.gmra.mrb[0].mxu0 %v1822
    %v2378 = vpop.f32.mrb[0].mxu0
    %v2379 = vadd.f32 0.0, %v2378
    %v2380 = vpop.f32.mrb[0].mxu0
    %v2381 = vadd.f32 0.0, %v2380
    %v2382 = vpop.f32.mrb[0].mxu0
    %v2383 = vadd.f32 0.0, %v2382
    %v2384 = vpop.f32.mrb[0].mxu0
    %v2385 = vadd.f32 0.0, %v2384
    %2386 = vmatprep.mubr.bf16.mxu0 %v1829
    %2387 = vmatmul.mubr.bf16.gmra.mrb[0].mxu0 %v1828
    %v2388 = vpop.f32.mrb[0].mxu0
    %v2389 = vadd.f32 0.0, %v2388
    %v2390 = vpop.f32.mrb[0].mxu0
    %v2391 = vadd.f32 0.0, %v2390
    %v2392 = vpop.f32.mrb[0].mxu0
    %v2393 = vadd.f32 0.0, %v2392
    %v2394 = vpop.f32.mrb[0].mxu0
    %v2395 = vadd.f32 0.0, %v2394
    %2396 = vmatprep.mubr.bf16.mxu0 %v1835
    %2397 = vmatmul.mubr.bf16.gmra.mrb[0].mxu0 %v1834
    %v2398 = vpop.f32.mrb[0].mxu0
    %v2399 = vadd.f32 0.0, %v2398
    %v2400 = vpop.f32.mrb[0].mxu0
    %v2401 = vadd.f32 0.0, %v2400
    %v2402 = vpop.f32.mrb[0].mxu0
    %v2403 = vadd.f32 0.0, %v2402
    %v2404 = vpop.f32.mrb[0].mxu0
    %v2405 = vadd.f32 0.0, %v2404
    %2406 = vmatprep.mubr.bf16.mxu0 %v1841
    %2407 = vmatmul.mubr.bf16.gmra.mrb[0].mxu0 %v1840
    %v2408 = vpop.f32.mrb[0].mxu0
    %v2409 = vadd.f32 0.0, %v2408
    %v2410 = vpop.f32.mrb[0].mxu0
    %v2411 = vadd.f32 0.0, %v2410
    %v2412 = vpop.f32.mrb[0].mxu0
    %v2413 = vadd.f32 0.0, %v2412
    %v2414 = vpop.f32.mrb[0].mxu0
    %v2415 = vadd.f32 0.0, %v2414
    %2416 = vmatprep.mubr.bf16.mxu0 %v1847
    %2417 = vmatmul.mubr.bf16.gmra.mrb[0].mxu0 %v1846
    %v2418 = vpop.f32.mrb[0].mxu0
    %v2419 = vadd.f32 0.0, %v2418
    %v2420 = vpop.f32.mrb[0].mxu0
    %v2421 = vadd.f32 0.0, %v2420
    %v2422 = vpop.f32.mrb[0].mxu0
    %v2423 = vadd.f32 0.0, %v2422
    %v2424 = vpop.f32.mrb[0].mxu0
    %v2425 = vadd.f32 0.0, %v2424
    %2426 = vmatprep.mubr.bf16.mxu0 %v1853
    %2427 = vmatmul.mubr.bf16.gmra.mrb[0].mxu0 %v1852
    %v2428 = vpop.f32.mrb[0].mxu0
    %v2429 = vadd.f32 0.0, %v2428
    %v2430 = vpop.f32.mrb[0].mxu0
    %v2431 = vadd.f32 0.0, %v2430
    %v2432 = vpop.f32.mrb[0].mxu0
    %v2433 = vadd.f32 0.0, %v2432
    %v2434 = vpop.f32.mrb[0].mxu0
    %v2435 = vadd.f32 0.0, %v2434
    %2436 = vmatprep.mubr.bf16.mxu0 %v1859
    %2437 = vmatmul.mubr.bf16.gmra.mrb[0].mxu0 %v1858
    %v2438 = vpop.f32.mrb[0].mxu0
    %v2439 = vadd.f32 0.0, %v2438
    %v2440 = vpop.f32.mrb[0].mxu0
    %v2441 = vadd.f32 0.0, %v2440
    %v2442 = vpop.f32.mrb[0].mxu0
    %v2443 = vadd.f32 0.0, %v2442
    %v2444 = vpop.f32.mrb[0].mxu0
    %v2445 = vadd.f32 0.0, %v2444
    %2446 = vmatprep.mubr.bf16.mxu0 %v1865
    %2447 = vmatmul.mubr.bf16.gmra.mrb[0].mxu0 %v1864
    %v2448 = vpop.f32.mrb[0].mxu0
    %v2449 = vadd.f32 0.0, %v2448
    %v2450 = vpop.f32.mrb[0].mxu0
    %v2451 = vadd.f32 0.0, %v2450
    %v2452 = vpop.f32.mrb[0].mxu0
    %v2453 = vadd.f32 0.0, %v2452
    %v2454 = vpop.f32.mrb[0].mxu0
    %v2455 = vadd.f32 0.0, %v2454
    %2456 = vdwg.mxu0
    %2457 = vmatprep.subr.bf16.mxu0 %v2173
    %2458 = vmatpush1.bf16.msra.mxu0 %v2172
    %2459 = vmatprep.subr.bf16.mxu0 %v2175
    %2460 = vmatpush1.bf16.msra.mxu0 %v2174
    %2461 = vmatprep.subr.bf16.mxu0 %v2177
    %2462 = vmatpush1.bf16.msra.mxu0 %v2176
    %2463 = vmatprep.subr.bf16.mxu0 %v2179
    %2464 = vmatpush1.bf16.msra.mxu0 %v2178
    %2465 = vmatprep.subr.bf16.mxu0 %v2181
    %2466 = vmatpush1.bf16.msra.mxu0 %v2180
    %2467 = vmatprep.subr.bf16.mxu0 %v2183
    %2468 = vmatpush1.bf16.msra.mxu0 %v2182
    %2469 = vmatprep.subr.bf16.mxu0 %v2185
    %2470 = vmatpush1.bf16.msra.mxu0 %v2184
    %2471 = vmatprep.subr.bf16.mxu0 %v2187
    %2472 = vmatpush1.bf16.msra.mxu0 %v2186
    %2473 = vmatprep.subr.bf16.mxu0 %v2189
    %2474 = vmatpush1.bf16.msra.mxu0 %v2188
    %2475 = vmatprep.subr.bf16.mxu0 %v2191
    %2476 = vmatpush1.bf16.msra.mxu0 %v2190
    %2477 = vmatprep.subr.bf16.mxu0 %v2193
    %2478 = vmatpush1.bf16.msra.mxu0 %v2192
    %2479 = vmatprep.subr.bf16.mxu0 %v2195
    %2480 = vmatpush1.bf16.msra.mxu0 %v2194
    %2481 = vmatprep.subr.bf16.mxu0 %v2197
    %2482 = vmatpush1.bf16.msra.mxu0 %v2196
    %2483 = vmatprep.subr.bf16.mxu0 %v2199
    %2484 = vmatpush1.bf16.msra.mxu0 %v2198
    %2485 = vmatprep.subr.bf16.mxu0 %v2201
    %2486 = vmatpush1.bf16.msra.mxu0 %v2200
    %2487 = vmatprep.subr.bf16.mxu0 %v2203
    %2488 = vmatpush1.bf16.msra.mxu0 %v2202
    %2489 = vmatprep.mubr.bf16.mxu0 %v1825
    %2490 = vmatmul.mubr.bf16.gmra.mrb[0].mxu0 %v1824
    %v2491 = vpop.f32.mrb[0].mxu0
    %v2492 = vadd.f32 %v2379, %v2491
    %v2493 = vpop.f32.mrb[0].mxu0
    %v2494 = vadd.f32 %v2381, %v2493
    %v2495 = vpop.f32.mrb[0].mxu0
    %v2496 = vadd.f32 %v2383, %v2495
    %v2497 = vpop.f32.mrb[0].mxu0
    %v2498 = vadd.f32 %v2385, %v2497
    %2499 = vmatprep.mubr.bf16.mxu0 %v1831
    %2500 = vmatmul.mubr.bf16.gmra.mrb[0].mxu0 %v1830
    %v2501 = vpop.f32.mrb[0].mxu0
    %v2502 = vadd.f32 %v2389, %v2501
    %v2503 = vpop.f32.mrb[0].mxu0
    %v2504 = vadd.f32 %v2391, %v2503
    %v2505 = vpop.f32.mrb[0].mxu0
    %v2506 = vadd.f32 %v2393, %v2505
    %v2507 = vpop.f32.mrb[0].mxu0
    %v2508 = vadd.f32 %v2395, %v2507
    %2509 = vmatprep.mubr.bf16.mxu0 %v1837
    %2510 = vmatmul.mubr.bf16.gmra.mrb[0].mxu0 %v1836
    %v2511 = vpop.f32.mrb[0].mxu0
    %v2512 = vadd.f32 %v2399, %v2511
    %v2513 = vpop.f32.mrb[0].mxu0
    %v2514 = vadd.f32 %v2401, %v2513
    %v2515 = vpop.f32.mrb[0].mxu0
    %v2516 = vadd.f32 %v2403, %v2515
    %v2517 = vpop.f32.mrb[0].mxu0
    %v2518 = vadd.f32 %v2405, %v2517
    %2519 = vmatprep.mubr.bf16.mxu0 %v1843
    %2520 = vmatmul.mubr.bf16.gmra.mrb[0].mxu0 %v1842
    %v2521 = vpop.f32.mrb[0].mxu0
    %v2522 = vadd.f32 %v2409, %v2521
    %v2523 = vpop.f32.mrb[0].mxu0
    %v2524 = vadd.f32 %v2411, %v2523
    %v2525 = vpop.f32.mrb[0].mxu0
    %v2526 = vadd.f32 %v2413, %v2525
    %v2527 = vpop.f32.mrb[0].mxu0
    %v2528 = vadd.f32 %v2415, %v2527
    %2529 = vmatprep.mubr.bf16.mxu0 %v1849
    %2530 = vmatmul.mubr.bf16.gmra.mrb[0].mxu0 %v1848
    %v2531 = vpop.f32.mrb[0].mxu0
    %v2532 = vadd.f32 %v2419, %v2531
    %v2533 = vpop.f32.mrb[0].mxu0
    %v2534 = vadd.f32 %v2421, %v2533
    %v2535 = vpop.f32.mrb[0].mxu0
    %v2536 = vadd.f32 %v2423, %v2535
    %v2537 = vpop.f32.mrb[0].mxu0
    %v2538 = vadd.f32 %v2425, %v2537
    %2539 = vmatprep.mubr.bf16.mxu0 %v1855
    %2540 = vmatmul.mubr.bf16.gmra.mrb[0].mxu0 %v1854
    %v2541 = vpop.f32.mrb[0].mxu0
    %v2542 = vadd.f32 %v2429, %v2541
    %v2543 = vpop.f32.mrb[0].mxu0
    %v2544 = vadd.f32 %v2431, %v2543
    %v2545 = vpop.f32.mrb[0].mxu0
    %v2546 = vadd.f32 %v2433, %v2545
    %v2547 = vpop.f32.mrb[0].mxu0
    %v2548 = vadd.f32 %v2435, %v2547
    %2549 = vmatprep.mubr.bf16.mxu0 %v1861
    %2550 = vmatmul.mubr.bf16.gmra.mrb[0].mxu0 %v1860
    %v2551 = vpop.f32.mrb[0].mxu0
    %v2552 = vadd.f32 %v2439, %v2551
    %v2553 = vpop.f32.mrb[0].mxu0
    %v2554 = vadd.f32 %v2441, %v2553
    %v2555 = vpop.f32.mrb[0].mxu0
    %v2556 = vadd.f32 %v2443, %v2555
    %v2557 = vpop.f32.mrb[0].mxu0
    %v2558 = vadd.f32 %v2445, %v2557
    %2559 = vmatprep.mubr.bf16.mxu0 %v1867
    %2560 = vmatmul.mubr.bf16.gmra.mrb[0].mxu0 %v1866
    %v2561 = vpop.f32.mrb[0].mxu0
    %v2562 = vadd.f32 %v2449, %v2561
    %v2563 = vpop.f32.mrb[0].mxu0
    %v2564 = vadd.f32 %v2451, %v2563
    %v2565 = vpop.f32.mrb[0].mxu0
    %v2566 = vadd.f32 %v2453, %v2565
    %v2567 = vpop.f32.mrb[0].mxu0
    %v2568 = vadd.f32 %v2455, %v2567
    %2569 = vdwg.mxu0
    %2570 = vmatprep.subr.bf16.mxu0 %v2205
    %2571 = vmatpush1.bf16.msra.mxu0 %v2204
    %2572 = vmatprep.subr.bf16.mxu0 %v2207
    %2573 = vmatpush1.bf16.msra.mxu0 %v2206
    %2574 = vmatprep.subr.bf16.mxu0 %v2209
    %2575 = vmatpush1.bf16.msra.mxu0 %v2208
    %2576 = vmatprep.subr.bf16.mxu0 %v2211
    %2577 = vmatpush1.bf16.msra.mxu0 %v2210
    %2578 = vmatprep.subr.bf16.mxu0 %v2213
    %2579 = vmatpush1.bf16.msra.mxu0 %v2212
    %2580 = vmatprep.subr.bf16.mxu0 %v2215
    %2581 = vmatpush1.bf16.msra.mxu0 %v2214
    %2582 = vmatprep.subr.bf16.mxu0 %v2217
    %2583 = vmatpush1.bf16.msra.mxu0 %v2216
    %2584 = vmatprep.subr.bf16.mxu0 %v2219
    %2585 = vmatpush1.bf16.msra.mxu0 %v2218
    %2586 = vmatprep.subr.bf16.mxu0 %v2221
    %2587 = vmatpush1.bf16.msra.mxu0 %v2220
    %2588 = vmatprep.subr.bf16.mxu0 %v2223
    %2589 = vmatpush1.bf16.msra.mxu0 %v2222
    %2590 = vmatprep.subr.bf16.mxu0 %v2225
    %2591 = vmatpush1.bf16.msra.mxu0 %v2224
    %2592 = vmatprep.subr.bf16.mxu0 %v2227
    %2593 = vmatpush1.bf16.msra.mxu0 %v2226
    %2594 = vmatprep.subr.bf16.mxu0 %v2229
    %2595 = vmatpush1.bf16.msra.mxu0 %v2228
    %2596 = vmatprep.subr.bf16.mxu0 0
    %2597 = vmatpush1.bf16.msra.mxu0 0
    %2598 = vmatprep.subr.bf16.mxu0 0
    %2599 = vmatpush1.bf16.msra.mxu0 0
    %2600 = vmatprep.subr.bf16.mxu0 0
    %2601 = vmatpush1.bf16.msra.mxu0 0
    %2602 = vmatprep.mubr.bf16.mxu0 %v2321
    %2603 = vmatmul.mubr.bf16.gmra.mrb[0].mxu0 %v1826
    %v2604 = vpop.f32.mrb[0].mxu0
    %v2605 = vadd.f32 %v2492, %v2604
    %v2606 = vpop.f32.mrb[0].mxu0
    %v2607 = vadd.f32 %v2494, %v2606
    %v2608 = vpop.f32.mrb[0].mxu0
    %v2609 = vadd.f32 %v2496, %v2608
    %v2610 = vpop.f32.mrb[0].mxu0
    %v2611 = vadd.f32 %v2498, %v2610
    %2612 = vmatprep.mubr.bf16.mxu0 %v2324
    %2613 = vmatmul.mubr.bf16.gmra.mrb[0].mxu0 %v1832
    %v2614 = vpop.f32.mrb[0].mxu0
    %v2615 = vadd.f32 %v2502, %v2614
    %v2616 = vpop.f32.mrb[0].mxu0
    %v2617 = vadd.f32 %v2504, %v2616
    %v2618 = vpop.f32.mrb[0].mxu0
    %v2619 = vadd.f32 %v2506, %v2618
    %v2620 = vpop.f32.mrb[0].mxu0
    %v2621 = vadd.f32 %v2508, %v2620
    %2622 = vmatprep.mubr.bf16.mxu0 %v2327
    %2623 = vmatmul.mubr.bf16.gmra.mrb[0].mxu0 %v1838
    %v2624 = vpop.f32.mrb[0].mxu0
    %v2625 = vadd.f32 %v2512, %v2624
    %v2626 = vpop.f32.mrb[0].mxu0
    %v2627 = vadd.f32 %v2514, %v2626
    %v2628 = vpop.f32.mrb[0].mxu0
    %v2629 = vadd.f32 %v2516, %v2628
    %v2630 = vpop.f32.mrb[0].mxu0
    %v2631 = vadd.f32 %v2518, %v2630
    %2632 = vmatprep.mubr.bf16.mxu0 %v2330
    %2633 = vmatmul.mubr.bf16.gmra.mrb[0].mxu0 %v1844
    %v2634 = vpop.f32.mrb[0].mxu0
    %v2635 = vadd.f32 %v2522, %v2634
    %v2636 = vpop.f32.mrb[0].mxu0
    %v2637 = vadd.f32 %v2524, %v2636
    %v2638 = vpop.f32.mrb[0].mxu0
    %v2639 = vadd.f32 %v2526, %v2638
    %v2640 = vpop.f32.mrb[0].mxu0
    %v2641 = vadd.f32 %v2528, %v2640
    %2642 = vmatprep.mubr.bf16.mxu0 %v2333
    %2643 = vmatmul.mubr.bf16.gmra.mrb[0].mxu0 %v1850
    %v2644 = vpop.f32.mrb[0].mxu0
    %v2645 = vadd.f32 %v2532, %v2644
    %v2646 = vpop.f32.mrb[0].mxu0
    %v2647 = vadd.f32 %v2534, %v2646
    %v2648 = vpop.f32.mrb[0].mxu0
    %v2649 = vadd.f32 %v2536, %v2648
    %v2650 = vpop.f32.mrb[0].mxu0
    %v2651 = vadd.f32 %v2538, %v2650
    %2652 = vmatprep.mubr.bf16.mxu0 %v2336
    %2653 = vmatmul.mubr.bf16.gmra.mrb[0].mxu0 %v1856
    %v2654 = vpop.f32.mrb[0].mxu0
    %v2655 = vadd.f32 %v2542, %v2654
    %v2656 = vpop.f32.mrb[0].mxu0
    %v2657 = vadd.f32 %v2544, %v2656
    %v2658 = vpop.f32.mrb[0].mxu0
    %v2659 = vadd.f32 %v2546, %v2658
    %v2660 = vpop.f32.mrb[0].mxu0
    %v2661 = vadd.f32 %v2548, %v2660
    %2662 = vmatprep.mubr.bf16.mxu0 %v2339
    %2663 = vmatmul.mubr.bf16.gmra.mrb[0].mxu0 %v1862
    %v2664 = vpop.f32.mrb[0].mxu0
    %v2665 = vadd.f32 %v2552, %v2664
    %v2666 = vpop.f32.mrb[0].mxu0
    %v2667 = vadd.f32 %v2554, %v2666
    %v2668 = vpop.f32.mrb[0].mxu0
    %v2669 = vadd.f32 %v2556, %v2668
    %v2670 = vpop.f32.mrb[0].mxu0
    %v2671 = vadd.f32 %v2558, %v2670
    %2672 = vmatprep.mubr.bf16.mxu0 %v2342
    %2673 = vmatmul.mubr.bf16.gmra.mrb[0].mxu0 %v1868
    %v2674 = vpop.f32.mrb[0].mxu0
    %v2675 = vadd.f32 %v2562, %v2674
    %v2676 = vpop.f32.mrb[0].mxu0
    %v2677 = vadd.f32 %v2564, %v2676
    %v2678 = vpop.f32.mrb[0].mxu0
    %v2679 = vadd.f32 %v2566, %v2678
    %v2680 = vpop.f32.mrb[0].mxu0
    %v2681 = vadd.f32 %v2568, %v2680
    %2682 = vdwg.mxu0
    %v2683 = vld [vmem:[%s1 + $0xc1] ss:$0 sm:$0xff]
    %2700 = vrot.lane.b32.xlu0 %v2605, 78
    %v2701 = vpop.permute.xlu0 %2700
    %2702 = vrot.lane.b32.xlu0 %v2609, 78
    %v2703 = vpop.permute.xlu0 %2702
    %2704 = vrot.lane.b32.xlu0 %v2615, 78
    %v2705 = vpop.permute.xlu0 %2704
    %2706 = vrot.lane.b32.xlu0 %v2619, 78
    %v2707 = vpop.permute.xlu0 %2706
    %2708 = vrot.lane.b32.xlu0 %v2625, 78
    %v2709 = vpop.permute.xlu0 %2708
    %2710 = vrot.lane.b32.xlu0 %v2629, 78
    %v2711 = vpop.permute.xlu0 %2710
    %2712 = vrot.lane.b32.xlu0 %v2635, 78
    %v2713 = vpop.permute.xlu0 %2712
    %2714 = vrot.lane.b32.xlu0 %v2639, 78
    %v2715 = vpop.permute.xlu0 %2714
    %2716 = vrot.lane.b32.xlu0 %v2645, 78
    %v2717 = vpop.permute.xlu0 %2716
    %2718 = vrot.lane.b32.xlu0 %v2649, 78
    %v2719 = vpop.permute.xlu0 %2718
    %2720 = vrot.lane.b32.xlu0 %v2655, 78
    %v2721 = vpop.permute.xlu0 %2720
    %2722 = vrot.lane.b32.xlu0 %v2659, 78
    %v2723 = vpop.permute.xlu0 %2722
    %2724 = vrot.lane.b32.xlu0 %v2665, 78
    %v2725 = vpop.permute.xlu0 %2724
    %2726 = vrot.lane.b32.xlu0 %v2669, 78
    %v2727 = vpop.permute.xlu0 %2726
    %2728 = vrot.lane.b32.xlu0 %v2675, 78
    %v2729 = vpop.permute.xlu0 %2728
    %2730 = vrot.lane.b32.xlu0 %v2679, 78
    %v2731 = vpop.permute.xlu0 %2730
    %v2748 = vmax.f32 %v2605, %v2701
    %v2749 = vmax.f32 %v2609, %v2703
    %v2750 = vmax.f32 %v2615, %v2705
    %v2751 = vmax.f32 %v2619, %v2707
    %v2752 = vmax.f32 %v2625, %v2709
    %v2753 = vmax.f32 %v2629, %v2711
    %v2754 = vmax.f32 %v2635, %v2713
    %v2755 = vmax.f32 %v2639, %v2715
    %v2756 = vmax.f32 %v2645, %v2717
    %v2757 = vmax.f32 %v2649, %v2719
    %v2758 = vmax.f32 %v2655, %v2721
    %v2759 = vmax.f32 %v2659, %v2723
    %v2760 = vmax.f32 %v2665, %v2725
    %v2761 = vmax.f32 %v2669, %v2727
    %v2762 = vmax.f32 %v2675, %v2729
    %v2763 = vmax.f32 %v2679, %v2731
    %2780 = vrot.lane.b32.xlu0 %v2607, 78
    %v2781 = vpop.permute.xlu0 %2780
    %2782 = vrot.lane.b32.xlu0 %v2611, 78
    %v2783 = vpop.permute.xlu0 %2782
    %2784 = vrot.lane.b32.xlu0 %v2617, 78
    %v2785 = vpop.permute.xlu0 %2784
    %2786 = vrot.lane.b32.xlu0 %v2621, 78
    %v2787 = vpop.permute.xlu0 %2786
    %2788 = vrot.lane.b32.xlu0 %v2627, 78
    %v2789 = vpop.permute.xlu0 %2788
    %2790 = vrot.lane.b32.xlu0 %v2631, 78
    %v2791 = vpop.permute.xlu0 %2790
    %2792 = vrot.lane.b32.xlu0 %v2637, 78
    %v2793 = vpop.permute.xlu0 %2792
    %2794 = vrot.lane.b32.xlu0 %v2641, 78
    %v2795 = vpop.permute.xlu0 %2794
    %2796 = vrot.lane.b32.xlu0 %v2647, 78
    %v2797 = vpop.permute.xlu0 %2796
    %2798 = vrot.lane.b32.xlu0 %v2651, 78
    %v2799 = vpop.permute.xlu0 %2798
    %2800 = vrot.lane.b32.xlu0 %v2657, 78
    %v2801 = vpop.permute.xlu0 %2800
    %2802 = vrot.lane.b32.xlu0 %v2661, 78
    %v2803 = vpop.permute.xlu0 %2802
    %2804 = vrot.lane.b32.xlu0 %v2667, 78
    %v2805 = vpop.permute.xlu0 %2804
    %2806 = vrot.lane.b32.xlu0 %v2671, 78
    %v2807 = vpop.permute.xlu0 %2806
    %2808 = vrot.lane.b32.xlu0 %v2677, 78
    %v2809 = vpop.permute.xlu0 %2808
    %2810 = vrot.lane.b32.xlu0 %v2681, 78
    %v2811 = vpop.permute.xlu0 %2810
    %v2828 = vmax.f32 %v2605, %v2781
    %v2829 = vmax.f32 %v2607, %v2781
    %v2830 = vmax.f32 %v2609, %v2783
    %v2831 = vmax.f32 %v2611, %v2783
    %v2832 = vmax.f32 %v2615, %v2785
    %v2833 = vmax.f32 %v2617, %v2785
    %v2834 = vmax.f32 %v2619, %v2787
    %v2835 = vmax.f32 %v2621, %v2787
    %v2836 = vmax.f32 %v2625, %v2789
    %v2837 = vmax.f32 %v2627, %v2789
    %v2838 = vmax.f32 %v2629, %v2791
    %v2839 = vmax.f32 %v2631, %v2791
    %v2840 = vmax.f32 %v2635, %v2793
    %v2841 = vmax.f32 %v2637, %v2793
    %v2842 = vmax.f32 %v2639, %v2795
    %v2843 = vmax.f32 %v2641, %v2795
    %v2844 = vmax.f32 %v2645, %v2797
    %v2845 = vmax.f32 %v2647, %v2797
    %v2846 = vmax.f32 %v2649, %v2799
    %v2847 = vmax.f32 %v2651, %v2799
    %v2848 = vmax.f32 %v2655, %v2801
    %v2849 = vmax.f32 %v2657, %v2801
    %v2850 = vmax.f32 %v2659, %v2803
    %v2851 = vmax.f32 %v2661, %v2803
    %v2852 = vmax.f32 %v2665, %v2805
    %v2853 = vmax.f32 %v2667, %v2805
    %v2854 = vmax.f32 %v2669, %v2807
    %v2855 = vmax.f32 %v2671, %v2807
    %v2856 = vmax.f32 %v2675, %v2809
    %v2857 = vmax.f32 %v2677, %v2809
    %v2858 = vmax.f32 %v2679, %v2811
    %v2859 = vmax.f32 %v2681, %v2811
    %2892 = vrot.lane.b32.xlu0 %v2828, 28
    %v2893 = vpop.permute.xlu0 %2892
    %2894 = vrot.lane.b32.xlu0 %v2829, 28
    %v2895 = vpop.permute.xlu0 %2894
    %2896 = vrot.lane.b32.xlu0 %v2830, 28
    %v2897 = vpop.permute.xlu0 %2896
    %2898 = vrot.lane.b32.xlu0 %v2831, 28
    %v2899 = vpop.permute.xlu0 %2898
    %2900 = vrot.lane.b32.xlu0 %v2832, 28
    %v2901 = vpop.permute.xlu0 %2900
    %2902 = vrot.lane.b32.xlu0 %v2833, 28
    %v2903 = vpop.permute.xlu0 %2902
    %2904 = vrot.lane.b32.xlu0 %v2834, 28
    %v2905 = vpop.permute.xlu0 %2904
    %2906 = vrot.lane.b32.xlu0 %v2835, 28
    %v2907 = vpop.permute.xlu0 %2906
    %2908 = vrot.lane.b32.xlu0 %v2836, 28
    %v2909 = vpop.permute.xlu0 %2908
    %2910 = vrot.lane.b32.xlu0 %v2837, 28
    %v2911 = vpop.permute.xlu0 %2910
    %2912 = vrot.lane.b32.xlu0 %v2838, 28
    %v2913 = vpop.permute.xlu0 %2912
    %2914 = vrot.lane.b32.xlu0 %v2839, 28
    %v2915 = vpop.permute.xlu0 %2914
    %2916 = vrot.lane.b32.xlu0 %v2840, 28
    %v2917 = vpop.permute.xlu0 %2916
    %2918 = vrot.lane.b32.xlu0 %v2841, 28
    %v2919 = vpop.permute.xlu0 %2918
    %2920 = vrot.lane.b32.xlu0 %v2842, 28
    %v2921 = vpop.permute.xlu0 %2920
    %2922 = vrot.lane.b32.xlu0 %v2843, 28
    %v2923 = vpop.permute.xlu0 %2922
    %2924 = vrot.lane.b32.xlu0 %v2844, 28
    %v2925 = vpop.permute.xlu0 %2924
    %2926 = vrot.lane.b32.xlu0 %v2845, 28
    %v2927 = vpop.permute.xlu0 %2926
    %2928 = vrot.lane.b32.xlu0 %v2846, 28
    %v2929 = vpop.permute.xlu0 %2928
    %2930 = vrot.lane.b32.xlu0 %v2847, 28
    %v2931 = vpop.permute.xlu0 %2930
    %2932 = vrot.lane.b32.xlu0 %v2848, 28
    %v2933 = vpop.permute.xlu0 %2932
    %2934 = vrot.lane.b32.xlu0 %v2849, 28
    %v2935 = vpop.permute.xlu0 %2934
    %2936 = vrot.lane.b32.xlu0 %v2850, 28
    %v2937 = vpop.permute.xlu0 %2936
    %2938 = vrot.lane.b32.xlu0 %v2851, 28
    %v2939 = vpop.permute.xlu0 %2938
    %2940 = vrot.lane.b32.xlu0 %v2852, 28
    %v2941 = vpop.permute.xlu0 %2940
    %2942 = vrot.lane.b32.xlu0 %v2853, 28
    %v2943 = vpop.permute.xlu0 %2942
    %2944 = vrot.lane.b32.xlu0 %v2854, 28
    %v2945 = vpop.permute.xlu0 %2944
    %2946 = vrot.lane.b32.xlu0 %v2855, 28
    %v2947 = vpop.permute.xlu0 %2946
    %2948 = vrot.lane.b32.xlu0 %v2856, 28
    %v2949 = vpop.permute.xlu0 %2948
    %2950 = vrot.lane.b32.xlu0 %v2857, 28
    %v2951 = vpop.permute.xlu0 %2950
    %2952 = vrot.lane.b32.xlu0 %v2858, 28
    %v2953 = vpop.permute.xlu0 %2952
    %2954 = vrot.lane.b32.xlu0 %v2859, 28
    %v2955 = vpop.permute.xlu0 %2954
    %vm2956 = vcmask 228352
    %v2957 = vsel %vm2956, %v2893, %v2895
    %v2958 = vsel %vm2956, %v2897, %v2899
    %v2959 = vsel %vm2956, %v2901, %v2903
    %v2960 = vsel %vm2956, %v2905, %v2907
    %v2961 = vsel %vm2956, %v2909, %v2911
    %v2962 = vsel %vm2956, %v2913, %v2915
    %v2963 = vsel %vm2956, %v2917, %v2919
    %v2964 = vsel %vm2956, %v2921, %v2923
    %v2965 = vsel %vm2956, %v2925, %v2927
    %v2966 = vsel %vm2956, %v2929, %v2931
    %v2967 = vsel %vm2956, %v2933, %v2935
    %v2968 = vsel %vm2956, %v2937, %v2939
    %v2969 = vsel %vm2956, %v2941, %v2943
    %v2970 = vsel %vm2956, %v2945, %v2947
    %v2971 = vsel %vm2956, %v2949, %v2951
    %v2972 = vsel %vm2956, %v2953, %v2955
    %v2989 = vmax.f32 %v2748, %v2957
    %v2990 = vmax.f32 %v2749, %v2958
    %v2991 = vmax.f32 %v2750, %v2959
    %v2992 = vmax.f32 %v2751, %v2960
    %v2993 = vmax.f32 %v2752, %v2961
    %v2994 = vmax.f32 %v2753, %v2962
    %v2995 = vmax.f32 %v2754, %v2963
    %v2996 = vmax.f32 %v2755, %v2964
    %v2997 = vmax.f32 %v2756, %v2965
    %v2998 = vmax.f32 %v2757, %v2966
    %v2999 = vmax.f32 %v2758, %v2967
    %v3000 = vmax.f32 %v2759, %v2968
    %v3001 = vmax.f32 %v2760, %v2969
    %v3002 = vmax.f32 %v2761, %v2970
    %v3003 = vmax.f32 %v2762, %v2971
    %v3004 = vmax.f32 %v2763, %v2972
    %v3005 = vadd.f32 %v2989, %v2683
    %v3006 = vadd.f32 %v2990, %v2683
    %v3007 = vadd.f32 %v2991, %v2683
    %v3008 = vadd.f32 %v2992, %v2683
    %v3009 = vadd.f32 %v2993, %v2683
    %v3010 = vadd.f32 %v2994, %v2683
    %v3011 = vadd.f32 %v2995, %v2683
    %v3012 = vadd.f32 %v2996, %v2683
    %v3013 = vadd.f32 %v2997, %v2683
    %v3014 = vadd.f32 %v2998, %v2683
    %v3015 = vadd.f32 %v2999, %v2683
    %v3016 = vadd.f32 %v3000, %v2683
    %v3017 = vadd.f32 %v3001, %v2683
    %v3018 = vadd.f32 %v3002, %v2683
    %v3019 = vadd.f32 %v3003, %v2683
    %v3020 = vadd.f32 %v3004, %v2683
    %v3021 = vmax.f32 %v3005, 0.0
    %v3022 = vmax.f32 %v3006, 0.0
    %v3023 = vmax.f32 %v3007, 0.0
    %v3024 = vmax.f32 %v3008, 0.0
    %v3025 = vmax.f32 %v3009, 0.0
    %v3026 = vmax.f32 %v3010, 0.0
    %v3027 = vmax.f32 %v3011, 0.0
    %v3028 = vmax.f32 %v3012, 0.0
    %v3029 = vmax.f32 %v3013, 0.0
    %v3030 = vmax.f32 %v3014, 0.0
    %v3031 = vmax.f32 %v3015, 0.0
    %v3032 = vmax.f32 %v3016, 0.0
    %v3033 = vmax.f32 %v3017, 0.0
    %v3034 = vmax.f32 %v3018, 0.0
    %v3035 = vmax.f32 %v3019, 0.0
    %v3036 = vmax.f32 %v3020, 0.0
    %vm3037 = vcmask 408576
    %3038 = vst.msk [vmem:[#allocation2] sm:$0xff] %vm3037, %v3021
    %3039 = vst.msk [vmem:[#allocation2 + $0x8] sm:$0xff] %vm3037, %v3022
    %3040 = vst.msk [vmem:[#allocation2 + $0x10] sm:$0xff] %vm3037, %v3023
    %3041 = vst.msk [vmem:[#allocation2 + $0x18] sm:$0xff] %vm3037, %v3024
    %3042 = vst.msk [vmem:[#allocation2 + $0x20] sm:$0xff] %vm3037, %v3025
    %3043 = vst.msk [vmem:[#allocation2 + $0x28] sm:$0xff] %vm3037, %v3026
    %3044 = vst.msk [vmem:[#allocation2 + $0x30] sm:$0xff] %vm3037, %v3027
    %3045 = vst.msk [vmem:[#allocation2 + $0x38] sm:$0xff] %vm3037, %v3028
    %3046 = vst.msk [vmem:[#allocation2 + $0x40] sm:$0xff] %vm3037, %v3029
    %3047 = vst.msk [vmem:[#allocation2 + $0x48] sm:$0xff] %vm3037, %v3030
    %3048 = vst.msk [vmem:[#allocation2 + $0x50] sm:$0xff] %vm3037, %v3031
    %3049 = vst.msk [vmem:[#allocation2 + $0x58] sm:$0xff] %vm3037, %v3032
    %3050 = vst.msk [vmem:[#allocation2 + $0x60] sm:$0xff] %vm3037, %v3033
    %3051 = vst.msk [vmem:[#allocation2 + $0x68] sm:$0xff] %vm3037, %v3034
    %3052 = vst.msk [vmem:[#allocation2 + $0x70] sm:$0xff] %vm3037, %v3035
    %3053 = vst.msk [vmem:[#allocation2 + $0x78] sm:$0xff] %vm3037, %v3036
    %v3054 = vld [vmem:[#allocation2] sm:$0x1]
    %v3055 = vld [vmem:[#allocation2 + $0x40] sm:$0x1]
    %v3056 = vld [vmem:[#allocation2 + $0x1] sm:$0x1]
    %v3057 = vld [vmem:[#allocation2 + $0x41] sm:$0x1]
    %v3058 = vld [vmem:[#allocation2 + $0x2] sm:$0x1]
    %v3059 = vld [vmem:[#allocation2 + $0x42] sm:$0x1]
    %v3060 = vld [vmem:[#allocation2 + $0x3] sm:$0x1]
    %v3061 = vld [vmem:[#allocation2 + $0x43] sm:$0x1]
    %v3062 = vld [vmem:[#allocation2 + $0x8] sm:$0x1]
    %v3063 = vld [vmem:[#allocation2 + $0x48] sm:$0x1]
    %v3064 = vld [vmem:[#allocation2 + $0x9] sm:$0x1]
    %v3065 = vld [vmem:[#allocation2 + $0x49] sm:$0x1]
    %v3066 = vld [vmem:[#allocation2 + $0xa] sm:$0x1]
    %v3067 = vld [vmem:[#allocation2 + $0x4a] sm:$0x1]
    %v3068 = vld [vmem:[#allocation2 + $0xb] sm:$0x1]
    %v3069 = vld [vmem:[#allocation2 + $0x4b] sm:$0x1]
    %v3070 = vld [vmem:[#allocation2 + $0x10] sm:$0x1]
    %v3071 = vld [vmem:[#allocation2 + $0x50] sm:$0x1]
    %v3072 = vld [vmem:[#allocation2 + $0x11] sm:$0x1]
    %v3073 = vld [vmem:[#allocation2 + $0x51] sm:$0x1]
    %v3074 = vld [vmem:[#allocation2 + $0x12] sm:$0x1]
    %v3075 = vld [vmem:[#allocation2 + $0x52] sm:$0x1]
    %v3076 = vld [vmem:[#allocation2 + $0x13] sm:$0x1]
    %v3077 = vld [vmem:[#allocation2 + $0x53] sm:$0x1]
    %v3078 = vld [vmem:[#allocation2 + $0x18] sm:$0x1]
    %v3079 = vld [vmem:[#allocation2 + $0x58] sm:$0x1]
    %v3080 = vld [vmem:[#allocation2 + $0x19] sm:$0x1]
    %v3081 = vld [vmem:[#allocation2 + $0x59] sm:$0x1]
    %v3082 = vld [vmem:[#allocation2 + $0x1a] sm:$0x1]
    %v3083 = vld [vmem:[#allocation2 + $0x5a] sm:$0x1]
    %v3084 = vld [vmem:[#allocation2 + $0x1b] sm:$0x1]
    %v3085 = vld [vmem:[#allocation2 + $0x5b] sm:$0x1]
    %v3088 = vrot.slane %v3055, 7
    %vm3089 = vcmask 1041409
    %v3090 = vsel %vm3089, %v3088, %v3054
    %v3094 = vrot.slane %v3057, 7
    %v3095 = vsel %vm3089, %v3094, %v3056
    %3096 = vrot.lane.b32.xlu0 %v3095, 50
    %v3097 = vpop.permute.xlu0 %3096
    %v3101 = vrot.slane %v3059, 7
    %v3102 = vsel %vm3089, %v3101, %v3058
    %3103 = vrot.lane.b32.xlu0 %v3102, 100
    %v3104 = vpop.permute.xlu0 %3103
    %v3108 = vrot.slane %v3061, 7
    %v3109 = vsel %vm3089, %v3108, %v3060
    %3110 = vrot.lane.b32.xlu0 %v3109, 22
    %v3111 = vpop.permute.xlu0 %3110
    %v3115 = vrot.slane %v3063, 7
    %v3116 = vsel %vm3089, %v3115, %v3062
    %3117 = vrot.lane.b32.xlu0 %v3116, 72
    %v3118 = vpop.permute.xlu0 %3117
    %v3122 = vrot.slane %v3065, 7
    %v3123 = vsel %vm3089, %v3122, %v3064
    %3124 = vrot.lane.b32.xlu0 %v3123, 122
    %v3125 = vpop.permute.xlu0 %3124
    %v3129 = vrot.slane %v3067, 7
    %v3130 = vsel %vm3089, %v3129, %v3066
    %3131 = vrot.lane.b32.xlu0 %v3130, 44
    %v3132 = vpop.permute.xlu0 %3131
    %v3136 = vrot.slane %v3069, 7
    %v3137 = vsel %vm3089, %v3136, %v3068
    %3138 = vrot.lane.b32.xlu0 %v3137, 94
    %v3139 = vpop.permute.xlu0 %3138
    %v3143 = vrot.slane %v3071, 7
    %v3144 = vsel %vm3089, %v3143, %v3070
    %3145 = vrot.lane.b32.xlu0 %v3144, 16
    %v3146 = vpop.permute.xlu0 %3145
    %v3150 = vrot.slane %v3073, 7
    %v3151 = vsel %vm3089, %v3150, %v3072
    %3152 = vrot.lane.b32.xlu0 %v3151, 66
    %v3153 = vpop.permute.xlu0 %3152
    %v3157 = vrot.slane %v3075, 7
    %v3158 = vsel %vm3089, %v3157, %v3074
    %3159 = vrot.lane.b32.xlu0 %v3158, 116
    %v3160 = vpop.permute.xlu0 %3159
    %v3164 = vrot.slane %v3077, 7
    %v3165 = vsel %vm3089, %v3164, %v3076
    %3166 = vrot.lane.b32.xlu0 %v3165, 38
    %v3167 = vpop.permute.xlu0 %3166
    %v3171 = vrot.slane %v3079, 7
    %v3172 = vsel %vm3089, %v3171, %v3078
    %3173 = vrot.lane.b32.xlu0 %v3172, 88
    %v3174 = vpop.permute.xlu0 %3173
    %v3178 = vrot.slane %v3081, 7
    %v3179 = vsel %vm3089, %v3178, %v3080
    %3180 = vrot.lane.b32.xlu0 %v3179, 10
    %v3181 = vpop.permute.xlu0 %3180
    %v3185 = vrot.slane %v3083, 7
    %v3186 = vsel %vm3089, %v3185, %v3082
    %3187 = vrot.lane.b32.xlu0 %v3186, 60
    %v3188 = vpop.permute.xlu0 %3187
    %v3192 = vrot.slane %v3085, 7
    %v3193 = vsel %vm3089, %v3192, %v3084
    %3194 = vrot.lane.b32.xlu0 %v3193, 110
    %v3195 = vpop.permute.xlu0 %3194
    %v3197 = vsel %vm3037, %v3090, %v3097
    %vm3198 = vcmask 818176
    %v3199 = vsel %vm3198, %v3197, %v3104
    %vm3200 = vcmask 179200
    %v3201 = vsel %vm3200, %v3104, %v3111
    %vm3202 = vcmask 588800
    %v3203 = vsel %vm3202, %v3201, %v3118
    %vm3204 = vcmask 998400
    %v3205 = vsel %vm3204, %v3203, %v3125
    %vm3206 = vcmask 359424
    %v3207 = vsel %vm3206, %v3125, %v3132
    %vm3208 = vcmask 769024
    %v3209 = vsel %vm3208, %v3207, %v3139
    %v3210 = vsel %vm271, %v3139, %v3146
    %vm3211 = vcmask 539648
    %v3212 = vsel %vm3211, %v3210, %v3153
    %vm3213 = vcmask 949248
    %v3214 = vsel %vm3213, %v3212, %v3160
    %vm3215 = vcmask 310272
    %v3216 = vsel %vm3215, %v3160, %v3167
    %vm3217 = vcmask 719872
    %v3218 = vsel %vm3217, %v3216, %v3174
    %vm3219 = vcmask 80896
    %v3220 = vsel %vm3219, %v3174, %v3181
    %vm3221 = vcmask 490496
    %v3222 = vsel %vm3221, %v3220, %v3188
    %vm3223 = vcmask 900096
    %v3224 = vsel %vm3223, %v3222, %v3195
    %v3225 = vld [vmem:[%s2 + $0x2d0] sm:$0xf]
    %v3226 = vld [vmem:[%s2 + $0x2d8] sm:$0xf]
    %v3227 = vld [vmem:[%s2 + $0x2e0] sm:$0xf]
    %v3228 = vld [vmem:[%s2 + $0x2e8] sm:$0xf]
    %v3229 = vld [vmem:[%s2 + $0x2f0] sm:$0xf]
    %v3230 = vld [vmem:[%s2 + $0x2f8] sm:$0xf]
    %v3231 = vld [vmem:[%s2 + $0x300] sm:$0xf]
    %v3232 = vld [vmem:[%s2 + $0x308] sm:$0xf]
    %v3233 = vld [vmem:[%s2 + $0x310] sm:$0xf]
    %v3234 = vld [vmem:[%s2 + $0x318] sm:$0xf]
    %v3235 = vld [vmem:[%s2 + $0x320] sm:$0xf]
    %v3236 = vld [vmem:[%s2 + $0x328] sm:$0xf]
    %v3237 = vld [vmem:[%s2 + $0x330] sm:$0xf]
    %v3238 = vld [vmem:[%s2 + $0x338] sm:$0xf]
    %v3239 = vld [vmem:[%s2 + $0x340] sm:$0xf]
    %v3240 = vld [vmem:[%s2 + $0x348] sm:$0xf]
    %v3241 = vld [vmem:[%s2 + $0x350] sm:$0xf]
    %v3242 = vld [vmem:[%s2 + $0x358] sm:$0xf]
    %v3243 = vld [vmem:[%s2 + $0x360] sm:$0xf]
    %v3244 = vld [vmem:[%s2 + $0x368] sm:$0xf]
    %v3245 = vld [vmem:[%s2 + $0x370] sm:$0xf]
    %v3246 = vld [vmem:[%s2 + $0x378] sm:$0xf]
    %v3247 = vld [vmem:[%s2 + $0x380] sm:$0xf]
    %v3248 = vld [vmem:[%s2 + $0x388] sm:$0xf]
    %v3249 = vld [vmem:[%s2 + $0x390] sm:$0xf]
    %v3250 = vld [vmem:[%s2 + $0x398] sm:$0xf]
    %v3251 = vld [vmem:[%s2 + $0x3a0] sm:$0xf]
    %v3252 = vld [vmem:[%s2 + $0x3a8] sm:$0xf]
    %v3253 = vld [vmem:[%s2 + $0x3b0] sm:$0xf]
    %v3254 = vld [vmem:[%s2 + $0x3b8] sm:$0xf]
    %v3255 = vld [vmem:[%s2 + $0x3c0] sm:$0xf]
    %v3256 = vld [vmem:[%s2 + $0x3c8] sm:$0xf]
    %v3257 = vld [vmem:[%s2 + $0x3d0] sm:$0xf]
    %v3258 = vld [vmem:[%s2 + $0x3d8] sm:$0xf]
    %v3259 = vld [vmem:[%s2 + $0x3e0] sm:$0xf]
    %v3260 = vld [vmem:[%s2 + $0x3e8] sm:$0xf]
    %v3261 = vld [vmem:[%s2 + $0x3f0] sm:$0xf]
    %v3262 = vld [vmem:[%s2 + $0x3f8] sm:$0xf]
    %v3263 = vld [vmem:[%s2 + $0x400] sm:$0xf]
    %v3264 = vld [vmem:[%s2 + $0x408] sm:$0xf]
    %v3265 = vld [vmem:[%s2 + $0x410] sm:$0xf]
    %v3266 = vld [vmem:[%s2 + $0x418] sm:$0xf]
    %v3267 = vld [vmem:[%s2 + $0x420] sm:$0xf]
    %v3268 = vld [vmem:[%s2 + $0x428] sm:$0xf]
    %v3269 = vld [vmem:[%s2 + $0x430] sm:$0xf]
    %v3270 = vld [vmem:[%s2 + $0x438] sm:$0xf]
    %v3271 = vld [vmem:[%s2 + $0x440] sm:$0xf]
    %v3272 = vld [vmem:[%s2 + $0x448] sm:$0xf]
    %v3273 = vld [vmem:[%s2 + $0x450] sm:$0xf]
    %v3274 = vld [vmem:[%s2 + $0x458] sm:$0xf]
    %v3275 = vld [vmem:[%s2 + $0x460] sm:$0xf]
    %v3276 = vld [vmem:[%s2 + $0x468] sm:$0xf]
    %v3277 = vld [vmem:[%s2 + $0x470] sm:$0xf]
    %v3278 = vld [vmem:[%s2 + $0x478] sm:$0xf]
    %v3279 = vld [vmem:[%s2 + $0x480] sm:$0xf]
    %v3280 = vld [vmem:[%s2 + $0x488] sm:$0xf]
    %v3281 = vld [vmem:[%s2 + $0x490] sm:$0xf]
    %v3282 = vld [vmem:[%s2 + $0x498] sm:$0xf]
    %v3283 = vld [vmem:[%s2 + $0x4a0] sm:$0xf]
    %v3284 = vld [vmem:[%s2 + $0x4a8] sm:$0xf]
    %v3285 = vld [vmem:[%s2 + $0x4b0] sm:$0xf]
    %v3286 = vld [vmem:[%s2 + $0x4b8] sm:$0xf]
    %v3287 = vld [vmem:[%s2 + $0x4c0] sm:$0xf]
    %v3288 = vld [vmem:[%s2 + $0x4c8] sm:$0xf]
    %v3289 = vld [vmem:[%s2 + $0x4d0] sm:$0xf]
    %v3290 = vld [vmem:[%s2 + $0x4d8] sm:$0xf]
    %v3291 = vld [vmem:[%s2 + $0x4e0] sm:$0xf]
    %v3292 = vld [vmem:[%s2 + $0x4e8] sm:$0xf]
    %v3293 = vld [vmem:[%s2 + $0x4f0] sm:$0xf]
    %v3294 = vld [vmem:[%s2 + $0x4f8] sm:$0xf]
    %v3295 = vld [vmem:[%s2 + $0x500] sm:$0xf]
    %v3296 = vld [vmem:[%s2 + $0x508] sm:$0xf]
    %v3297 = vld [vmem:[%s2 + $0x510] sm:$0xf]
    %v3298 = vld [vmem:[%s2 + $0x518] sm:$0xf]
    %v3299 = vld [vmem:[%s2 + $0x520] sm:$0xf]
    %v3300 = vld [vmem:[%s2 + $0x528] sm:$0xf]
    %v3301 = vld [vmem:[%s2 + $0x530] sm:$0xf]
    %v3302 = vld [vmem:[%s2 + $0x538] sm:$0xf]
    %v3303 = vld [vmem:[%s2 + $0x540] sm:$0xf]
    %v3304 = vld [vmem:[%s2 + $0x548] sm:$0xf]
    %v3305 = vld [vmem:[%s2 + $0x550] sm:$0xf]
    %v3306 = vld [vmem:[%s2 + $0x558] sm:$0xf]
    %v3307 = vld [vmem:[%s2 + $0x560] sm:$0xf]
    %v3308 = vld [vmem:[%s2 + $0x568] sm:$0xf]
    %v3309 = vld [vmem:[%s2 + $0x570] sm:$0xf]
    %v3310 = vld [vmem:[%s2 + $0x578] sm:$0xf]
    %v3311 = vld [vmem:[%s2 + $0x580] sm:$0xf]
    %v3312 = vld [vmem:[%s2 + $0x588] sm:$0xf]
    %v3313 = vld [vmem:[%s2 + $0x590] sm:$0xf]
    %v3314 = vld [vmem:[%s2 + $0x598] sm:$0xf]
    %v3315 = vld [vmem:[%s2 + $0x5a0] sm:$0xf]
    %v3316 = vld [vmem:[%s2 + $0x5a8] sm:$0xf]
    %v3317 = vld [vmem:[%s2 + $0x5b0] sm:$0xf]
    %v3318 = vld [vmem:[%s2 + $0x5b8] sm:$0xf]
    %v3319 = vld [vmem:[%s2 + $0x5c0] sm:$0xf]
    %v3320 = vld [vmem:[%s2 + $0x5c8] sm:$0xf]
    %v3321 = vld [vmem:[%s2 + $0x5d0] sm:$0xf]
    %v3322 = vld [vmem:[%s2 + $0x5d8] sm:$0xf]
    %v3323 = vld [vmem:[%s2 + $0x5e0] sm:$0xf]
    %v3324 = vld [vmem:[%s2 + $0x5e8] sm:$0xf]
    %v3325 = vld [vmem:[%s1 + $0xc2] ss:$0 sm:$0xff]
    %v3326 = vpack.c.bf16 %v3199, %v3199
    %v3327 = vpack.c.bf16 %v3205, %v3205
    %v3328 = vpack.c.bf16 %v3209, %v3209
    %v3329 = vpack.c.bf16 %v3214, %v3214
    %v3330 = vpack.c.bf16 %v3218, %v3218
    %v3331 = vpack.c.bf16 %v3224, %v3224
    %v3332 = vpack.c.bf16 %v3195, %v3195
    %v3433 = vunpack.c.l.b16 %v3225
    %v3434 = vunpack.c.l.b16 %v3226
    %v3435 = vunpack.c.l.b16 %v3227
    %v3436 = vunpack.c.l.b16 %v3228
    %v3437 = vunpack.c.l.b16 %v3229
    %v3438 = vunpack.c.l.b16 %v3230
    %v3439 = vunpack.c.l.b16 %v3231
    %v3440 = vunpack.c.l.b16 %v3232
    %v3441 = vunpack.c.l.b16 %v3233
    %v3442 = vunpack.c.l.b16 %v3234
    %v3443 = vunpack.c.l.b16 %v3235
    %v3444 = vunpack.c.l.b16 %v3236
    %v3445 = vunpack.c.l.b16 %v3237
    %v3446 = vunpack.c.l.b16 %v3238
    %v3447 = vunpack.c.l.b16 %v3239
    %v3448 = vunpack.c.l.b16 %v3240
    %v3449 = vunpack.c.l.b16 %v3241
    %v3450 = vunpack.c.l.b16 %v3242
    %v3451 = vunpack.c.l.b16 %v3243
    %v3452 = vunpack.c.l.b16 %v3244
    %v3453 = vunpack.c.l.b16 %v3245
    %v3454 = vunpack.c.l.b16 %v3246
    %v3455 = vunpack.c.l.b16 %v3247
    %v3456 = vunpack.c.l.b16 %v3248
    %v3457 = vunpack.c.l.b16 %v3249
    %v3458 = vunpack.c.l.b16 %v3250
    %v3459 = vunpack.c.l.b16 %v3251
    %v3460 = vunpack.c.l.b16 %v3252
    %v3461 = vunpack.c.l.b16 %v3253
    %v3462 = vunpack.c.l.b16 %v3254
    %v3463 = vunpack.c.l.b16 %v3255
    %v3464 = vunpack.c.l.b16 %v3256
    %v3465 = vunpack.c.l.b16 %v3257
    %v3466 = vunpack.c.l.b16 %v3258
    %v3467 = vunpack.c.l.b16 %v3259
    %v3468 = vunpack.c.l.b16 %v3260
    %v3469 = vunpack.c.l.b16 %v3261
    %v3470 = vunpack.c.l.b16 %v3262
    %v3471 = vunpack.c.l.b16 %v3263
    %v3472 = vunpack.c.l.b16 %v3264
    %v3473 = vunpack.c.l.b16 %v3265
    %v3474 = vunpack.c.l.b16 %v3266
    %v3475 = vunpack.c.l.b16 %v3267
    %v3476 = vunpack.c.l.b16 %v3268
    %v3477 = vunpack.c.l.b16 %v3269
    %v3478 = vunpack.c.l.b16 %v3270
    %v3479 = vunpack.c.l.b16 %v3271
    %v3480 = vunpack.c.l.b16 %v3272
    %v3481 = vunpack.c.l.b16 %v3273
    %v3482 = vunpack.c.l.b16 %v3274
    %v3483 = vunpack.c.l.b16 %v3275
    %v3484 = vunpack.c.l.b16 %v3276
    %v3485 = vunpack.c.l.b16 %v3277
    %v3486 = vunpack.c.l.b16 %v3278
    %v3487 = vunpack.c.l.b16 %v3279
    %v3488 = vunpack.c.l.b16 %v3280
    %v3489 = vunpack.c.l.b16 %v3281
    %v3490 = vunpack.c.l.b16 %v3282
    %v3491 = vunpack.c.l.b16 %v3283
    %v3492 = vunpack.c.l.b16 %v3284
    %v3493 = vunpack.c.l.b16 %v3285
    %v3494 = vunpack.c.l.b16 %v3286
    %v3495 = vunpack.c.l.b16 %v3287
    %v3496 = vunpack.c.l.b16 %v3288
    %v3497 = vunpack.c.l.b16 %v3289
    %v3498 = vunpack.c.l.b16 %v3290
    %v3499 = vunpack.c.l.b16 %v3291
    %v3500 = vunpack.c.l.b16 %v3292
    %v3501 = vunpack.c.l.b16 %v3293
    %v3502 = vunpack.c.l.b16 %v3294
    %v3503 = vunpack.c.l.b16 %v3295
    %v3504 = vunpack.c.l.b16 %v3296
    %v3505 = vunpack.c.l.b16 %v3297
    %v3506 = vunpack.c.l.b16 %v3298
    %v3507 = vunpack.c.l.b16 %v3299
    %v3508 = vunpack.c.l.b16 %v3300
    %v3509 = vunpack.c.l.b16 %v3301
    %v3510 = vunpack.c.l.b16 %v3302
    %v3511 = vunpack.c.l.b16 %v3303
    %v3512 = vunpack.c.l.b16 %v3304
    %v3513 = vunpack.c.l.b16 %v3305
    %v3514 = vunpack.c.l.b16 %v3306
    %v3515 = vunpack.c.l.b16 %v3307
    %v3516 = vunpack.c.l.b16 %v3308
    %v3517 = vunpack.c.l.b16 %v3309
    %v3518 = vunpack.c.l.b16 %v3310
    %v3519 = vunpack.c.l.b16 %v3311
    %v3520 = vunpack.c.l.b16 %v3312
    %v3521 = vunpack.c.l.b16 %v3313
    %v3522 = vunpack.c.l.b16 %v3314
    %v3523 = vunpack.c.l.b16 %v3315
    %v3524 = vunpack.c.l.b16 %v3316
    %v3525 = vunpack.c.l.b16 %v3317
    %v3526 = vunpack.c.l.b16 %v3318
    %v3527 = vunpack.c.l.b16 %v3319
    %v3528 = vunpack.c.l.b16 %v3320
    %v3529 = vunpack.c.l.b16 %v3321
    %v3530 = vunpack.c.l.b16 %v3322
    %v3531 = vunpack.c.l.b16 %v3323
    %v3532 = vunpack.c.l.b16 %v3324
    %v3533 = vpack.c.b16 %v3434, %v3433
    %v3534 = vpack.c.b16 %v3436, %v3435
    %v3535 = vpack.c.b16 %v3438, %v3437
    %v3536 = vpack.c.b16 %v3440, %v3439
    %v3537 = vpack.c.b16 %v3442, %v3441
    %v3538 = vpack.c.b16 %v3444, %v3443
    %v3539 = vpack.c.b16 %v3446, %v3445
    %v3540 = vpack.c.b16 %v3448, %v3447
    %v3541 = vpack.c.b16 %v3450, %v3449
    %v3542 = vpack.c.b16 %v3452, %v3451
    %v3543 = vpack.c.b16 %v3454, %v3453
    %v3544 = vpack.c.b16 %v3456, %v3455
    %v3545 = vpack.c.b16 %v3458, %v3457
    %v3546 = vpack.c.b16 %v3460, %v3459
    %v3547 = vpack.c.b16 %v3462, %v3461
    %v3548 = vpack.c.b16 %v3464, %v3463
    %v3549 = vpack.c.b16 %v3466, %v3465
    %v3550 = vpack.c.b16 %v3468, %v3467
    %v3551 = vpack.c.b16 %v3470, %v3469
    %v3552 = vpack.c.b16 %v3472, %v3471
    %v3553 = vpack.c.b16 %v3474, %v3473
    %v3554 = vpack.c.b16 %v3476, %v3475
    %v3555 = vpack.c.b16 %v3478, %v3477
    %v3556 = vpack.c.b16 %v3480, %v3479
    %v3557 = vpack.c.b16 %v3482, %v3481
    %v3558 = vpack.c.b16 %v3484, %v3483
    %v3559 = vpack.c.b16 %v3486, %v3485
    %v3560 = vpack.c.b16 %v3488, %v3487
    %v3561 = vpack.c.b16 %v3490, %v3489
    %v3562 = vpack.c.b16 %v3492, %v3491
    %v3563 = vpack.c.b16 %v3494, %v3493
    %v3564 = vpack.c.b16 %v3496, %v3495
    %v3565 = vpack.c.b16 %v3498, %v3497
    %v3566 = vpack.c.b16 %v3500, %v3499
    %v3567 = vpack.c.b16 %v3502, %v3501
    %v3568 = vpack.c.b16 %v3504, %v3503
    %v3569 = vpack.c.b16 %v3506, %v3505
    %v3570 = vpack.c.b16 %v3508, %v3507
    %v3571 = vpack.c.b16 %v3510, %v3509
    %v3572 = vpack.c.b16 %v3512, %v3511
    %v3573 = vpack.c.b16 %v3514, %v3513
    %v3574 = vpack.c.b16 %v3516, %v3515
    %v3575 = vpack.c.b16 %v3518, %v3517
    %v3576 = vpack.c.b16 %v3520, %v3519
    %v3577 = vpack.c.b16 %v3522, %v3521
    %v3578 = vpack.c.b16 %v3524, %v3523
    %v3579 = vpack.c.b16 %v3526, %v3525
    %v3580 = vpack.c.b16 %v3528, %v3527
    %v3581 = vpack.c.b16 %v3530, %v3529
    %v3582 = vpack.c.b16 %v3532, %v3531
    %v3634 = vsel %vm291, %v3332, 0
    %3636 = vmatprep.subr.bf16.mxu0 0
    %3637 = vmatpush1.bf16.msra.mxu0 %v3533
    %3638 = vmatprep.subr.bf16.mxu0 0
    %3639 = vmatpush1.bf16.msra.mxu0 %v3534
    %3640 = vmatprep.subr.bf16.mxu0 0
    %3641 = vmatpush1.bf16.msra.mxu0 %v3535
    %3642 = vmatprep.subr.bf16.mxu0 0
    %3643 = vmatpush1.bf16.msra.mxu0 %v3536
    %3644 = vmatprep.subr.bf16.mxu0 0
    %3645 = vmatpush1.bf16.msra.mxu0 %v3537
    %3646 = vmatprep.subr.bf16.mxu0 0
    %3647 = vmatpush1.bf16.msra.mxu0 %v3538
    %3648 = vmatprep.subr.bf16.mxu0 0
    %3649 = vmatpush1.bf16.msra.mxu0 %v3539
    %3650 = vmatprep.subr.bf16.mxu0 0
    %3651 = vmatpush1.bf16.msra.mxu0 %v3540
    %3652 = vmatprep.subr.bf16.mxu0 0
    %3653 = vmatpush1.bf16.msra.mxu0 %v3541
    %3654 = vmatprep.subr.bf16.mxu0 0
    %3655 = vmatpush1.bf16.msra.mxu0 %v3542
    %3656 = vmatprep.subr.bf16.mxu0 0
    %3657 = vmatpush1.bf16.msra.mxu0 %v3543
    %3658 = vmatprep.subr.bf16.mxu0 0
    %3659 = vmatpush1.bf16.msra.mxu0 %v3544
    %3660 = vmatprep.subr.bf16.mxu0 0
    %3661 = vmatpush1.bf16.msra.mxu0 %v3545
    %3662 = vmatprep.subr.bf16.mxu0 0
    %3663 = vmatpush1.bf16.msra.mxu0 %v3546
    %3664 = vmatprep.subr.bf16.mxu0 0
    %3665 = vmatpush1.bf16.msra.mxu0 %v3547
    %3666 = vmatprep.subr.bf16.mxu0 0
    %3667 = vmatpush1.bf16.msra.mxu0 %v3548
    %3668 = vmatprep.mubr.bf16.mxu0 %v3327
    %3669 = vmatmul.mubr.bf16.gmra.mrb[0].mxu0 %v3326
    %v3670 = vpop.f32.mrb[0].mxu0
    %v3671 = vadd.f32 %v3325, %v3670
    %v3672 = vpop.f32.mrb[0].mxu0
    %v3673 = vpop.f32.mrb[0].mxu0
    %v3674 = vpop.f32.mrb[0].mxu0
    %3675 = vdwg.mxu0
    %3676 = vmatprep.subr.bf16.mxu0 0
    %3677 = vmatpush1.bf16.msra.mxu0 %v3549
    %3678 = vmatprep.subr.bf16.mxu0 0
    %3679 = vmatpush1.bf16.msra.mxu0 %v3550
    %3680 = vmatprep.subr.bf16.mxu0 0
    %3681 = vmatpush1.bf16.msra.mxu0 %v3551
    %3682 = vmatprep.subr.bf16.mxu0 0
    %3683 = vmatpush1.bf16.msra.mxu0 %v3552
    %3684 = vmatprep.subr.bf16.mxu0 0
    %3685 = vmatpush1.bf16.msra.mxu0 %v3553
    %3686 = vmatprep.subr.bf16.mxu0 0
    %3687 = vmatpush1.bf16.msra.mxu0 %v3554
    %3688 = vmatprep.subr.bf16.mxu0 0
    %3689 = vmatpush1.bf16.msra.mxu0 %v3555
    %3690 = vmatprep.subr.bf16.mxu0 0
    %3691 = vmatpush1.bf16.msra.mxu0 %v3556
    %3692 = vmatprep.subr.bf16.mxu0 0
    %3693 = vmatpush1.bf16.msra.mxu0 %v3557
    %3694 = vmatprep.subr.bf16.mxu0 0
    %3695 = vmatpush1.bf16.msra.mxu0 %v3558
    %3696 = vmatprep.subr.bf16.mxu0 0
    %3697 = vmatpush1.bf16.msra.mxu0 %v3559
    %3698 = vmatprep.subr.bf16.mxu0 0
    %3699 = vmatpush1.bf16.msra.mxu0 %v3560
    %3700 = vmatprep.subr.bf16.mxu0 0
    %3701 = vmatpush1.bf16.msra.mxu0 %v3561
    %3702 = vmatprep.subr.bf16.mxu0 0
    %3703 = vmatpush1.bf16.msra.mxu0 %v3562
    %3704 = vmatprep.subr.bf16.mxu0 0
    %3705 = vmatpush1.bf16.msra.mxu0 %v3563
    %3706 = vmatprep.subr.bf16.mxu0 0
    %3707 = vmatpush1.bf16.msra.mxu0 %v3564
    %3708 = vmatprep.mubr.bf16.mxu0 %v3329
    %3709 = vmatmul.mubr.bf16.gmra.mrb[0].mxu0 %v3328
    %v3710 = vpop.f32.mrb[0].mxu0
    %v3711 = vadd.f32 %v3671, %v3710
    %v3712 = vpop.f32.mrb[0].mxu0
    %v3713 = vpop.f32.mrb[0].mxu0
    %v3714 = vpop.f32.mrb[0].mxu0
    %3715 = vdwg.mxu0
    %3716 = vmatprep.subr.bf16.mxu0 0
    %3717 = vmatpush1.bf16.msra.mxu0 %v3565
    %3718 = vmatprep.subr.bf16.mxu0 0
    %3719 = vmatpush1.bf16.msra.mxu0 %v3566
    %3720 = vmatprep.subr.bf16.mxu0 0
    %3721 = vmatpush1.bf16.msra.mxu0 %v3567
    %3722 = vmatprep.subr.bf16.mxu0 0
    %3723 = vmatpush1.bf16.msra.mxu0 %v3568
    %3724 = vmatprep.subr.bf16.mxu0 0
    %3725 = vmatpush1.bf16.msra.mxu0 %v3569
    %3726 = vmatprep.subr.bf16.mxu0 0
    %3727 = vmatpush1.bf16.msra.mxu0 %v3570
    %3728 = vmatprep.subr.bf16.mxu0 0
    %3729 = vmatpush1.bf16.msra.mxu0 %v3571
    %3730 = vmatprep.subr.bf16.mxu0 0
    %3731 = vmatpush1.bf16.msra.mxu0 %v3572
    %3732 = vmatprep.subr.bf16.mxu0 0
    %3733 = vmatpush1.bf16.msra.mxu0 %v3573
    %3734 = vmatprep.subr.bf16.mxu0 0
    %3735 = vmatpush1.bf16.msra.mxu0 %v3574
    %3736 = vmatprep.subr.bf16.mxu0 0
    %3737 = vmatpush1.bf16.msra.mxu0 %v3575
    %3738 = vmatprep.subr.bf16.mxu0 0
    %3739 = vmatpush1.bf16.msra.mxu0 %v3576
    %3740 = vmatprep.subr.bf16.mxu0 0
    %3741 = vmatpush1.bf16.msra.mxu0 %v3577
    %3742 = vmatprep.subr.bf16.mxu0 0
    %3743 = vmatpush1.bf16.msra.mxu0 %v3578
    %3744 = vmatprep.subr.bf16.mxu0 0
    %3745 = vmatpush1.bf16.msra.mxu0 %v3579
    %3746 = vmatprep.subr.bf16.mxu0 0
    %3747 = vmatpush1.bf16.msra.mxu0 %v3580
    %3748 = vmatprep.mubr.bf16.mxu0 %v3331
    %3749 = vmatmul.mubr.bf16.gmra.mrb[0].mxu0 %v3330
    %v3750 = vpop.f32.mrb[0].mxu0
    %v3751 = vadd.f32 %v3711, %v3750
    %v3752 = vpop.f32.mrb[0].mxu0
    %v3753 = vpop.f32.mrb[0].mxu0
    %v3754 = vpop.f32.mrb[0].mxu0
    %3755 = vdwg.mxu0
    %3756 = vmatprep.subr.bf16.mxu0 0
    %3757 = vmatpush1.bf16.msra.mxu0 %v3581
    %3758 = vmatprep.subr.bf16.mxu0 0
    %3759 = vmatpush1.bf16.msra.mxu0 %v3582
    %3760 = vmatprep.subr.bf16.mxu0 0
    %3761 = vmatpush1.bf16.msra.mxu0 0
    %3762 = vmatprep.subr.bf16.mxu0 0
    %3763 = vmatpush1.bf16.msra.mxu0 0
    %3764 = vmatprep.subr.bf16.mxu0 0
    %3765 = vmatpush1.bf16.msra.mxu0 0
    %3766 = vmatprep.subr.bf16.mxu0 0
    %3767 = vmatpush1.bf16.msra.mxu0 0
    %3768 = vmatprep.subr.bf16.mxu0 0
    %3769 = vmatpush1.bf16.msra.mxu0 0
    %3770 = vmatprep.subr.bf16.mxu0 0
    %3771 = vmatpush1.bf16.msra.mxu0 0
    %3772 = vmatprep.subr.bf16.mxu0 0
    %3773 = vmatpush1.bf16.msra.mxu0 0
    %3774 = vmatprep.subr.bf16.mxu0 0
    %3775 = vmatpush1.bf16.msra.mxu0 0
    %3776 = vmatprep.subr.bf16.mxu0 0
    %3777 = vmatpush1.bf16.msra.mxu0 0
    %3778 = vmatprep.subr.bf16.mxu0 0
    %3779 = vmatpush1.bf16.msra.mxu0 0
    %3780 = vmatprep.subr.bf16.mxu0 0
    %3781 = vmatpush1.bf16.msra.mxu0 0
    %3782 = vmatprep.subr.bf16.mxu0 0
    %3783 = vmatpush1.bf16.msra.mxu0 0
    %3784 = vmatprep.subr.bf16.mxu0 0
    %3785 = vmatpush1.bf16.msra.mxu0 0
    %3786 = vmatprep.subr.bf16.mxu0 0
    %3787 = vmatpush1.bf16.msra.mxu0 0
    %3788 = vmatprep.mubr.bf16.mxu0 0
    %3789 = vmatmul.mubr.bf16.gmra.mrb[0].mxu0 %v3634
    %v3790 = vpop.f32.mrb[0].mxu0
    %v3791 = vadd.f32 %v3751, %v3790
    %v3792 = vpop.f32.mrb[0].mxu0
    %v3793 = vpop.f32.mrb[0].mxu0
    %v3794 = vpop.f32.mrb[0].mxu0
    %3795 = vdwg.mxu0
    %v3796 = vmax.f32 %v3791, 0.0
    %v3797 = vld [vmem:[%s2 + $0x5f0] sm:$0xf]
    %v3798 = vld [vmem:[%s2 + $0x5f8] sm:$0xf]
    %v3799 = vld [vmem:[%s2 + $0x600] sm:$0xf]
    %v3800 = vld [vmem:[%s2 + $0x608] sm:$0xf]
    %v3801 = vld [vmem:[%s2 + $0x610] sm:$0xf]
    %v3802 = vld [vmem:[%s2 + $0x618] sm:$0xf]
    %v3803 = vld [vmem:[%s2 + $0x620] sm:$0xf]
    %v3804 = vld [vmem:[%s2 + $0x628] sm:$0xf]
    %v3805 = vld [vmem:[%s2 + $0x630] sm:$0xf]
    %v3806 = vld [vmem:[%s2 + $0x638] sm:$0xf]
    %v3807 = vld [vmem:[%s2 + $0x640] sm:$0xf]
    %v3808 = vld [vmem:[%s2 + $0x648] sm:$0xf]
    %v3809 = vld [vmem:[%s2 + $0x650] sm:$0x3]
    %v3810 = vld [vmem:[%s1 + $0xc3] ss:$0 sm:$0xff]
    %v3811 = vpack.c.bf16 %v3796, %v3796
    %v3825 = vunpack.c.l.b16 %v3797
    %v3826 = vunpack.c.l.b16 %v3798
    %v3827 = vunpack.c.l.b16 %v3799
    %v3828 = vunpack.c.l.b16 %v3800
    %v3829 = vunpack.c.l.b16 %v3801
    %v3830 = vunpack.c.l.b16 %v3802
    %v3831 = vunpack.c.l.b16 %v3803
    %v3832 = vunpack.c.l.b16 %v3804
    %v3833 = vunpack.c.l.b16 %v3805
    %v3834 = vunpack.c.l.b16 %v3806
    %v3835 = vunpack.c.l.b16 %v3807
    %v3836 = vunpack.c.l.b16 %v3808
    %v3837 = vunpack.c.l.b16 %v3809
    %v3838 = vpack.c.b16 %v3826, %v3825
    %v3839 = vpack.c.b16 %v3828, %v3827
    %v3840 = vpack.c.b16 %v3830, %v3829
    %v3841 = vpack.c.b16 %v3832, %v3831
    %v3842 = vpack.c.b16 %v3834, %v3833
    %v3843 = vpack.c.b16 %v3836, %v3835
    %v3844 = vpack.c.b16 %v3837, %v3837
    %v3852 = vsel %vm3198, %v3811, 0
    %vm3854 = vcmask 1041408
    %v3856 = vsel %vm3854, %v3844, 0
    %3858 = vmatprep.subr.bf16.mxu0 0
    %3859 = vmatpush1.bf16.msra.mxu0 %v3838
    %3860 = vmatprep.subr.bf16.mxu0 0
    %3861 = vmatpush1.bf16.msra.mxu0 %v3839
    %3862 = vmatprep.subr.bf16.mxu0 0
    %3863 = vmatpush1.bf16.msra.mxu0 %v3840
    %3864 = vmatprep.subr.bf16.mxu0 0
    %3865 = vmatpush1.bf16.msra.mxu0 %v3841
    %3866 = vmatprep.subr.bf16.mxu0 0
    %3867 = vmatpush1.bf16.msra.mxu0 %v3842
    %3868 = vmatprep.subr.bf16.mxu0 0
    %3869 = vmatpush1.bf16.msra.mxu0 %v3843
    %3870 = vmatprep.subr.bf16.mxu0 0
    %3871 = vmatpush1.bf16.msra.mxu0 %v3856
    %3872 = vmatprep.subr.bf16.mxu0 0
    %3873 = vmatpush1.bf16.msra.mxu0 0
    %3874 = vmatprep.subr.bf16.mxu0 0
    %3875 = vmatpush1.bf16.msra.mxu0 0
    %3876 = vmatprep.subr.bf16.mxu0 0
    %3877 = vmatpush1.bf16.msra.mxu0 0
    %3878 = vmatprep.subr.bf16.mxu0 0
    %3879 = vmatpush1.bf16.msra.mxu0 0
    %3880 = vmatprep.subr.bf16.mxu0 0
    %3881 = vmatpush1.bf16.msra.mxu0 0
    %3882 = vmatprep.subr.bf16.mxu0 0
    %3883 = vmatpush1.bf16.msra.mxu0 0
    %3884 = vmatprep.subr.bf16.mxu0 0
    %3885 = vmatpush1.bf16.msra.mxu0 0
    %3886 = vmatprep.subr.bf16.mxu0 0
    %3887 = vmatpush1.bf16.msra.mxu0 0
    %3888 = vmatprep.subr.bf16.mxu0 0
    %3889 = vmatpush1.bf16.msra.mxu0 0
    %3890 = vmatprep.mubr.bf16.mxu0 0
    %3891 = vmatmul.mubr.bf16.gmra.mrb[0].mxu0 %v3852
    %v3892 = vpop.f32.mrb[0].mxu0
    %v3893 = vadd.f32 %v3810, %v3892
    %v3894 = vpop.f32.mrb[0].mxu0
    %v3895 = vpop.f32.mrb[0].mxu0
    %v3896 = vpop.f32.mrb[0].mxu0
    %3897 = vdwg.mxu0
    %vm3898 = vcmask 74752
    %v3899 = vsel %vm3898, %v3893, -inf
    %3900 = vmax.xlane.f32.xlu0 %v3899
    %v3901 = vpop.xlane.xlu0 %3900
    %v3902 = vsub.f32 %v3893, %v3901
    %v3903 = vmul.f32 %v3902, 1.442695
    %v3904 = vpow.pop %v3903
    %v3905 = vsel %vm3898, %v3904, 0.0
    %3906 = vadd.xlane.f32.xlu0 %v3905
    %v3907 = vpop.xlane.xlu0 %3906
    %v3908 = vlog2.pop %v3907
    %v3909 = vmul.f32 %v3908, 0.6931472
    %v3910 = vsub.f32 %v3902, %v3909
    %3911 = vst.msk [vmem:[#allocation3] sm:$0x3] %vm3898, %v3910
    // Predicated region
    $region14: #{cnn_net_forward.1} parent=1 // pred_check
      _
    $region15: #{cnn_net_forward.1} parent=1 // pred_check_branch
      %3913 = sbr.rel (0) target = $region17
    $region16: #{cnn_net_forward.1} parent=1 // pred_region
      %s3915 = ssub.s32 32, 32
      %3916 = vsyncadd [#allocation4], %s3915
      %s3918 = sshll.u32 [#allocation3], 4
      %s3919 = int_to_ptr.vmem [resolvable:$true] %s3918
      %3921 = dma.vmem_to_hbm [thread:$0]  %s3919, 32, %s3, [#allocation4]
    $region17: #{cnn_net_forward.1} parent=1 // pred_fallthru
      _
    // Predicated region
    $region18: #{cnn_net_forward.1} parent=1 // pred_check
      _
    $region19: #{cnn_net_forward.1} parent=1 // pred_check_branch
      %3923 = sbr.rel (0) target = $region21
    $region20: #{cnn_net_forward.1} parent=1 // pred_region
      %3924 = dma.done [#allocation4], 32
    $region21: #{cnn_net_forward.1} parent=1 // pred_fallthru
      _
    %3925 = vsyncpa [#allocation4], 1

</llo_original>
